<compile_context>
chip_gen: v7x
topology: tpu7x:2x2x1
jax: 0.10.0
libtpu: 0.0.40
codegen_flags: <defaults>
</compile_context>

<pallas_src>
import functools
import math

import jax
import jax.numpy as jnp
from jax.experimental import pallas as pl
from jax.experimental.pallas import tpu as pltpu


# ------------------------------- helpers ------------------------------------

def _row_tile(m, cap=256):
    """Largest row tile <= cap dividing m; multiples of 16 preferred so bf16
    blocks never split a packed (16,128) sublane tile."""
    if m <= cap:
        return m
    start16 = cap - (cap % 16)
    for t in range(start16, 15, -16):
        if m % t == 0:
            return t
    start8 = cap - (cap % 8)
    for t in range(start8, 7, -8):
        if m % t == 0:
            return t
    return m


def _gelu_f32(y):
    # TODO(synk): tanh-approx GELU; HF/torch BERT uses erf-gelu (~1e-3 off).
    c = 0.7978845608028654
    return 0.5 * y * (1.0 + jnp.tanh(c * (y + 0.044715 * y * y * y)))


# ----------------------------- Pallas kernels -------------------------------

def _linear_kernel(x_ref, w_ref, b_ref, o_ref, *, activation):
    x = x_ref[...].astype(jnp.bfloat16)
    y = jnp.dot(x, w_ref[...], preferred_element_type=jnp.float32) + b_ref[...]
    if activation == "gelu":
        y = _gelu_f32(y)
    elif activation == "tanh":
        y = jnp.tanh(y)
    o_ref[...] = y.astype(o_ref.dtype)


def pallas_linear(x, w, b, activation="none", out_dtype=jnp.float32):
    """y = act(x @ w + b).  Row-tiled; w is bf16 [K, N]."""
    M, K = x.shape
    K2, N = w.shape
    assert K == K2
    tm = _row_tile(M)
    kern = functools.partial(_linear_kernel, activation=activation)
    cost = pl.CostEstimate(
        flops=2 * M * K * N,
        transcendentals=M * N if activation in ("gelu", "tanh") else 0,
        bytes_accessed=2 * (M * K + M * N + K * N) + 4 * N)
    return pl.pallas_call(
        kern,
        out_shape=jax.ShapeDtypeStruct((M, N), out_dtype),
        grid=(M // tm,),
        in_specs=[
            pl.BlockSpec((tm, K), lambda i: (i, 0)),
            pl.BlockSpec((K, N), lambda i: (0, 0)),
            pl.BlockSpec((1, N), lambda i: (0, 0)),
        ],
        out_specs=pl.BlockSpec((tm, N), lambda i: (i, 0)),
        compiler_params=pltpu.CompilerParams(dimension_semantics=("parallel",)),
        cost_estimate=cost,
    )(x, w, b.reshape(1, N))


def _linear_res_ln_kernel(x_ref, w_ref, b_ref, r_ref, g_ref, beta_ref, o_ref,
                          *, eps):
    x = x_ref[...].astype(jnp.bfloat16)
    y = jnp.dot(x, w_ref[...], preferred_element_type=jnp.float32)
    y = y + b_ref[...] + r_ref[...].astype(jnp.float32)      # bias + residual
    mean = jnp.mean(y, axis=-1, keepdims=True)
    var = jnp.mean(jnp.square(y - mean), axis=-1, keepdims=True)
    inv = jax.lax.rsqrt(var + eps)
    o_ref[...] = ((y - mean) * inv * g_ref[...] + beta_ref[...]).astype(o_ref.dtype)


def pallas_linear_res_ln(x, w, b, res, g, beta, eps=1e-12,
                         out_dtype=jnp.bfloat16):
    """LayerNorm(x @ w + b + res) fused in one kernel.  Row-tiled."""
    M, K = x.shape
    K2, N = w.shape
    assert K == K2 and res.shape == (M, N)
    tm = _row_tile(M)
    kern = functools.partial(_linear_res_ln_kernel, eps=eps)
    cost = pl.CostEstimate(
        flops=2 * M * K * N,
        transcendentals=M,
        bytes_accessed=2 * (M * K + 2 * M * N + K * N) + 4 * 3 * N)
    return pl.pallas_call(
        kern,
        out_shape=jax.ShapeDtypeStruct((M, N), out_dtype),
        grid=(M // tm,),
        in_specs=[
            pl.BlockSpec((tm, K), lambda i: (i, 0)),
            pl.BlockSpec((K, N), lambda i: (0, 0)),
            pl.BlockSpec((1, N), lambda i: (0, 0)),
            pl.BlockSpec((tm, N), lambda i: (i, 0)),
            pl.BlockSpec((1, N), lambda i: (0, 0)),
            pl.BlockSpec((1, N), lambda i: (0, 0)),
        ],
        out_specs=pl.BlockSpec((tm, N), lambda i: (i, 0)),
        compiler_params=pltpu.CompilerParams(dimension_semantics=("parallel",)),
        cost_estimate=cost,
    )(x, w, b.reshape(1, N), res, g.reshape(1, N), beta.reshape(1, N))


def _ffn_kernel(x_ref, wi_ref, bi_ref, wo_ref, bo_ref, g_ref, beta_ref, o_ref,
                *, eps):
    # LayerNorm(gelu(x @ wi + bi) @ wo + bo + x): the [tm, I] intermediate
    # never leaves the kernel.
    x = x_ref[...].astype(jnp.bfloat16)
    y1 = jnp.dot(x, wi_ref[...], preferred_element_type=jnp.float32) + bi_ref[...]
    y1 = _gelu_f32(y1)
    y2 = jnp.dot(y1.astype(jnp.bfloat16), wo_ref[...],
                 preferred_element_type=jnp.float32)
    y2 = y2 + bo_ref[...] + x_ref[...].astype(jnp.float32)    # bias + residual
    mean = jnp.mean(y2, axis=-1, keepdims=True)
    var = jnp.mean(jnp.square(y2 - mean), axis=-1, keepdims=True)
    inv = jax.lax.rsqrt(var + eps)
    o_ref[...] = ((y2 - mean) * inv * g_ref[...] + beta_ref[...]).astype(o_ref.dtype)


def pallas_ffn(x, wi, bi, wo, bo, g, beta, eps=1e-12, out_dtype=jnp.bfloat16):
    """Fused transformer FFN block (up + GELU + down + residual + LN)."""
    M, H = x.shape
    H2, I = wi.shape
    I2, H3 = wo.shape
    assert H == H2 and I == I2 and H == H3
    tm = _row_tile(M, cap=128)   # bound the in-kernel [tm, I] f32 intermediate
    kern = functools.partial(_ffn_kernel, eps=eps)
    cost = pl.CostEstimate(
        flops=4 * M * H * I,
        transcendentals=M * I + M,
        bytes_accessed=2 * (2 * M * H + 2 * H * I) + 4 * (I + 3 * H))
    # TODO(synk): for BERT-large-scale H/I, K-tile the two matmuls and raise
    # vmem_limit_bytes instead of holding both full weight blocks in VMEM.
    return pl.pallas_call(
        kern,
        out_shape=jax.ShapeDtypeStruct((M, H), out_dtype),
        grid=(M // tm,),
        in_specs=[
            pl.BlockSpec((tm, H), lambda i: (i, 0)),
            pl.BlockSpec((H, I), lambda i: (0, 0)),
            pl.BlockSpec((1, I), lambda i: (0, 0)),
            pl.BlockSpec((I, H), lambda i: (0, 0)),
            pl.BlockSpec((1, H), lambda i: (0, 0)),
            pl.BlockSpec((1, H), lambda i: (0, 0)),
            pl.BlockSpec((1, H), lambda i: (0, 0)),
        ],
        out_specs=pl.BlockSpec((tm, H), lambda i: (i, 0)),
        compiler_params=pltpu.CompilerParams(dimension_semantics=("parallel",)),
        cost_estimate=cost,
    )(x, wi, bi.reshape(1, I), wo, bo.reshape(1, H),
      g.reshape(1, H), beta.reshape(1, H))


def _layernorm_kernel(x_ref, g_ref, b_ref, o_ref, *, eps):
    x = x_ref[...].astype(jnp.float32)
    mean = jnp.mean(x, axis=-1, keepdims=True)
    var = jnp.mean(jnp.square(x - mean), axis=-1, keepdims=True)
    inv = jax.lax.rsqrt(var + eps)
    o_ref[...] = ((x - mean) * inv * g_ref[...] + b_ref[...]).astype(o_ref.dtype)


def pallas_layernorm(x, g, b, eps=1e-12, out_dtype=jnp.bfloat16):
    M, H = x.shape
    tm = _row_tile(M)
    kern = functools.partial(_layernorm_kernel, eps=eps)
    return pl.pallas_call(
        kern,
        out_shape=jax.ShapeDtypeStruct((M, H), out_dtype),
        grid=(M // tm,),
        in_specs=[
            pl.BlockSpec((tm, H), lambda i: (i, 0)),
            pl.BlockSpec((1, H), lambda i: (0, 0)),
            pl.BlockSpec((1, H), lambda i: (0, 0)),
        ],
        out_specs=pl.BlockSpec((tm, H), lambda i: (i, 0)),
        compiler_params=pltpu.CompilerParams(dimension_semantics=("parallel",)),
    )(x, g.reshape(1, H), b.reshape(1, H))


def _qkv_mha_kernel(x_ref, w_ref, b_ref, mask_ref, o_ref,
                    *, n_heads, head_dim, scale):
    # One grid step = one batch element, ALL heads.  The fused QKV projection
    # result stays in VMEM/vregs; Q/K/V are lane slices of it -- no [B,nH,S,d]
    # transposes and no HBM round-trip of the [S,3H] tensor.
    x = x_ref[0]                                          # [S, H] bf16
    S = x.shape[0]
    H = n_heads * head_dim
    qkv = (jnp.dot(x, w_ref[...], preferred_element_type=jnp.float32)
           + b_ref[...]).astype(jnp.bfloat16)             # [S, 3H]
    m = mask_ref[0]                                       # additive mask [1,S]
    ctx_heads = []
    for h in range(n_heads):
        lo = h * head_dim
        q = qkv[:, lo:lo + head_dim]
        k = qkv[:, H + lo:H + lo + head_dim]
        v = qkv[:, 2 * H + lo:2 * H + lo + head_dim]
        s = jax.lax.dot_general(q, k, (((1,), (1,)), ((), ())),
                                preferred_element_type=jnp.float32)
        s = s * scale + m
        s = s - jnp.max(s, axis=-1, keepdims=True)
        p = jnp.exp(s)
        p = p * pl.reciprocal(jnp.sum(p, axis=-1, keepdims=True), approx=True)
        ctx_heads.append(jnp.dot(p.astype(jnp.bfloat16), v,
                                 preferred_element_type=jnp.float32))
    # single lane-dense [S, H] store
    o_ref[0] = jnp.concatenate(ctx_heads, axis=-1).astype(o_ref.dtype)
    # TODO(synk): for S >= 512 switch to an online-softmax (flash) variant with
    # a KV-tile grid axis instead of materializing the full [S,S] scores.


def pallas_qkv_mha(x3, wqkv, bqkv, add_mask, *, n_heads):
    """Fused QKV projection + multi-head self-attention.

    x3 : [B, S, H] bf16 hidden states.  Returns [B, S, H] bf16 context.
    """
    B, S, H = x3.shape
    three_h = wqkv.shape[1]
    assert three_h == 3 * H
    d = H // n_heads
    kern = functools.partial(_qkv_mha_kernel, n_heads=n_heads, head_dim=d,
                             scale=1.0 / math.sqrt(d))
    M = B * S
    cost = pl.CostEstimate(
        flops=2 * M * H * three_h + 4 * M * S * H,
        transcendentals=M * S * n_heads,
        bytes_accessed=2 * (2 * M * H + H * three_h) + 4 * (three_h + B * S))
    return pl.pallas_call(
        kern,
        out_shape=jax.ShapeDtypeStruct((B, S, H), jnp.bfloat16),
        grid=(B,),
        in_specs=[
            pl.BlockSpec((1, S, H), lambda b: (b, 0, 0)),
            pl.BlockSpec((H, three_h), lambda b: (0, 0)),
            pl.BlockSpec((1, three_h), lambda b: (0, 0)),
            pl.BlockSpec((1, 1, S), lambda b: (b, 0, 0)),   # mask: once per b
        ],
        out_specs=pl.BlockSpec((1, S, H), lambda b: (b, 0, 0)),
        compiler_params=pltpu.CompilerParams(dimension_semantics=("parallel",)),
        cost_estimate=cost,
    )(x3, wqkv, bqkv.reshape(1, three_h), add_mask)


def _cls_combine_kernel(cls_ref, w_ref, o_ref):
    # weighted sum over the layer axis:  sum_l w_l * cls[:, l, :]
    o_ref[...] = jnp.sum(cls_ref[...].astype(jnp.float32) * w_ref[...], axis=1)


def pallas_cls_combine(all_cls, w_b):
    B, L, H = all_cls.shape
    return pl.pallas_call(
        _cls_combine_kernel,
        out_shape=jax.ShapeDtypeStruct((B, H), jnp.float32),
        grid=(1,),
        in_specs=[
            pl.BlockSpec((B, L, H), lambda i: (0, 0, 0)),
            pl.BlockSpec((1, L, H), lambda i: (0, 0, 0)),
        ],
        out_specs=pl.BlockSpec((B, H), lambda i: (0, 0)),
    )(all_cls, w_b)


# -------------------------- parameter construction --------------------------

def init_bert_params(key, *, vocab_size, hidden, n_layers, n_heads,
                     intermediate, max_pos, type_vocab, output_dim, n_cls):
    keys = iter(jax.random.split(key, 8 + 8 * n_layers))
    bf = jnp.bfloat16

    def nrm(shape, std=0.02, dtype=jnp.float32):
        return (std * jax.random.normal(next(keys), shape)).astype(dtype)

    params = {
        "word_emb": nrm((vocab_size, hidden)),
        "pos_emb": nrm((max_pos, hidden)),
        "type_emb": nrm((type_vocab, hidden)),
        "emb_ln_g": jnp.ones((hidden,), jnp.float32),
        "emb_ln_b": jnp.zeros((hidden,), jnp.float32),
        "layers": [],
        "pooler_w": nrm((hidden, hidden), dtype=bf),
        "pooler_b": jnp.zeros((hidden,), jnp.float32),
        "add_linear_w": nrm((hidden, output_dim), dtype=bf),
        "add_linear_b": jnp.zeros((output_dim,), jnp.float32),
        # torch.randn(cls_end - cls_start) analogue:
        "cls_weights": jax.random.normal(next(keys), (n_cls,)).astype(jnp.float32),
    }
    for _ in range(n_layers):
        params["layers"].append({
            # fused QKV projection: [H, 3H] weight, [3H] bias
            "wqkv": nrm((hidden, 3 * hidden), dtype=bf),
            "bqkv": jnp.zeros((3 * hidden,), jnp.float32),
            "wo": nrm((hidden, hidden), dtype=bf),
            "bo": jnp.zeros((hidden,), jnp.float32),
            "ln1_g": jnp.ones((hidden,), jnp.float32),
            "ln1_b": jnp.zeros((hidden,), jnp.float32),
            "wi": nrm((hidden, intermediate), dtype=bf),
            "bi": jnp.zeros((intermediate,), jnp.float32),
            "wo2": nrm((intermediate, hidden), dtype=bf),
            "bo2": jnp.zeros((hidden,), jnp.float32),
            "ln2_g": jnp.ones((hidden,), jnp.float32),
            "ln2_b": jnp.zeros((hidden,), jnp.float32),
        })
    return params


# --------------------------- BERT backbone forward ---------------------------

def bert_forward(params, token_ids, segment_ids, attention_mask, *, n_heads):
    B, S = token_ids.shape
    H = params["word_emb"].shape[1]

    pos_ids = jnp.arange(S, dtype=jnp.int32)[None, :]
    emb = (params["word_emb"][token_ids]
           + params["pos_emb"][pos_ids]
           + params["type_emb"][segment_ids])                        # [B,S,H]
    x2 = pallas_layernorm(emb.reshape(B * S, H),
                          params["emb_ln_g"], params["emb_ln_b"])     # bf16

    # additive attention mask, one row per batch element, loaded once per b.
    add_mask = ((1.0 - attention_mask.astype(jnp.float32)) * -10000.0)[:, None, :]

    # all_layers = per-transformer-layer outputs (as in pytorch_pretrained_bert
    # encoded_layers; the embedding output is NOT included).
    all_layers = []
    for lp in params["layers"]:
        ctx = pallas_qkv_mha(x2.reshape(B, S, H), lp["wqkv"], lp["bqkv"],
                             add_mask, n_heads=n_heads)               # [B,S,H]
        x2 = pallas_linear_res_ln(ctx.reshape(B * S, H), lp["wo"], lp["bo"],
                                  x2, lp["ln1_g"], lp["ln1_b"])       # attn+LN
        x2 = pallas_ffn(x2, lp["wi"], lp["bi"], lp["wo2"], lp["bo2"],
                        lp["ln2_g"], lp["ln2_b"])                     # ffn+LN
        all_layers.append(x2.reshape(B, S, H))

    output_bert = all_layers[-1]
    pooled = pallas_linear(output_bert[:, 0, :],
                           params["pooler_w"], params["pooler_b"],
                           activation="tanh", out_dtype=jnp.float32)
    return output_bert, pooled, all_layers


# --------------------------- BertEncoder2 forward ----------------------------

def bert_encoder2_forward(params, token_ids, segment_ids, attention_mask, *,
                          n_heads, add_linear=True, cls_start=1, cls_end=4):
    output_bert, output_pooler, all_layers = bert_forward(
        params, token_ids, segment_ids, attention_mask, n_heads=n_heads)

    if add_linear:
        embeddings = output_pooler
        # TODO(synk): nn.Dropout(0.1) treated as eval-mode identity.
        result = pallas_linear(embeddings,
                               params["add_linear_w"], params["add_linear_b"],
                               out_dtype=jnp.float32)
    else:
        result = output_bert[:, 0, :].astype(jnp.float32)

    assert 0 <= cls_start <= cls_end
    if cls_start < cls_end:
        all_cls = jnp.stack([l[:, 0, :] for l in all_layers[cls_start:cls_end]],
                            axis=1)                                   # [B,L,H]
        assert all_cls.ndim == 3
        assert all_cls.shape[0] == token_ids.shape[0]
        assert all_cls.shape[1] == cls_end - cls_start
        assert all_cls.shape[2] == all_layers[0].shape[2]
        L, H = all_cls.shape[1], all_cls.shape[2]
        w_b = jnp.broadcast_to(params["cls_weights"][None, :, None], (1, L, H))
        vector_for_type_prediction = pallas_cls_combine(all_cls, w_b)
    else:
        vector_for_type_prediction = all_layers[cls_start][:, 0, :].astype(jnp.float32)

    assert vector_for_type_prediction.ndim == 2
    assert vector_for_type_prediction.shape[0] == token_ids.shape[0]
    assert vector_for_type_prediction.shape[1] == all_layers[0].shape[2]
    return {"for_entity_prediction": result,
            "for_type_prediction": vector_for_type_prediction}


# ------------------------------------ main -----------------------------------

if __name__ == "__main__":
    B, S, H = 2, 8, 128
    n_layers, n_heads, intermediate = 4, 4, 512
    vocab, max_pos, type_vocab = 100, 32, 2
    output_dim = 64
    cls_start, cls_end = 1, 4          # small backbone -> 3 CLS layers pulled

    key = jax.random.PRNGKey(0)
    pkey, tkey = jax.random.split(key)
    params = init_bert_params(
        pkey, vocab_size=vocab, hidden=H, n_layers=n_layers, n_heads=n_heads,
        intermediate=intermediate, max_pos=max_pos, type_vocab=type_vocab,
        output_dim=output_dim, n_cls=cls_end - cls_start)

    token_ids = jax.random.randint(tkey, (B, S), 0, vocab, dtype=jnp.int32)
    segment_ids = jnp.zeros((B, S), jnp.int32)
    attention_mask = jnp.ones((B, S), jnp.float32)

    fwd = jax.jit(functools.partial(
        bert_encoder2_forward, n_heads=n_heads, add_linear=True,
        cls_start=cls_start, cls_end=cls_end))
    out = fwd(params, token_ids, segment_ids, attention_mask)
    jax.block_until_ready(out)

    assert out["for_entity_prediction"].shape == (B, output_dim)
    assert out["for_type_prediction"].shape == (B, H)
    assert jnp.all(jnp.isfinite(out["for_entity_prediction"]))
    assert jnp.all(jnp.isfinite(out["for_type_prediction"]))
    print("KERNEL_OK")
</pallas_src>

<mosaic_0001>
module attributes {stable_mosaic.version = 11 : i64} {
  func.func @_linear_res_ln_kernel(%arg0: i32, %arg1: memref<16x128xbf16, #tpu.memory_space<vmem>>, %arg2: memref<128x128xbf16, #tpu.memory_space<vmem>>, %arg3: memref<1x128xf32, #tpu.memory_space<vmem>>, %arg4: memref<16x128xbf16, #tpu.memory_space<vmem>>, %arg5: memref<1x128xf32, #tpu.memory_space<vmem>>, %arg6: memref<1x128xf32, #tpu.memory_space<vmem>>, %arg7: memref<16x128xbf16, #tpu.memory_space<vmem>>) attributes {dimension_semantics = [#tpu.dimension_semantics<parallel>], iteration_bounds = array<i64: 1>, scalar_prefetch = 0 : i64, scratch_operands = 0 : i64, tpu.core_type = #tpu.core_type<tc>, window_params = [{transform_indices = @transform_0, window_bounds = array<i64: 16, 128>}, {pipeline_mode = #tpu.pipeline_mode<synchronous>, transform_indices = @transform_1, window_bounds = array<i64: 128, 128>}, {pipeline_mode = #tpu.pipeline_mode<synchronous>, transform_indices = @transform_2, window_bounds = array<i64: 1, 128>}, {transform_indices = @transform_3, window_bounds = array<i64: 16, 128>}, {pipeline_mode = #tpu.pipeline_mode<synchronous>, transform_indices = @transform_4, window_bounds = array<i64: 1, 128>}, {pipeline_mode = #tpu.pipeline_mode<synchronous>, transform_indices = @transform_5, window_bounds = array<i64: 1, 128>}, {transform_indices = @transform_6, window_bounds = array<i64: 16, 128>}]} {
    %c0 = arith.constant 0 : index
    %c0_0 = arith.constant 0 : index
    %0 = vector.load %arg1[%c0, %c0_0] : memref<16x128xbf16, #tpu.memory_space<vmem>>, vector<16x128xbf16>
    %c0_1 = arith.constant 0 : index
    %c0_2 = arith.constant 0 : index
    %1 = vector.load %arg2[%c0_1, %c0_2] : memref<128x128xbf16, #tpu.memory_space<vmem>>, vector<128x128xbf16>
    %cst = arith.constant dense<0.000000e+00> : vector<16x128xf32>
    %2 = tpu.matmul %0, %1, %cst {dimension_numbers = #tpu.dot_dimension_numbers<[1], [0], [0], [1], [0, 0, 1, 1], [], []>} : vector<16x128xbf16>, vector<128x128xbf16>, vector<16x128xf32> -> vector<16x128xf32>
    %c0_3 = arith.constant 0 : index
    %c0_4 = arith.constant 0 : index
    %3 = vector.load %arg3[%c0_3, %c0_4] : memref<1x128xf32, #tpu.memory_space<vmem>>, vector<1x128xf32>
    %4 = vector.broadcast %3 : vector<1x128xf32> to vector<16x128xf32>
    %5 = arith.addf %2, %4 : vector<16x128xf32>
    %c0_5 = arith.constant 0 : index
    %c0_6 = arith.constant 0 : index
    %6 = vector.load %arg4[%c0_5, %c0_6] : memref<16x128xbf16, #tpu.memory_space<vmem>>, vector<16x128xbf16>
    %7 = arith.extf %6 : vector<16x128xbf16> to vector<16x128xf32>
    %8 = arith.addf %5, %7 : vector<16x128xf32>
    %cst_7 = arith.constant dense<0.000000e+00> : vector<16xf32>
    %9 = vector.multi_reduction <add>, %8, %cst_7 [1] : vector<16x128xf32> to vector<16xf32>
    %10 = vector.shape_cast %9 : vector<16xf32> to vector<16x1xf32>
    %cst_8 = arith.constant 1.280000e+02 : f32
    %11 = vector.broadcast %cst_8 : f32 to vector<16x1xf32>
    %12 = arith.divf %10, %11 : vector<16x1xf32>
    %13 = vector.broadcast %12 : vector<16x1xf32> to vector<16x128xf32>
    %14 = arith.subf %8, %13 : vector<16x128xf32>
    %15 = arith.mulf %14, %14 : vector<16x128xf32>
    %cst_9 = arith.constant dense<0.000000e+00> : vector<16xf32>
    %16 = vector.multi_reduction <add>, %15, %cst_9 [1] : vector<16x128xf32> to vector<16xf32>
    %17 = vector.shape_cast %16 : vector<16xf32> to vector<16x1xf32>
    %cst_10 = arith.constant 1.280000e+02 : f32
    %18 = vector.broadcast %cst_10 : f32 to vector<16x1xf32>
    %19 = arith.divf %17, %18 : vector<16x1xf32>
    %cst_11 = arith.constant 9.99999996E-13 : f32
    %20 = vector.broadcast %cst_11 : f32 to vector<16x1xf32>
    %21 = arith.addf %19, %20 : vector<16x1xf32>
    %22 = math.rsqrt %21 : vector<16x1xf32>
    %23 = vector.broadcast %12 : vector<16x1xf32> to vector<16x128xf32>
    %24 = arith.subf %8, %23 : vector<16x128xf32>
    %25 = vector.broadcast %22 : vector<16x1xf32> to vector<16x128xf32>
    %26 = arith.mulf %24, %25 : vector<16x128xf32>
    %c0_12 = arith.constant 0 : index
    %c0_13 = arith.constant 0 : index
    %27 = vector.load %arg5[%c0_12, %c0_13] : memref<1x128xf32, #tpu.memory_space<vmem>>, vector<1x128xf32>
    %28 = vector.broadcast %27 : vector<1x128xf32> to vector<16x128xf32>
    %29 = arith.mulf %26, %28 : vector<16x128xf32>
    %c0_14 = arith.constant 0 : index
    %c0_15 = arith.constant 0 : index
    %30 = vector.load %arg6[%c0_14, %c0_15] : memref<1x128xf32, #tpu.memory_space<vmem>>, vector<1x128xf32>
    %31 = vector.broadcast %30 : vector<1x128xf32> to vector<16x128xf32>
    %32 = arith.addf %29, %31 : vector<16x128xf32>
    %33 = arith.truncf %32 : vector<16x128xf32> to vector<16x128xbf16>
    %c0_16 = arith.constant 0 : index
    %c0_17 = arith.constant 0 : index
    %34 = vector.load %arg7[%c0_16, %c0_17] : memref<16x128xbf16, #tpu.memory_space<vmem>>, vector<16x128xbf16>
    tpu.vector_store %arg7[%c0_16, %c0_17], %33 {strides = array<i32>} : memref<16x128xbf16, #tpu.memory_space<vmem>>, vector<16x128xbf16>,
    return
  }
  func.func @transform_0(%arg0: i32) -> (i32, i32) {
    %c0_i32 = arith.constant 0 : i32
    %c0_i32_0 = arith.constant 0 : i32
    return %arg0, %c0_i32 : i32, i32
  }
  func.func @transform_1(%arg0: i32) -> (i32, i32) {
    %c0_i32 = arith.constant 0 : i32
    %c0_i32_0 = arith.constant 0 : i32
    %c0_i32_1 = arith.constant 0 : i32
    return %c0_i32, %c0_i32_0 : i32, i32
  }
  func.func @transform_2(%arg0: i32) -> (i32, i32) {
    %c0_i32 = arith.constant 0 : i32
    %c0_i32_0 = arith.constant 0 : i32
    %c0_i32_1 = arith.constant 0 : i32
    return %c0_i32, %c0_i32_0 : i32, i32
  }
  func.func @transform_3(%arg0: i32) -> (i32, i32) {
    %c0_i32 = arith.constant 0 : i32
    %c0_i32_0 = arith.constant 0 : i32
    return %arg0, %c0_i32 : i32, i32
  }
  func.func @transform_4(%arg0: i32) -> (i32, i32) {
    %c0_i32 = arith.constant 0 : i32
    %c0_i32_0 = arith.constant 0 : i32
    %c0_i32_1 = arith.constant 0 : i32
    return %c0_i32, %c0_i32_0 : i32, i32
  }
  func.func @transform_5(%arg0: i32) -> (i32, i32) {
    %c0_i32 = arith.constant 0 : i32
    %c0_i32_0 = arith.constant 0 : i32
    %c0_i32_1 = arith.constant 0 : i32
    return %c0_i32, %c0_i32_0 : i32, i32
  }
  func.func @transform_6(%arg0: i32) -> (i32, i32) {
    %c0_i32 = arith.constant 0 : i32
    %c0_i32_0 = arith.constant 0 : i32
    return %arg0, %c0_i32 : i32, i32
  }
}

module attributes {stable_mosaic.version = 11 : i64} {
  func.func @_layernorm_kernel(%arg0: i32, %arg1: memref<16x128xf32, #tpu.memory_space<vmem>>, %arg2: memref<1x128xf32, #tpu.memory_space<vmem>>, %arg3: memref<1x128xf32, #tpu.memory_space<vmem>>, %arg4: memref<16x128xbf16, #tpu.memory_space<vmem>>) attributes {dimension_semantics = [#tpu.dimension_semantics<parallel>], iteration_bounds = array<i64: 1>, scalar_prefetch = 0 : i64, scratch_operands = 0 : i64, tpu.core_type = #tpu.core_type<tc>, window_params = [{transform_indices = @transform_0, window_bounds = array<i64: 16, 128>}, {pipeline_mode = #tpu.pipeline_mode<synchronous>, transform_indices = @transform_1, window_bounds = array<i64: 1, 128>}, {pipeline_mode = #tpu.pipeline_mode<synchronous>, transform_indices = @transform_2, window_bounds = array<i64: 1, 128>}, {transform_indices = @transform_3, window_bounds = array<i64: 16, 128>}]} {
    %c0 = arith.constant 0 : index
    %c0_0 = arith.constant 0 : index
    %0 = vector.load %arg1[%c0, %c0_0] : memref<16x128xf32, #tpu.memory_space<vmem>>, vector<16x128xf32>
    %cst = arith.constant dense<0.000000e+00> : vector<16xf32>
    %1 = vector.multi_reduction <add>, %0, %cst [1] : vector<16x128xf32> to vector<16xf32>
    %2 = vector.shape_cast %1 : vector<16xf32> to vector<16x1xf32>
    %cst_1 = arith.constant 1.280000e+02 : f32
    %3 = vector.broadcast %cst_1 : f32 to vector<16x1xf32>
    %4 = arith.divf %2, %3 : vector<16x1xf32>
    %5 = vector.broadcast %4 : vector<16x1xf32> to vector<16x128xf32>
    %6 = arith.subf %0, %5 : vector<16x128xf32>
    %7 = arith.mulf %6, %6 : vector<16x128xf32>
    %cst_2 = arith.constant dense<0.000000e+00> : vector<16xf32>
    %8 = vector.multi_reduction <add>, %7, %cst_2 [1] : vector<16x128xf32> to vector<16xf32>
    %9 = vector.shape_cast %8 : vector<16xf32> to vector<16x1xf32>
    %cst_3 = arith.constant 1.280000e+02 : f32
    %10 = vector.broadcast %cst_3 : f32 to vector<16x1xf32>
    %11 = arith.divf %9, %10 : vector<16x1xf32>
    %cst_4 = arith.constant 9.99999996E-13 : f32
    %12 = vector.broadcast %cst_4 : f32 to vector<16x1xf32>
    %13 = arith.addf %11, %12 : vector<16x1xf32>
    %14 = math.rsqrt %13 : vector<16x1xf32>
    %15 = vector.broadcast %4 : vector<16x1xf32> to vector<16x128xf32>
    %16 = arith.subf %0, %15 : vector<16x128xf32>
    %17 = vector.broadcast %14 : vector<16x1xf32> to vector<16x128xf32>
    %18 = arith.mulf %16, %17 : vector<16x128xf32>
    %c0_5 = arith.constant 0 : index
    %c0_6 = arith.constant 0 : index
    %19 = vector.load %arg2[%c0_5, %c0_6] : memref<1x128xf32, #tpu.memory_space<vmem>>, vector<1x128xf32>
    %20 = vector.broadcast %19 : vector<1x128xf32> to vector<16x128xf32>
    %21 = arith.mulf %18, %20 : vector<16x128xf32>
    %c0_7 = arith.constant 0 : index
    %c0_8 = arith.constant 0 : index
    %22 = vector.load %arg3[%c0_7, %c0_8] : memref<1x128xf32, #tpu.memory_space<vmem>>, vector<1x128xf32>
    %23 = vector.broadcast %22 : vector<1x128xf32> to vector<16x128xf32>
    %24 = arith.addf %21, %23 : vector<16x128xf32>
    %25 = arith.truncf %24 : vector<16x128xf32> to vector<16x128xbf16>
    %c0_9 = arith.constant 0 : index
    %c0_10 = arith.constant 0 : index
    %26 = vector.load %arg4[%c0_9, %c0_10] : memref<16x128xbf16, #tpu.memory_space<vmem>>, vector<16x128xbf16>
    tpu.vector_store %arg4[%c0_9, %c0_10], %25 {strides = array<i32>} : memref<16x128xbf16, #tpu.memory_space<vmem>>, vector<16x128xbf16>,
    return
  }
  func.func @transform_0(%arg0: i32) -> (i32, i32) {
    %c0_i32 = arith.constant 0 : i32
    %c0_i32_0 = arith.constant 0 : i32
    return %arg0, %c0_i32 : i32, i32
  }
  func.func @transform_1(%arg0: i32) -> (i32, i32) {
    %c0_i32 = arith.constant 0 : i32
    %c0_i32_0 = arith.constant 0 : i32
    %c0_i32_1 = arith.constant 0 : i32
    return %c0_i32, %c0_i32_0 : i32, i32
  }
  func.func @transform_2(%arg0: i32) -> (i32, i32) {
    %c0_i32 = arith.constant 0 : i32
    %c0_i32_0 = arith.constant 0 : i32
    %c0_i32_1 = arith.constant 0 : i32
    return %c0_i32, %c0_i32_0 : i32, i32
  }
  func.func @transform_3(%arg0: i32) -> (i32, i32) {
    %c0_i32 = arith.constant 0 : i32
    %c0_i32_0 = arith.constant 0 : i32
    return %arg0, %c0_i32 : i32, i32
  }
}

module attributes {stable_mosaic.version = 11 : i64} {
  func.func @_qkv_mha_kernel(%arg0: i32, %arg1: memref<1x8x128xbf16, #tpu.memory_space<vmem>>, %arg2: memref<128x384xbf16, #tpu.memory_space<vmem>>, %arg3: memref<1x384xf32, #tpu.memory_space<vmem>>, %arg4: memref<1x1x8xf32, #tpu.memory_space<vmem>>, %arg5: memref<1x8x128xbf16, #tpu.memory_space<vmem>>) attributes {dimension_semantics = [#tpu.dimension_semantics<parallel>], iteration_bounds = array<i64: 2>, scalar_prefetch = 0 : i64, scratch_operands = 0 : i64, tpu.core_type = #tpu.core_type<tc>, window_params = [{transform_indices = @transform_0, window_bounds = array<i64: 1, 8, 128>}, {pipeline_mode = #tpu.pipeline_mode<synchronous>, transform_indices = @transform_1, window_bounds = array<i64: 128, 384>}, {pipeline_mode = #tpu.pipeline_mode<synchronous>, transform_indices = @transform_2, window_bounds = array<i64: 1, 384>}, {transform_indices = @transform_3, window_bounds = array<i64: 1, 1, 8>}, {transform_indices = @transform_4, window_bounds = array<i64: 1, 8, 128>}]} {
    %c0 = arith.constant 0 : index
    %c0_0 = arith.constant 0 : index
    %c0_1 = arith.constant 0 : index
    %0 = vector.load %arg1[%c0, %c0_0, %c0_1] : memref<1x8x128xbf16, #tpu.memory_space<vmem>>, vector<1x8x128xbf16>
    %1 = vector.shape_cast %0 : vector<1x8x128xbf16> to vector<8x128xbf16>
    %c0_2 = arith.constant 0 : index
    %c0_3 = arith.constant 0 : index
    %2 = vector.load %arg2[%c0_2, %c0_3] : memref<128x384xbf16, #tpu.memory_space<vmem>>, vector<128x384xbf16>
    %cst = arith.constant dense<0.000000e+00> : vector<8x384xf32>
    %3 = tpu.matmul %1, %2, %cst {dimension_numbers = #tpu.dot_dimension_numbers<[1], [0], [0], [1], [0, 0, 1, 1], [], []>} : vector<8x128xbf16>, vector<128x384xbf16>, vector<8x384xf32> -> vector<8x384xf32>
    %c0_4 = arith.constant 0 : index
    %c0_5 = arith.constant 0 : index
    %4 = vector.load %arg3[%c0_4, %c0_5] : memref<1x384xf32, #tpu.memory_space<vmem>>, vector<1x384xf32>
    %5 = vector.broadcast %4 : vector<1x384xf32> to vector<8x384xf32>
    %6 = arith.addf %3, %5 : vector<8x384xf32>
    %7 = arith.truncf %6 : vector<8x384xf32> to vector<8x384xbf16>
    %c0_6 = arith.constant 0 : index
    %c0_7 = arith.constant 0 : index
    %c0_8 = arith.constant 0 : index
    %8 = vector.load %arg4[%c0_6, %c0_7, %c0_8] : memref<1x1x8xf32, #tpu.memory_space<vmem>>, vector<1x1x8xf32>
    %9 = vector.shape_cast %8 : vector<1x1x8xf32> to vector<1x8xf32>
    %10 = vector.extract_strided_slice %7 {offsets = [0, 0], sizes = [8, 32], strides = [1, 1]} : vector<8x384xbf16> to vector<8x32xbf16>
    %11 = vector.extract_strided_slice %7 {offsets = [0, 128], sizes = [8, 32], strides = [1, 1]} : vector<8x384xbf16> to vector<8x32xbf16>
    %12 = vector.extract_strided_slice %7 {offsets = [0, 256], sizes = [8, 32], strides = [1, 1]} : vector<8x384xbf16> to vector<8x32xbf16>
    %cst_9 = arith.constant dense<0.000000e+00> : vector<8x8xf32>
    %13 = tpu.matmul %10, %11, %cst_9 {dimension_numbers = #tpu.dot_dimension_numbers<[1], [1], [0], [0], [0, 0, 1, 0], [], []>} : vector<8x32xbf16>, vector<8x32xbf16>, vector<8x8xf32> -> vector<8x8xf32>
    %cst_10 = arith.constant 0.176776692 : f32
    %14 = vector.broadcast %cst_10 : f32 to vector<8x8xf32>
    %15 = arith.mulf %13, %14 : vector<8x8xf32>
    %16 = vector.broadcast %9 : vector<1x8xf32> to vector<8x8xf32>
    %17 = arith.addf %15, %16 : vector<8x8xf32>
    %cst_11 = arith.constant dense<0xFF800000> : vector<8xf32>
    %18 = vector.multi_reduction <maximumf>, %17, %cst_11 [1] : vector<8x8xf32> to vector<8xf32>
    %19 = vector.shape_cast %18 : vector<8xf32> to vector<8x1xf32>
    %20 = vector.broadcast %19 : vector<8x1xf32> to vector<8x8xf32>
    %21 = arith.subf %17, %20 : vector<8x8xf32>
    %22 = math.exp %21 : vector<8x8xf32>
    %cst_12 = arith.constant dense<0.000000e+00> : vector<8xf32>
    %23 = vector.multi_reduction <add>, %22, %cst_12 [1] : vector<8x8xf32> to vector<8xf32>
    %24 = vector.shape_cast %23 : vector<8xf32> to vector<8x1xf32>
    %25 = tpu.reciprocal %24 {approx = true} : vector<8x1xf32> -> vector<8x1xf32>
    %26 = vector.broadcast %25 : vector<8x1xf32> to vector<8x8xf32>
    %27 = arith.mulf %22, %26 : vector<8x8xf32>
    %28 = arith.truncf %27 : vector<8x8xf32> to vector<8x8xbf16>
    %cst_13 = arith.constant dense<0.000000e+00> : vector<8x32xf32>
    %29 = tpu.matmul %28, %12, %cst_13 {dimension_numbers = #tpu.dot_dimension_numbers<[1], [0], [0], [1], [0, 0, 1, 1], [], []>} : vector<8x8xbf16>, vector<8x32xbf16>, vector<8x32xf32> -> vector<8x32xf32>
    %30 = vector.extract_strided_slice %7 {offsets = [0, 32], sizes = [8, 32], strides = [1, 1]} : vector<8x384xbf16> to vector<8x32xbf16>
    %31 = vector.extract_strided_slice %7 {offsets = [0, 160], sizes = [8, 32], strides = [1, 1]} : vector<8x384xbf16> to vector<8x32xbf16>
    %32 = vector.extract_strided_slice %7 {offsets = [0, 288], sizes = [8, 32], strides = [1, 1]} : vector<8x384xbf16> to vector<8x32xbf16>
    %cst_14 = arith.constant dense<0.000000e+00> : vector<8x8xf32>
    %33 = tpu.matmul %30, %31, %cst_14 {dimension_numbers = #tpu.dot_dimension_numbers<[1], [1], [0], [0], [0, 0, 1, 0], [], []>} : vector<8x32xbf16>, vector<8x32xbf16>, vector<8x8xf32> -> vector<8x8xf32>
    %cst_15 = arith.constant 0.176776692 : f32
    %34 = vector.broadcast %cst_15 : f32 to vector<8x8xf32>
    %35 = arith.mulf %33, %34 : vector<8x8xf32>
    %36 = vector.broadcast %9 : vector<1x8xf32> to vector<8x8xf32>
    %37 = arith.addf %35, %36 : vector<8x8xf32>
    %cst_16 = arith.constant dense<0xFF800000> : vector<8xf32>
    %38 = vector.multi_reduction <maximumf>, %37, %cst_16 [1] : vector<8x8xf32> to vector<8xf32>
    %39 = vector.shape_cast %38 : vector<8xf32> to vector<8x1xf32>
    %40 = vector.broadcast %39 : vector<8x1xf32> to vector<8x8xf32>
    %41 = arith.subf %37, %40 : vector<8x8xf32>
    %42 = math.exp %41 : vector<8x8xf32>
    %cst_17 = arith.constant dense<0.000000e+00> : vector<8xf32>
    %43 = vector.multi_reduction <add>, %42, %cst_17 [1] : vector<8x8xf32> to vector<8xf32>
    %44 = vector.shape_cast %43 : vector<8xf32> to vector<8x1xf32>
    %45 = tpu.reciprocal %44 {approx = true} : vector<8x1xf32> -> vector<8x1xf32>
    %46 = vector.broadcast %45 : vector<8x1xf32> to vector<8x8xf32>
    %47 = arith.mulf %42, %46 : vector<8x8xf32>
    %48 = arith.truncf %47 : vector<8x8xf32> to vector<8x8xbf16>
    %cst_18 = arith.constant dense<0.000000e+00> : vector<8x32xf32>
    %49 = tpu.matmul %48, %32, %cst_18 {dimension_numbers = #tpu.dot_dimension_numbers<[1], [0], [0], [1], [0, 0, 1, 1], [], []>} : vector<8x8xbf16>, vector<8x32xbf16>, vector<8x32xf32> -> vector<8x32xf32>
    %50 = vector.extract_strided_slice %7 {offsets = [0, 64], sizes = [8, 32], strides = [1, 1]} : vector<8x384xbf16> to vector<8x32xbf16>
    %51 = vector.extract_strided_slice %7 {offsets = [0, 192], sizes = [8, 32], strides = [1, 1]} : vector<8x384xbf16> to vector<8x32xbf16>
    %52 = vector.extract_strided_slice %7 {offsets = [0, 320], sizes = [8, 32], strides = [1, 1]} : vector<8x384xbf16> to vector<8x32xbf16>
    %cst_19 = arith.constant dense<0.000000e+00> : vector<8x8xf32>
    %53 = tpu.matmul %50, %51, %cst_19 {dimension_numbers = #tpu.dot_dimension_numbers<[1], [1], [0], [0], [0, 0, 1, 0], [], []>} : vector<8x32xbf16>, vector<8x32xbf16>, vector<8x8xf32> -> vector<8x8xf32>
    %cst_20 = arith.constant 0.176776692 : f32
    %54 = vector.broadcast %cst_20 : f32 to vector<8x8xf32>
    %55 = arith.mulf %53, %54 : vector<8x8xf32>
    %56 = vector.broadcast %9 : vector<1x8xf32> to vector<8x8xf32>
    %57 = arith.addf %55, %56 : vector<8x8xf32>
    %cst_21 = arith.constant dense<0xFF800000> : vector<8xf32>
    %58 = vector.multi_reduction <maximumf>, %57, %cst_21 [1] : vector<8x8xf32> to vector<8xf32>
    %59 = vector.shape_cast %58 : vector<8xf32> to vector<8x1xf32>
    %60 = vector.broadcast %59 : vector<8x1xf32> to vector<8x8xf32>
    %61 = arith.subf %57, %60 : vector<8x8xf32>
    %62 = math.exp %61 : vector<8x8xf32>
    %cst_22 = arith.constant dense<0.000000e+00> : vector<8xf32>
    %63 = vector.multi_reduction <add>, %62, %cst_22 [1] : vector<8x8xf32> to vector<8xf32>
    %64 = vector.shape_cast %63 : vector<8xf32> to vector<8x1xf32>
    %65 = tpu.reciprocal %64 {approx = true} : vector<8x1xf32> -> vector<8x1xf32>
    %66 = vector.broadcast %65 : vector<8x1xf32> to vector<8x8xf32>
    %67 = arith.mulf %62, %66 : vector<8x8xf32>
    %68 = arith.truncf %67 : vector<8x8xf32> to vector<8x8xbf16>
    %cst_23 = arith.constant dense<0.000000e+00> : vector<8x32xf32>
    %69 = tpu.matmul %68, %52, %cst_23 {dimension_numbers = #tpu.dot_dimension_numbers<[1], [0], [0], [1], [0, 0, 1, 1], [], []>} : vector<8x8xbf16>, vector<8x32xbf16>, vector<8x32xf32> -> vector<8x32xf32>
    %70 = vector.extract_strided_slice %7 {offsets = [0, 96], sizes = [8, 32], strides = [1, 1]} : vector<8x384xbf16> to vector<8x32xbf16>
    %71 = vector.extract_strided_slice %7 {offsets = [0, 224], sizes = [8, 32], strides = [1, 1]} : vector<8x384xbf16> to vector<8x32xbf16>
    %72 = vector.extract_strided_slice %7 {offsets = [0, 352], sizes = [8, 32], strides = [1, 1]} : vector<8x384xbf16> to vector<8x32xbf16>
    %cst_24 = arith.constant dense<0.000000e+00> : vector<8x8xf32>
    %73 = tpu.matmul %70, %71, %cst_24 {dimension_numbers = #tpu.dot_dimension_numbers<[1], [1], [0], [0], [0, 0, 1, 0], [], []>} : vector<8x32xbf16>, vector<8x32xbf16>, vector<8x8xf32> -> vector<8x8xf32>
    %cst_25 = arith.constant 0.176776692 : f32
    %74 = vector.broadcast %cst_25 : f32 to vector<8x8xf32>
    %75 = arith.mulf %73, %74 : vector<8x8xf32>
    %76 = vector.broadcast %9 : vector<1x8xf32> to vector<8x8xf32>
    %77 = arith.addf %75, %76 : vector<8x8xf32>
    %cst_26 = arith.constant dense<0xFF800000> : vector<8xf32>
    %78 = vector.multi_reduction <maximumf>, %77, %cst_26 [1] : vector<8x8xf32> to vector<8xf32>
    %79 = vector.shape_cast %78 : vector<8xf32> to vector<8x1xf32>
    %80 = vector.broadcast %79 : vector<8x1xf32> to vector<8x8xf32>
    %81 = arith.subf %77, %80 : vector<8x8xf32>
    %82 = math.exp %81 : vector<8x8xf32>
    %cst_27 = arith.constant dense<0.000000e+00> : vector<8xf32>
    %83 = vector.multi_reduction <add>, %82, %cst_27 [1] : vector<8x8xf32> to vector<8xf32>
    %84 = vector.shape_cast %83 : vector<8xf32> to vector<8x1xf32>
    %85 = tpu.reciprocal %84 {approx = true} : vector<8x1xf32> -> vector<8x1xf32>
    %86 = vector.broadcast %85 : vector<8x1xf32> to vector<8x8xf32>
    %87 = arith.mulf %82, %86 : vector<8x8xf32>
    %88 = arith.truncf %87 : vector<8x8xf32> to vector<8x8xbf16>
    %cst_28 = arith.constant dense<0.000000e+00> : vector<8x32xf32>
    %89 = tpu.matmul %88, %72, %cst_28 {dimension_numbers = #tpu.dot_dimension_numbers<[1], [0], [0], [1], [0, 0, 1, 1], [], []>} : vector<8x8xbf16>, vector<8x32xbf16>, vector<8x32xf32> -> vector<8x32xf32>
    %90 = tpu.concatenate %29, %49, %69, %89 in 1 : vector<8x32xf32>, vector<8x32xf32>, vector<8x32xf32>, vector<8x32xf32> -> vector<8x128xf32>
    %91 = arith.truncf %90 : vector<8x128xf32> to vector<8x128xbf16>
    %c0_29 = arith.constant 0 : index
    %c0_30 = arith.constant 0 : index
    %c0_31 = arith.constant 0 : index
    %92 = vector.load %arg5[%c0_29, %c0_30, %c0_31] : memref<1x8x128xbf16, #tpu.memory_space<vmem>>, vector<1x8x128xbf16>
    %93 = vector.shape_cast %92 : vector<1x8x128xbf16> to vector<8x128xbf16>
    %94 = vector.shape_cast %91 : vector<8x128xbf16> to vector<1x8x128xbf16>
    tpu.vector_store %arg5[%c0_29, %c0_30, %c0_31], %94 {strides = array<i32>} : memref<1x8x128xbf16, #tpu.memory_space<vmem>>, vector<1x8x128xbf16>,
    return
  }
  func.func @transform_0(%arg0: i32) -> (i32, i32, i32) {
    %c0_i32 = arith.constant 0 : i32
    %c0_i32_0 = arith.constant 0 : i32
    %c0_i32_1 = arith.constant 0 : i32
    return %arg0, %c0_i32, %c0_i32_0 : i32, i32, i32
  }
  func.func @transform_1(%arg0: i32) -> (i32, i32) {
    %c0_i32 = arith.constant 0 : i32
    %c0_i32_0 = arith.constant 0 : i32
    %c0_i32_1 = arith.constant 0 : i32
    return %c0_i32, %c0_i32_0 : i32, i32
  }
  func.func @transform_2(%arg0: i32) -> (i32, i32) {
    %c0_i32 = arith.constant 0 : i32
    %c0_i32_0 = arith.constant 0 : i32
    %c0_i32_1 = arith.constant 0 : i32
    return %c0_i32, %c0_i32_0 : i32, i32
  }
  func.func @transform_3(%arg0: i32) -> (i32, i32, i32) {
    %c0_i32 = arith.constant 0 : i32
    %c0_i32_0 = arith.constant 0 : i32
    %c0_i32_1 = arith.constant 0 : i32
    return %arg0, %c0_i32, %c0_i32_0 : i32, i32, i32
  }
  func.func @transform_4(%arg0: i32) -> (i32, i32, i32) {
    %c0_i32 = arith.constant 0 : i32
    %c0_i32_0 = arith.constant 0 : i32
    %c0_i32_1 = arith.constant 0 : i32
    return %arg0, %c0_i32, %c0_i32_0 : i32, i32, i32
  }
}

module attributes {stable_mosaic.version = 11 : i64} {
  func.func @_ffn_kernel(%arg0: i32, %arg1: memref<16x128xbf16, #tpu.memory_space<vmem>>, %arg2: memref<128x512xbf16, #tpu.memory_space<vmem>>, %arg3: memref<1x512xf32, #tpu.memory_space<vmem>>, %arg4: memref<512x128xbf16, #tpu.memory_space<vmem>>, %arg5: memref<1x128xf32, #tpu.memory_space<vmem>>, %arg6: memref<1x128xf32, #tpu.memory_space<vmem>>, %arg7: memref<1x128xf32, #tpu.memory_space<vmem>>, %arg8: memref<16x128xbf16, #tpu.memory_space<vmem>>) attributes {dimension_semantics = [#tpu.dimension_semantics<parallel>], iteration_bounds = array<i64: 1>, scalar_prefetch = 0 : i64, scratch_operands = 0 : i64, tpu.core_type = #tpu.core_type<tc>, window_params = [{transform_indices = @transform_0, window_bounds = array<i64: 16, 128>}, {pipeline_mode = #tpu.pipeline_mode<synchronous>, transform_indices = @transform_1, window_bounds = array<i64: 128, 512>}, {pipeline_mode = #tpu.pipeline_mode<synchronous>, transform_indices = @transform_2, window_bounds = array<i64: 1, 512>}, {pipeline_mode = #tpu.pipeline_mode<synchronous>, transform_indices = @transform_3, window_bounds = array<i64: 512, 128>}, {pipeline_mode = #tpu.pipeline_mode<synchronous>, transform_indices = @transform_4, window_bounds = array<i64: 1, 128>}, {pipeline_mode = #tpu.pipeline_mode<synchronous>, transform_indices = @transform_5, window_bounds = array<i64: 1, 128>}, {pipeline_mode = #tpu.pipeline_mode<synchronous>, transform_indices = @transform_6, window_bounds = array<i64: 1, 128>}, {transform_indices = @transform_7, window_bounds = array<i64: 16, 128>}]} {
    %c0 = arith.constant 0 : index
    %c0_0 = arith.constant 0 : index
    %0 = vector.load %arg1[%c0, %c0_0] : memref<16x128xbf16, #tpu.memory_space<vmem>>, vector<16x128xbf16>
    %c0_1 = arith.constant 0 : index
    %c0_2 = arith.constant 0 : index
    %1 = vector.load %arg2[%c0_1, %c0_2] : memref<128x512xbf16, #tpu.memory_space<vmem>>, vector<128x512xbf16>
    %cst = arith.constant dense<0.000000e+00> : vector<16x512xf32>
    %2 = tpu.matmul %0, %1, %cst {dimension_numbers = #tpu.dot_dimension_numbers<[1], [0], [0], [1], [0, 0, 1, 1], [], []>} : vector<16x128xbf16>, vector<128x512xbf16>, vector<16x512xf32> -> vector<16x512xf32>
    %c0_3 = arith.constant 0 : index
    %c0_4 = arith.constant 0 : index
    %3 = vector.load %arg3[%c0_3, %c0_4] : memref<1x512xf32, #tpu.memory_space<vmem>>, vector<1x512xf32>
    %4 = vector.broadcast %3 : vector<1x512xf32> to vector<16x512xf32>
    %5 = arith.addf %2, %4 : vector<16x512xf32>
    %cst_5 = arith.constant 5.000000e-01 : f32
    %6 = vector.broadcast %cst_5 : f32 to vector<16x512xf32>
    %7 = arith.mulf %6, %5 : vector<16x512xf32>
    %cst_6 = arith.constant 4.471500e-02 : f32
    %8 = vector.broadcast %cst_6 : f32 to vector<16x512xf32>
    %9 = arith.mulf %8, %5 : vector<16x512xf32>
    %10 = arith.mulf %9, %5 : vector<16x512xf32>
    %11 = arith.mulf %10, %5 : vector<16x512xf32>
    %12 = arith.addf %5, %11 : vector<16x512xf32>
    %cst_7 = arith.constant 0.797884583 : f32
    %13 = vector.broadcast %cst_7 : f32 to vector<16x512xf32>
    %14 = arith.mulf %13, %12 : vector<16x512xf32>
    %15 = math.tanh %14 : vector<16x512xf32>
    %cst_8 = arith.constant 1.000000e+00 : f32
    %16 = vector.broadcast %cst_8 : f32 to vector<16x512xf32>
    %17 = arith.addf %16, %15 : vector<16x512xf32>
    %18 = arith.mulf %7, %17 : vector<16x512xf32>
    %19 = arith.truncf %18 : vector<16x512xf32> to vector<16x512xbf16>
    %c0_9 = arith.constant 0 : index
    %c0_10 = arith.constant 0 : index
    %20 = vector.load %arg4[%c0_9, %c0_10] : memref<512x128xbf16, #tpu.memory_space<vmem>>, vector<512x128xbf16>
    %cst_11 = arith.constant dense<0.000000e+00> : vector<16x128xf32>
    %21 = tpu.matmul %19, %20, %cst_11 {dimension_numbers = #tpu.dot_dimension_numbers<[1], [0], [0], [1], [0, 0, 1, 1], [], []>} : vector<16x512xbf16>, vector<512x128xbf16>, vector<16x128xf32> -> vector<16x128xf32>
    %c0_12 = arith.constant 0 : index
    %c0_13 = arith.constant 0 : index
    %22 = vector.load %arg5[%c0_12, %c0_13] : memref<1x128xf32, #tpu.memory_space<vmem>>, vector<1x128xf32>
    %23 = vector.broadcast %22 : vector<1x128xf32> to vector<16x128xf32>
    %24 = arith.addf %21, %23 : vector<16x128xf32>
    %c0_14 = arith.constant 0 : index
    %c0_15 = arith.constant 0 : index
    %25 = vector.load %arg1[%c0_14, %c0_15] : memref<16x128xbf16, #tpu.memory_space<vmem>>, vector<16x128xbf16>
    %26 = arith.extf %25 : vector<16x128xbf16> to vector<16x128xf32>
    %27 = arith.addf %24, %26 : vector<16x128xf32>
    %cst_16 = arith.constant dense<0.000000e+00> : vector<16xf32>
    %28 = vector.multi_reduction <add>, %27, %cst_16 [1] : vector<16x128xf32> to vector<16xf32>
    %29 = vector.shape_cast %28 : vector<16xf32> to vector<16x1xf32>
    %cst_17 = arith.constant 1.280000e+02 : f32
    %30 = vector.broadcast %cst_17 : f32 to vector<16x1xf32>
    %31 = arith.divf %29, %30 : vector<16x1xf32>
    %32 = vector.broadcast %31 : vector<16x1xf32> to vector<16x128xf32>
    %33 = arith.subf %27, %32 : vector<16x128xf32>
    %34 = arith.mulf %33, %33 : vector<16x128xf32>
    %cst_18 = arith.constant dense<0.000000e+00> : vector<16xf32>
    %35 = vector.multi_reduction <add>, %34, %cst_18 [1] : vector<16x128xf32> to vector<16xf32>
    %36 = vector.shape_cast %35 : vector<16xf32> to vector<16x1xf32>
    %cst_19 = arith.constant 1.280000e+02 : f32
    %37 = vector.broadcast %cst_19 : f32 to vector<16x1xf32>
    %38 = arith.divf %36, %37 : vector<16x1xf32>
    %cst_20 = arith.constant 9.99999996E-13 : f32
    %39 = vector.broadcast %cst_20 : f32 to vector<16x1xf32>
    %40 = arith.addf %38, %39 : vector<16x1xf32>
    %41 = math.rsqrt %40 : vector<16x1xf32>
    %42 = vector.broadcast %31 : vector<16x1xf32> to vector<16x128xf32>
    %43 = arith.subf %27, %42 : vector<16x128xf32>
    %44 = vector.broadcast %41 : vector<16x1xf32> to vector<16x128xf32>
    %45 = arith.mulf %43, %44 : vector<16x128xf32>
    %c0_21 = arith.constant 0 : index
    %c0_22 = arith.constant 0 : index
    %46 = vector.load %arg6[%c0_21, %c0_22] : memref<1x128xf32, #tpu.memory_space<vmem>>, vector<1x128xf32>
    %47 = vector.broadcast %46 : vector<1x128xf32> to vector<16x128xf32>
    %48 = arith.mulf %45, %47 : vector<16x128xf32>
    %c0_23 = arith.constant 0 : index
    %c0_24 = arith.constant 0 : index
    %49 = vector.load %arg7[%c0_23, %c0_24] : memref<1x128xf32, #tpu.memory_space<vmem>>, vector<1x128xf32>
    %50 = vector.broadcast %49 : vector<1x128xf32> to vector<16x128xf32>
    %51 = arith.addf %48, %50 : vector<16x128xf32>
    %52 = arith.truncf %51 : vector<16x128xf32> to vector<16x128xbf16>
    %c0_25 = arith.constant 0 : index
    %c0_26 = arith.constant 0 : index
    %53 = vector.load %arg8[%c0_25, %c0_26] : memref<16x128xbf16, #tpu.memory_space<vmem>>, vector<16x128xbf16>
    tpu.vector_store %arg8[%c0_25, %c0_26], %52 {strides = array<i32>} : memref<16x128xbf16, #tpu.memory_space<vmem>>, vector<16x128xbf16>,
    return
  }
  func.func @transform_0(%arg0: i32) -> (i32, i32) {
    %c0_i32 = arith.constant 0 : i32
    %c0_i32_0 = arith.constant 0 : i32
    return %arg0, %c0_i32 : i32, i32
  }
  func.func @transform_1(%arg0: i32) -> (i32, i32) {
    %c0_i32 = arith.constant 0 : i32
    %c0_i32_0 = arith.constant 0 : i32
    %c0_i32_1 = arith.constant 0 : i32
    return %c0_i32, %c0_i32_0 : i32, i32
  }
  func.func @transform_2(%arg0: i32) -> (i32, i32) {
    %c0_i32 = arith.constant 0 : i32
    %c0_i32_0 = arith.constant 0 : i32
    %c0_i32_1 = arith.constant 0 : i32
    return %c0_i32, %c0_i32_0 : i32, i32
  }
  func.func @transform_3(%arg0: i32) -> (i32, i32) {
    %c0_i32 = arith.constant 0 : i32
    %c0_i32_0 = arith.constant 0 : i32
    %c0_i32_1 = arith.constant 0 : i32
    return %c0_i32, %c0_i32_0 : i32, i32
  }
  func.func @transform_4(%arg0: i32) -> (i32, i32) {
    %c0_i32 = arith.constant 0 : i32
    %c0_i32_0 = arith.constant 0 : i32
    %c0_i32_1 = arith.constant 0 : i32
    return %c0_i32, %c0_i32_0 : i32, i32
  }
  func.func @transform_5(%arg0: i32) -> (i32, i32) {
    %c0_i32 = arith.constant 0 : i32
    %c0_i32_0 = arith.constant 0 : i32
    %c0_i32_1 = arith.constant 0 : i32
    return %c0_i32, %c0_i32_0 : i32, i32
  }
  func.func @transform_6(%arg0: i32) -> (i32, i32) {
    %c0_i32 = arith.constant 0 : i32
    %c0_i32_0 = arith.constant 0 : i32
    %c0_i32_1 = arith.constant 0 : i32
    return %c0_i32, %c0_i32_0 : i32, i32
  }
  func.func @transform_7(%arg0: i32) -> (i32, i32) {
    %c0_i32 = arith.constant 0 : i32
    %c0_i32_0 = arith.constant 0 : i32
    return %arg0, %c0_i32 : i32, i32
  }
}

module attributes {stable_mosaic.version = 11 : i64} {
  func.func @_linear_kernel(%arg0: i32, %arg1: memref<2x128xbf16, #tpu.memory_space<vmem>>, %arg2: memref<128x128xbf16, #tpu.memory_space<vmem>>, %arg3: memref<1x128xf32, #tpu.memory_space<vmem>>, %arg4: memref<2x128xf32, #tpu.memory_space<vmem>>) attributes {dimension_semantics = [#tpu.dimension_semantics<parallel>], iteration_bounds = array<i64: 1>, scalar_prefetch = 0 : i64, scratch_operands = 0 : i64, tpu.core_type = #tpu.core_type<tc>, window_params = [{transform_indices = @transform_0, window_bounds = array<i64: 2, 128>}, {pipeline_mode = #tpu.pipeline_mode<synchronous>, transform_indices = @transform_1, window_bounds = array<i64: 128, 128>}, {pipeline_mode = #tpu.pipeline_mode<synchronous>, transform_indices = @transform_2, window_bounds = array<i64: 1, 128>}, {transform_indices = @transform_3, window_bounds = array<i64: 2, 128>}]} {
    %c0 = arith.constant 0 : index
    %c0_0 = arith.constant 0 : index
    %0 = vector.load %arg1[%c0, %c0_0] : memref<2x128xbf16, #tpu.memory_space<vmem>>, vector<2x128xbf16>
    %c0_1 = arith.constant 0 : index
    %c0_2 = arith.constant 0 : index
    %1 = vector.load %arg2[%c0_1, %c0_2] : memref<128x128xbf16, #tpu.memory_space<vmem>>, vector<128x128xbf16>
    %cst = arith.constant dense<0.000000e+00> : vector<2x128xf32>
    %2 = tpu.matmul %0, %1, %cst {dimension_numbers = #tpu.dot_dimension_numbers<[1], [0], [0], [1], [0, 0, 1, 1], [], []>} : vector<2x128xbf16>, vector<128x128xbf16>, vector<2x128xf32> -> vector<2x128xf32>
    %c0_3 = arith.constant 0 : index
    %c0_4 = arith.constant 0 : index
    %3 = vector.load %arg3[%c0_3, %c0_4] : memref<1x128xf32, #tpu.memory_space<vmem>>, vector<1x128xf32>
    %4 = vector.broadcast %3 : vector<1x128xf32> to vector<2x128xf32>
    %5 = arith.addf %2, %4 : vector<2x128xf32>
    %6 = math.tanh %5 : vector<2x128xf32>
    %c0_5 = arith.constant 0 : index
    %c0_6 = arith.constant 0 : index
    %7 = vector.load %arg4[%c0_5, %c0_6] : memref<2x128xf32, #tpu.memory_space<vmem>>, vector<2x128xf32>
    tpu.vector_store %arg4[%c0_5, %c0_6], %6 {strides = array<i32>} : memref<2x128xf32, #tpu.memory_space<vmem>>, vector<2x128xf32>,
    return
  }
  func.func @transform_0(%arg0: i32) -> (i32, i32) {
    %c0_i32 = arith.constant 0 : i32
    %c0_i32_0 = arith.constant 0 : i32
    return %arg0, %c0_i32 : i32, i32
  }
  func.func @transform_1(%arg0: i32) -> (i32, i32) {
    %c0_i32 = arith.constant 0 : i32
    %c0_i32_0 = arith.constant 0 : i32
    %c0_i32_1 = arith.constant 0 : i32
    return %c0_i32, %c0_i32_0 : i32, i32
  }
  func.func @transform_2(%arg0: i32) -> (i32, i32) {
    %c0_i32 = arith.constant 0 : i32
    %c0_i32_0 = arith.constant 0 : i32
    %c0_i32_1 = arith.constant 0 : i32
    return %c0_i32, %c0_i32_0 : i32, i32
  }
  func.func @transform_3(%arg0: i32) -> (i32, i32) {
    %c0_i32 = arith.constant 0 : i32
    %c0_i32_0 = arith.constant 0 : i32
    return %arg0, %c0_i32 : i32, i32
  }
}

module attributes {stable_mosaic.version = 11 : i64} {
  func.func @_cls_combine_kernel(%arg0: i32, %arg1: memref<2x3x128xbf16, #tpu.memory_space<vmem>>, %arg2: memref<1x3x128xf32, #tpu.memory_space<vmem>>, %arg3: memref<2x128xf32, #tpu.memory_space<vmem>>) attributes {dimension_semantics = [#tpu.dimension_semantics<arbitrary>], iteration_bounds = array<i64: 1>, scalar_prefetch = 0 : i64, scratch_operands = 0 : i64, tpu.core_type = #tpu.core_type<tc>, window_params = [{pipeline_mode = #tpu.pipeline_mode<synchronous>, transform_indices = @transform_0, window_bounds = array<i64: 2, 3, 128>}, {pipeline_mode = #tpu.pipeline_mode<synchronous>, transform_indices = @transform_1, window_bounds = array<i64: 1, 3, 128>}, {pipeline_mode = #tpu.pipeline_mode<synchronous>, transform_indices = @transform_2, window_bounds = array<i64: 2, 128>}]} {
    %c0 = arith.constant 0 : index
    %c0_0 = arith.constant 0 : index
    %c0_1 = arith.constant 0 : index
    %0 = vector.load %arg1[%c0, %c0_0, %c0_1] : memref<2x3x128xbf16, #tpu.memory_space<vmem>>, vector<2x3x128xbf16>
    %1 = arith.extf %0 : vector<2x3x128xbf16> to vector<2x3x128xf32>
    %c0_2 = arith.constant 0 : index
    %c0_3 = arith.constant 0 : index
    %c0_4 = arith.constant 0 : index
    %2 = vector.load %arg2[%c0_2, %c0_3, %c0_4] : memref<1x3x128xf32, #tpu.memory_space<vmem>>, vector<1x3x128xf32>
    %3 = vector.broadcast %2 : vector<1x3x128xf32> to vector<2x3x128xf32>
    %4 = arith.mulf %1, %3 : vector<2x3x128xf32>
    %cst = arith.constant dense<0.000000e+00> : vector<2x128xf32>
    %5 = vector.multi_reduction <add>, %4, %cst [1] : vector<2x3x128xf32> to vector<2x128xf32>
    %c0_5 = arith.constant 0 : index
    %c0_6 = arith.constant 0 : index
    %6 = vector.load %arg3[%c0_5, %c0_6] : memref<2x128xf32, #tpu.memory_space<vmem>>, vector<2x128xf32>
    tpu.vector_store %arg3[%c0_5, %c0_6], %5 {strides = array<i32>} : memref<2x128xf32, #tpu.memory_space<vmem>>, vector<2x128xf32>,
    return
  }
  func.func @transform_0(%arg0: i32) -> (i32, i32, i32) {
    %c0_i32 = arith.constant 0 : i32
    %c0_i32_0 = arith.constant 0 : i32
    %c0_i32_1 = arith.constant 0 : i32
    %c0_i32_2 = arith.constant 0 : i32
    return %c0_i32, %c0_i32_0, %c0_i32_1 : i32, i32, i32
  }
  func.func @transform_1(%arg0: i32) -> (i32, i32, i32) {
    %c0_i32 = arith.constant 0 : i32
    %c0_i32_0 = arith.constant 0 : i32
    %c0_i32_1 = arith.constant 0 : i32
    %c0_i32_2 = arith.constant 0 : i32
    return %c0_i32, %c0_i32_0, %c0_i32_1 : i32, i32, i32
  }
  func.func @transform_2(%arg0: i32) -> (i32, i32) {
    %c0_i32 = arith.constant 0 : i32
    %c0_i32_0 = arith.constant 0 : i32
    %c0_i32_1 = arith.constant 0 : i32
    return %c0_i32, %c0_i32_0 : i32, i32
  }
}

module attributes {stable_mosaic.version = 11 : i64} {
  func.func @_linear_kernel(%arg0: i32, %arg1: memref<2x128xf32, #tpu.memory_space<vmem>>, %arg2: memref<128x64xbf16, #tpu.memory_space<vmem>>, %arg3: memref<1x64xf32, #tpu.memory_space<vmem>>, %arg4: memref<2x64xf32, #tpu.memory_space<vmem>>) attributes {dimension_semantics = [#tpu.dimension_semantics<parallel>], iteration_bounds = array<i64: 1>, scalar_prefetch = 0 : i64, scratch_operands = 0 : i64, tpu.core_type = #tpu.core_type<tc>, window_params = [{transform_indices = @transform_0, window_bounds = array<i64: 2, 128>}, {pipeline_mode = #tpu.pipeline_mode<synchronous>, transform_indices = @transform_1, window_bounds = array<i64: 128, 64>}, {pipeline_mode = #tpu.pipeline_mode<synchronous>, transform_indices = @transform_2, window_bounds = array<i64: 1, 64>}, {transform_indices = @transform_3, window_bounds = array<i64: 2, 64>}]} {
    %c0 = arith.constant 0 : index
    %c0_0 = arith.constant 0 : index
    %0 = vector.load %arg1[%c0, %c0_0] : memref<2x128xf32, #tpu.memory_space<vmem>>, vector<2x128xf32>
    %1 = arith.truncf %0 : vector<2x128xf32> to vector<2x128xbf16>
    %c0_1 = arith.constant 0 : index
    %c0_2 = arith.constant 0 : index
    %2 = vector.load %arg2[%c0_1, %c0_2] : memref<128x64xbf16, #tpu.memory_space<vmem>>, vector<128x64xbf16>
    %cst = arith.constant dense<0.000000e+00> : vector<2x64xf32>
    %3 = tpu.matmul %1, %2, %cst {dimension_numbers = #tpu.dot_dimension_numbers<[1], [0], [0], [1], [0, 0, 1, 1], [], []>} : vector<2x128xbf16>, vector<128x64xbf16>, vector<2x64xf32> -> vector<2x64xf32>
    %c0_3 = arith.constant 0 : index
    %c0_4 = arith.constant 0 : index
    %4 = vector.load %arg3[%c0_3, %c0_4] : memref<1x64xf32, #tpu.memory_space<vmem>>, vector<1x64xf32>
    %5 = vector.broadcast %4 : vector<1x64xf32> to vector<2x64xf32>
    %6 = arith.addf %3, %5 : vector<2x64xf32>
    %c0_5 = arith.constant 0 : index
    %c0_6 = arith.constant 0 : index
    %7 = vector.load %arg4[%c0_5, %c0_6] : memref<2x64xf32, #tpu.memory_space<vmem>>, vector<2x64xf32>
    tpu.vector_store %arg4[%c0_5, %c0_6], %6 {strides = array<i32>} : memref<2x64xf32, #tpu.memory_space<vmem>>, vector<2x64xf32>,
    return
  }
  func.func @transform_0(%arg0: i32) -> (i32, i32) {
    %c0_i32 = arith.constant 0 : i32
    %c0_i32_0 = arith.constant 0 : i32
    return %arg0, %c0_i32 : i32, i32
  }
  func.func @transform_1(%arg0: i32) -> (i32, i32) {
    %c0_i32 = arith.constant 0 : i32
    %c0_i32_0 = arith.constant 0 : i32
    %c0_i32_1 = arith.constant 0 : i32
    return %c0_i32, %c0_i32_0 : i32, i32
  }
  func.func @transform_2(%arg0: i32) -> (i32, i32) {
    %c0_i32 = arith.constant 0 : i32
    %c0_i32_0 = arith.constant 0 : i32
    %c0_i32_1 = arith.constant 0 : i32
    return %c0_i32, %c0_i32_0 : i32, i32
  }
  func.func @transform_3(%arg0: i32) -> (i32, i32) {
    %c0_i32 = arith.constant 0 : i32
    %c0_i32_0 = arith.constant 0 : i32
    return %arg0, %c0_i32 : i32, i32
  }
}

</mosaic_0001>

<llo_original>
// kernel: bert_encoder2_forward.16
$region0: #{bert_encoder2_forward.16}
  #allocation0 [shape = 'u32[]', space=smem, size = 0x4, offset = 0x4, fixed_abs, tag = 'smem constant byte address 0x4 - core index']
  #allocation1 [shape = 'u32[144,128]{1,0:T(1,128)}', space=vmem, size = 0x12000, scoped, tag = 'internal scratch']
  %s0 = inlined_call_operand.vmem [shape: f32[16,128], index: 0, kind: input, shape index: {}]
  %s1 = inlined_call_operand.vmem [shape: f32[1,128], index: 1, kind: input, shape index: {}]
  %s2 = inlined_call_operand.vmem [shape: f32[1,128], index: 2, kind: input, shape index: {}]
  %s3 = inlined_call_operand.vmem [shape: bf16[16,128], index: 3, kind: output, shape index: {}]
  %s4 = sld [smem:[#allocation0]]
  $region22: #{bert_encoder2_forward.16} parent=0
    _
  %s6 = ssub.s32 1, %s4
  %s7 = scalar_select 0, %s6, %s4
  // Predicated region
  $region2: #{bert_encoder2_forward.16} parent=0 // pred_check
    _
  $region3: #{bert_encoder2_forward.16} parent=0 // pred_check_branch
    %9 = sbr.rel (0) target = $region5
  $region4: #{bert_encoder2_forward.16} parent=0 // pred_region
    _
  $region5: #{bert_encoder2_forward.16} parent=0 // pred_fallthru
    _
  // Predicated region
  $region6: #{bert_encoder2_forward.16} parent=0 // pred_check
    _
  $region7: #{bert_encoder2_forward.16} parent=0 // pred_check_branch
    %11 = sbr.rel (0) target = $region9
  $region8: #{bert_encoder2_forward.16} parent=0 // pred_region
    _
  $region9: #{bert_encoder2_forward.16} parent=0 // pred_fallthru
    _
  // Predicated region
  $region10: #{bert_encoder2_forward.16} parent=0 // pred_check
    _
  $region11: #{bert_encoder2_forward.16} parent=0 // pred_check_branch
    %13 = sbr.rel (0) target = $region13
  $region12: #{bert_encoder2_forward.16} parent=0 // pred_region
    _
  $region13: #{bert_encoder2_forward.16} parent=0 // pred_fallthru
    _
  %v14 = vld [vmem:[%s0] sm:$0xff]
  %v15 = vld [vmem:[%s0 + $0x8] sm:$0xff]
  %16 = vadd.xlane.f32.xlu0 %v14
  %v17 = vpop.xlane.xlu0 %16
  %18 = vadd.xlane.f32.xlu0 %v15
  %v19 = vpop.xlane.xlu0 %18
  %v20 = vrcp.pop 128.0
  %v21 = vmul.f32 %v17, %v20
  %v22 = vmul.f32 %v19, %v20
  %v23 = vsub.f32 %v14, %v21
  %v24 = vsub.f32 %v15, %v22
  %v25 = vmul.f32 %v23, %v23
  %v26 = vmul.f32 %v24, %v24
  %27 = vadd.xlane.f32.xlu0 %v25
  %v28 = vpop.xlane.xlu0 %27
  %29 = vadd.xlane.f32.xlu0 %v26
  %v30 = vpop.xlane.xlu0 %29
  %v31 = vmul.f32 %v28, %v20
  %v32 = vmul.f32 %v30, %v20
  %v33 = vadd.f32 %v31, 1e-12
  %v34 = vadd.f32 %v32, 1e-12
  %v35 = vrsqrt.pop %v33
  %v36 = vrsqrt.pop %v34
  %v37 = vmul.f32 %v23, %v35
  %v38 = vmul.f32 %v24, %v36
  %v39 = vld [vmem:[%s1] sm:$0x1]
  %v41 = vlaneseq
  %v42 = vshrl.u32 %v41, 7
  %v43 = vsub.s32 0, %v42
  %v44 = vrot.slane %v39, %v43
  %v46 = vmul.f32 %v37, %v44
  %v47 = vmul.f32 %v38, %v44
  %v48 = vld [vmem:[%s2] sm:$0x1]
  %v50 = vlaneseq
  %v51 = vshrl.u32 %v50, 7
  %v52 = vsub.s32 0, %v51
  %v53 = vrot.slane %v48, %v52
  %v55 = vadd.f32 %v46, %v53
  %v56 = vadd.f32 %v47, %v53
  %v57 = vpack.c.bf16 %v56, %v55
  %v59 = vunpack.c.l.b16 %v57
  %v60 = vunpack.c.h.b16 %v57
  %v61 = vpack.c.b16 %v59, %v59
  %v62 = vpack.c.b16 %v60, %v60
  %65 = vst [vmem:[%s3] sm:$0xf] %v61
  %66 = vst [vmem:[%s3 + $0x4] sm:$0xf] %v62
  // Predicated region
  $region14: #{bert_encoder2_forward.16} parent=0 // pred_check
    _
  $region15: #{bert_encoder2_forward.16} parent=0 // pred_check_branch
    %68 = sbr.rel (0) target = $region17
  $region16: #{bert_encoder2_forward.16} parent=0 // pred_region
    _
  $region17: #{bert_encoder2_forward.16} parent=0 // pred_fallthru
    _
  // Predicated region
  $region18: #{bert_encoder2_forward.16} parent=0 // pred_check
    _
  $region19: #{bert_encoder2_forward.16} parent=0 // pred_check_branch
    %70 = sbr.rel (0) target = $region21
  $region20: #{bert_encoder2_forward.16} parent=0 // pred_region
    _
  $region21: #{bert_encoder2_forward.16} parent=0 // pred_fallthru
    _

// kernel: bert_encoder2_forward.18
$region0: #{bert_encoder2_forward.18}
  #allocation0 [shape = 'u32[]', space=smem, size = 0x4, offset = 0x4, fixed_abs, tag = 'smem constant byte address 0x4 - core index']
  #allocation1 [shape = 'u32[144,128]{1,0:T(1,128)}', space=vmem, size = 0x12000, scoped, tag = 'internal scratch']
  %s0 = inlined_call_operand.vmem [shape: bf16[16,128], index: 0, kind: input, shape index: {}]
  %s1 = inlined_call_operand.vmem [shape: bf16[128,128], index: 1, kind: input, shape index: {}]
  %s2 = inlined_call_operand.vmem [shape: f32[1,128], index: 2, kind: input, shape index: {}]
  %s3 = inlined_call_operand.vmem [shape: bf16[16,128], index: 3, kind: input, shape index: {}]
  %s4 = inlined_call_operand.vmem [shape: f32[1,128], index: 4, kind: input, shape index: {}]
  %s5 = inlined_call_operand.vmem [shape: f32[1,128], index: 5, kind: input, shape index: {}]
  %s6 = inlined_call_operand.vmem [shape: bf16[16,128], index: 6, kind: output, shape index: {}]
  %s7 = sld [smem:[#allocation0]]
  $region34: #{bert_encoder2_forward.18} parent=0
    _
  %s9 = ssub.s32 1, %s7
  %s10 = scalar_select 0, %s9, %s7
  // Predicated region
  $region2: #{bert_encoder2_forward.18} parent=0 // pred_check
    _
  $region3: #{bert_encoder2_forward.18} parent=0 // pred_check_branch
    %12 = sbr.rel (0) target = $region5
  $region4: #{bert_encoder2_forward.18} parent=0 // pred_region
    _
  $region5: #{bert_encoder2_forward.18} parent=0 // pred_fallthru
    _
  // Predicated region
  $region6: #{bert_encoder2_forward.18} parent=0 // pred_check
    _
  $region7: #{bert_encoder2_forward.18} parent=0 // pred_check_branch
    %14 = sbr.rel (0) target = $region9
  $region8: #{bert_encoder2_forward.18} parent=0 // pred_region
    _
  $region9: #{bert_encoder2_forward.18} parent=0 // pred_fallthru
    _
  // Predicated region
  $region10: #{bert_encoder2_forward.18} parent=0 // pred_check
    _
  $region11: #{bert_encoder2_forward.18} parent=0 // pred_check_branch
    %16 = sbr.rel (0) target = $region13
  $region12: #{bert_encoder2_forward.18} parent=0 // pred_region
    _
  $region13: #{bert_encoder2_forward.18} parent=0 // pred_fallthru
    _
  // Predicated region
  $region14: #{bert_encoder2_forward.18} parent=0 // pred_check
    _
  $region15: #{bert_encoder2_forward.18} parent=0 // pred_check_branch
    %18 = sbr.rel (0) target = $region17
  $region16: #{bert_encoder2_forward.18} parent=0 // pred_region
    _
  $region17: #{bert_encoder2_forward.18} parent=0 // pred_fallthru
    _
  // Predicated region
  $region18: #{bert_encoder2_forward.18} parent=0 // pred_check
    _
  $region19: #{bert_encoder2_forward.18} parent=0 // pred_check_branch
    %20 = sbr.rel (0) target = $region21
  $region20: #{bert_encoder2_forward.18} parent=0 // pred_region
    _
  $region21: #{bert_encoder2_forward.18} parent=0 // pred_fallthru
    _
  // Predicated region
  $region22: #{bert_encoder2_forward.18} parent=0 // pred_check
    _
  $region23: #{bert_encoder2_forward.18} parent=0 // pred_check_branch
    %22 = sbr.rel (0) target = $region25
  $region24: #{bert_encoder2_forward.18} parent=0 // pred_region
    _
  $region25: #{bert_encoder2_forward.18} parent=0 // pred_fallthru
    _
  %v24 = vld [vmem:[%s0] sm:$0xf]
  %v25 = vld [vmem:[%s0 + $0x4] sm:$0xf]
  %v26 = vld [vmem:[%s1] sm:$0xf]
  %v27 = vld [vmem:[%s1 + $0x4] sm:$0xf]
  %v28 = vld [vmem:[%s1 + $0x8] sm:$0xf]
  %v29 = vld [vmem:[%s1 + $0xc] sm:$0xf]
  %v30 = vld [vmem:[%s1 + $0x10] sm:$0xf]
  %v31 = vld [vmem:[%s1 + $0x14] sm:$0xf]
  %v32 = vld [vmem:[%s1 + $0x18] sm:$0xf]
  %v33 = vld [vmem:[%s1 + $0x1c] sm:$0xf]
  %v34 = vld [vmem:[%s1 + $0x20] sm:$0xf]
  %v35 = vld [vmem:[%s1 + $0x24] sm:$0xf]
  %v36 = vld [vmem:[%s1 + $0x28] sm:$0xf]
  %v37 = vld [vmem:[%s1 + $0x2c] sm:$0xf]
  %v38 = vld [vmem:[%s1 + $0x30] sm:$0xf]
  %v39 = vld [vmem:[%s1 + $0x34] sm:$0xf]
  %v40 = vld [vmem:[%s1 + $0x38] sm:$0xf]
  %v41 = vld [vmem:[%s1 + $0x3c] sm:$0xf]
  %v42 = vld [vmem:[%s2] sm:$0x1]
  %v44 = vlaneseq
  %v45 = vshrl.u32 %v44, 7
  %v46 = vsub.s32 0, %v45
  %v47 = vrot.slane %v42, %v46
  %v51 = vunpack.c.l.b16 %v24
  %v52 = vunpack.c.l.b16 %v25
  %v53 = vpack.c.b16 %v52, %v51
  %v71 = vunpack.c.l.b16 %v26
  %v72 = vunpack.c.l.b16 %v27
  %v73 = vunpack.c.l.b16 %v28
  %v74 = vunpack.c.l.b16 %v29
  %v75 = vunpack.c.l.b16 %v30
  %v76 = vunpack.c.l.b16 %v31
  %v77 = vunpack.c.l.b16 %v32
  %v78 = vunpack.c.l.b16 %v33
  %v79 = vunpack.c.l.b16 %v34
  %v80 = vunpack.c.l.b16 %v35
  %v81 = vunpack.c.l.b16 %v36
  %v82 = vunpack.c.l.b16 %v37
  %v83 = vunpack.c.l.b16 %v38
  %v84 = vunpack.c.l.b16 %v39
  %v85 = vunpack.c.l.b16 %v40
  %v86 = vunpack.c.l.b16 %v41
  %v87 = vpack.c.b16 %v72, %v71
  %v88 = vpack.c.b16 %v74, %v73
  %v89 = vpack.c.b16 %v76, %v75
  %v90 = vpack.c.b16 %v78, %v77
  %v91 = vpack.c.b16 %v80, %v79
  %v92 = vpack.c.b16 %v82, %v81
  %v93 = vpack.c.b16 %v84, %v83
  %v94 = vpack.c.b16 %v86, %v85
  %103 = vmatprep.subr.bf16.mxu0 0
  %104 = vmatpush1.bf16.msra.mxu0 %v87
  %105 = vmatprep.subr.bf16.mxu0 0
  %106 = vmatpush1.bf16.msra.mxu0 %v88
  %107 = vmatprep.subr.bf16.mxu0 0
  %108 = vmatpush1.bf16.msra.mxu0 %v89
  %109 = vmatprep.subr.bf16.mxu0 0
  %110 = vmatpush1.bf16.msra.mxu0 %v90
  %111 = vmatprep.subr.bf16.mxu0 0
  %112 = vmatpush1.bf16.msra.mxu0 %v91
  %113 = vmatprep.subr.bf16.mxu0 0
  %114 = vmatpush1.bf16.msra.mxu0 %v92
  %115 = vmatprep.subr.bf16.mxu0 0
  %116 = vmatpush1.bf16.msra.mxu0 %v93
  %117 = vmatprep.subr.bf16.mxu0 0
  %118 = vmatpush1.bf16.msra.mxu0 %v94
  %119 = vmatprep.subr.bf16.mxu0 0
  %120 = vmatpush1.bf16.msra.mxu0 0
  %121 = vmatprep.subr.bf16.mxu0 0
  %122 = vmatpush1.bf16.msra.mxu0 0
  %123 = vmatprep.subr.bf16.mxu0 0
  %124 = vmatpush1.bf16.msra.mxu0 0
  %125 = vmatprep.subr.bf16.mxu0 0
  %126 = vmatpush1.bf16.msra.mxu0 0
  %127 = vmatprep.subr.bf16.mxu0 0
  %128 = vmatpush1.bf16.msra.mxu0 0
  %129 = vmatprep.subr.bf16.mxu0 0
  %130 = vmatpush1.bf16.msra.mxu0 0
  %131 = vmatprep.subr.bf16.mxu0 0
  %132 = vmatpush1.bf16.msra.mxu0 0
  %133 = vmatprep.subr.bf16.mxu0 0
  %134 = vmatpush1.bf16.msra.mxu0 0
  %135 = vmatprep.mubr.bf16.mxu0 0
  %136 = vmatmul.mubr.bf16.gmra.mrb[0].mxu0 %v53
  %v137 = vpop.f32.mrb[0].mxu0
  %v138 = vadd.f32 %v47, %v137
  %v139 = vpop.f32.mrb[0].mxu0
  %v140 = vpop.f32.mrb[0].mxu0
  %v141 = vadd.f32 %v47, %v140
  %v142 = vpop.f32.mrb[0].mxu0
  %143 = vdwg.mxu0
  %v144 = vld [vmem:[%s3] sm:$0xf]
  %v145 = vld [vmem:[%s3 + $0x4] sm:$0xf]
  %v146 = vunpack.c.l.bf16 %v144
  %v147 = vunpack.c.l.bf16 %v145
  %v148 = vadd.f32 %v138, %v146
  %v149 = vadd.f32 %v141, %v147
  %150 = vadd.xlane.f32.xlu0 %v148
  %v151 = vpop.xlane.xlu0 %150
  %152 = vadd.xlane.f32.xlu0 %v149
  %v153 = vpop.xlane.xlu0 %152
  %v154 = vrcp.pop 128.0
  %v155 = vmul.f32 %v151, %v154
  %v156 = vmul.f32 %v153, %v154
  %v157 = vsub.f32 %v148, %v155
  %v158 = vsub.f32 %v149, %v156
  %v159 = vmul.f32 %v157, %v157
  %v160 = vmul.f32 %v158, %v158
  %161 = vadd.xlane.f32.xlu0 %v159
  %v162 = vpop.xlane.xlu0 %161
  %163 = vadd.xlane.f32.xlu0 %v160
  %v164 = vpop.xlane.xlu0 %163
  %v165 = vmul.f32 %v162, %v154
  %v166 = vmul.f32 %v164, %v154
  %v167 = vadd.f32 %v165, 1e-12
  %v168 = vadd.f32 %v166, 1e-12
  %v169 = vrsqrt.pop %v167
  %v170 = vrsqrt.pop %v168
  %v171 = vmul.f32 %v157, %v169
  %v172 = vmul.f32 %v158, %v170
  %v173 = vld [vmem:[%s4] sm:$0x1]
  %v175 = vlaneseq
  %v176 = vshrl.u32 %v175, 7
  %v177 = vsub.s32 0, %v176
  %v178 = vrot.slane %v173, %v177
  %v180 = vmul.f32 %v171, %v178
  %v181 = vmul.f32 %v172, %v178
  %v182 = vld [vmem:[%s5] sm:$0x1]
  %v184 = vlaneseq
  %v185 = vshrl.u32 %v184, 7
  %v186 = vsub.s32 0, %v185
  %v187 = vrot.slane %v182, %v186
  %v189 = vadd.f32 %v180, %v187
  %v190 = vadd.f32 %v181, %v187
  %v191 = vpack.c.bf16 %v190, %v189
  %v193 = vunpack.c.l.b16 %v191
  %v194 = vunpack.c.h.b16 %v191
  %v195 = vpack.c.b16 %v193, %v193
  %v196 = vpack.c.b16 %v194, %v194
  %199 = vst [vmem:[%s6] sm:$0xf] %v195
  %200 = vst [vmem:[%s6 + $0x4] sm:$0xf] %v196
  // Predicated region
  $region26: #{bert_encoder2_forward.18} parent=0 // pred_check
    _
  $region27: #{bert_encoder2_forward.18} parent=0 // pred_check_branch
    %202 = sbr.rel (0) target = $region29
  $region28: #{bert_encoder2_forward.18} parent=0 // pred_region
    _
  $region29: #{bert_encoder2_forward.18} parent=0 // pred_fallthru
    _
  // Predicated region
  $region30: #{bert_encoder2_forward.18} parent=0 // pred_check
    _
  $region31: #{bert_encoder2_forward.18} parent=0 // pred_check_branch
    %204 = sbr.rel (0) target = $region33
  $region32: #{bert_encoder2_forward.18} parent=0 // pred_region
    _
  $region33: #{bert_encoder2_forward.18} parent=0 // pred_fallthru
    _

// kernel: bert_encoder2_forward.17
$region0: #{bert_encoder2_forward.17}
  #allocation0 [shape = 'u32[]', space=smem, size = 0x4, offset = 0x4, fixed_abs, tag = 'smem constant byte address 0x4 - core index']
  #allocation1 [shape = 'u32[144,128]{1,0:T(1,128)}', space=vmem, size = 0x12000, scoped, tag = 'internal scratch']
  %s0 = inlined_call_operand.vmem [shape: bf16[2,8,128], index: 0, kind: input, shape index: {}]
  %s1 = inlined_call_operand.vmem [shape: bf16[128,384], index: 1, kind: input, shape index: {}]
  %s2 = inlined_call_operand.vmem [shape: f32[1,384], index: 2, kind: input, shape index: {}]
  %s3 = inlined_call_operand.vmem [shape: f32[2,1,8], index: 3, kind: input, shape index: {}]
  %s4 = inlined_call_operand.vmem [shape: bf16[2,8,128], index: 4, kind: output, shape index: {}]
  %s5 = sld [smem:[#allocation0]]
  $region49: #{bert_encoder2_forward.17} parent=0
    _
  %s7 = ssub.s32 1, %s5
  %s8 = scalar_select 0, %s7, %s5
  loop: start=0, step=1, limit=4
  $region2: #{bert_encoder2_forward.17} parent=0 // loop_pre_header
    _
  $region3: #{bert_encoder2_forward.17} parent=0 // loop_header
    %s10 = sphi 0, %s14
    %p11 = scmp.ge.s32.totalorder %s10, 4
    %s20 = sphi 0, %s22
    %s23 = sphi 0, %s20
    %s24 = sphi 0, %s23
    %s40 = sphi 0, %s24
    %s44 = sphi 0, %s44
    %s46 = sphi 0, %s44
    %s47 = sphi 0, %s46
    %s61 = sphi 0, %s47
    %s65 = sphi 0, %s65
    %s67 = sphi 0, %s65
    %s68 = sphi 0, %s67
    %s82 = sphi 0, %s68
    %s88 = sphi 0, %s90
    %s91 = sphi 0, %s88
    %s92 = sphi 0, %s91
    %s108 = sphi 0, %s92
    %s114 = sphi 0, %s116
    %s117 = sphi 0, %s114
    %s118 = sphi 0, %s117
    %s134 = sphi 0, %s118
  $region4: #{bert_encoder2_forward.17} parent=0 // loop_header_branch
    %13 = sbr.rel (%p11) target = $region8
  $region5: #{bert_encoder2_forward.17} parent=0 // loop_body
    %s15 = ssub.s32 %s10, 1
    %s16 = ssub.s32 %s10, 2
    %s17 = sadd.s32 %s10, 1
    %s18 = ssub.s32 %s10, %s17
    %p19 = scmp.eq.s32.totalorder %s18, 0
    %s21 = sadd.s32 %s20, 1
    %s22 = scalar_select %p19, %s20, %s21
    %p25 = pneg %p19
    %p26 = scmp.eq.s32.totalorder %s10, 1
    %p27 = por %p25, %p26
    %p28 = scmp.ne.s32.totalorder %s20, %s23
    %p29 = scmp.eq.s32.totalorder %s10, 0
    %p30 = por %p28, %p29
    %p31 = scmp.ne.s32.totalorder %s20, %s23
    %p32 = scmp.eq.s32.totalorder %s15, 1
    %p33 = por %p31, %p32
    %p34 = scmp.ne.s32.totalorder %s23, %s24
    %p35 = scmp.eq.s32.totalorder %s15, 0
    %p36 = por %p34, %p35
    %p37 = scmp.ne.s32.totalorder %s23, %s24
    %p38 = scmp.eq.s32.totalorder %s16, 1
    %p39 = por %p37, %p38
    %p41 = scmp.ne.s32.totalorder %s24, %s40
    %p42 = scmp.eq.s32.totalorder %s16, 0
    %p43 = por %p41, %p42
    %s45 = sadd.s32 %s44, 1
    %p48 = scmp.eq.s32.totalorder %s10, 1
    %p49 = scmp.ne.s32.totalorder %s44, %s46
    %p50 = scmp.eq.s32.totalorder %s10, 0
    %p51 = por %p49, %p50
    %p52 = scmp.ne.s32.totalorder %s44, %s46
    %p53 = scmp.eq.s32.totalorder %s15, 1
    %p54 = por %p52, %p53
    %p55 = scmp.ne.s32.totalorder %s46, %s47
    %p56 = scmp.eq.s32.totalorder %s15, 0
    %p57 = por %p55, %p56
    %p58 = scmp.ne.s32.totalorder %s46, %s47
    %p59 = scmp.eq.s32.totalorder %s16, 1
    %p60 = por %p58, %p59
    %p62 = scmp.ne.s32.totalorder %s47, %s61
    %p63 = scmp.eq.s32.totalorder %s16, 0
    %p64 = por %p62, %p63
    %s66 = sadd.s32 %s65, 1
    %p69 = scmp.eq.s32.totalorder %s10, 1
    %p70 = scmp.ne.s32.totalorder %s65, %s67
    %p71 = scmp.eq.s32.totalorder %s10, 0
    %p72 = por %p70, %p71
    %p73 = scmp.ne.s32.totalorder %s65, %s67
    %p74 = scmp.eq.s32.totalorder %s15, 1
    %p75 = por %p73, %p74
    %p76 = scmp.ne.s32.totalorder %s67, %s68
    %p77 = scmp.eq.s32.totalorder %s15, 0
    %p78 = por %p76, %p77
    %p79 = scmp.ne.s32.totalorder %s67, %s68
    %p80 = scmp.eq.s32.totalorder %s16, 1
    %p81 = por %p79, %p80
    %p83 = scmp.ne.s32.totalorder %s68, %s82
    %p84 = scmp.eq.s32.totalorder %s16, 0
    %p85 = por %p83, %p84
    %s86 = ssub.s32 %s10, %s17
    %p87 = scmp.eq.s32.totalorder %s86, 0
    %s89 = sadd.s32 %s88, 1
    %s90 = scalar_select %p87, %s88, %s89
    %p93 = pneg %p87
    %p94 = scmp.eq.s32.totalorder %s10, 1
    %p95 = por %p93, %p94
    %p96 = scmp.ne.s32.totalorder %s88, %s91
    %p97 = scmp.eq.s32.totalorder %s10, 0
    %p98 = por %p96, %p97
    %p99 = scmp.ne.s32.totalorder %s88, %s91
    %p100 = scmp.eq.s32.totalorder %s15, 1
    %p101 = por %p99, %p100
    %p102 = scmp.ne.s32.totalorder %s91, %s92
    %p103 = scmp.eq.s32.totalorder %s15, 0
    %p104 = por %p102, %p103
    %p105 = scmp.ne.s32.totalorder %s91, %s92
    %p106 = scmp.eq.s32.totalorder %s16, 1
    %p107 = por %p105, %p106
    %p109 = scmp.ne.s32.totalorder %s92, %s108
    %p110 = scmp.eq.s32.totalorder %s16, 0
    %p111 = por %p109, %p110
    %s112 = ssub.s32 %s10, %s17
    %p113 = scmp.eq.s32.totalorder %s112, 0
    %s115 = sadd.s32 %s114, 1
    %s116 = scalar_select %p113, %s114, %s115
    %p119 = pneg %p113
    %p120 = scmp.eq.s32.totalorder %s10, 1
    %p121 = por %p119, %p120
    %p122 = scmp.ne.s32.totalorder %s114, %s117
    %p123 = scmp.eq.s32.totalorder %s10, 0
    %p124 = por %p122, %p123
    %p125 = scmp.ne.s32.totalorder %s114, %s117
    %p126 = scmp.eq.s32.totalorder %s15, 1
    %p127 = por %p125, %p126
    %p128 = scmp.ne.s32.totalorder %s117, %s118
    %p129 = scmp.eq.s32.totalorder %s15, 0
    %p130 = por %p128, %p129
    %p131 = scmp.ne.s32.totalorder %s117, %s118
    %p132 = scmp.eq.s32.totalorder %s16, 1
    %p133 = por %p131, %p132
    %p135 = scmp.ne.s32.totalorder %s118, %s134
    %p136 = scmp.eq.s32.totalorder %s16, 0
    %p137 = por %p135, %p136
    %p138 = scmp.le.s32.totalorder 1, %s10
    %p139 = scmp.lt.s32.totalorder %s10, 3
    %p140 = pnand %p138, %p139
    %p141 = pneg %p140
    // Predicated region
    $region9: #{bert_encoder2_forward.17} parent=5 // pred_check
      _
    $region10: #{bert_encoder2_forward.17} parent=5 // pred_check_branch
      %143 = sbr.rel (%p140) target = $region12
    $region11: #{bert_encoder2_forward.17} parent=5 // pred_region
      %s144 = ssub.s32 %s10, 1
      // Predicated region
      $region13: #{bert_encoder2_forward.17} parent=11 // pred_check
        %p145 = pneg %p57
      $region14: #{bert_encoder2_forward.17} parent=11 // pred_check_branch
        %147 = sbr.rel (%p145) target = $region16
      $region15: #{bert_encoder2_forward.17} parent=11 // pred_region
        _
      $region16: #{bert_encoder2_forward.17} parent=11 // pred_fallthru
        _
      // Predicated region
      $region17: #{bert_encoder2_forward.17} parent=11 // pred_check
        %p148 = pneg %p78
      $region18: #{bert_encoder2_forward.17} parent=11 // pred_check_branch
        %150 = sbr.rel (%p148) target = $region20
      $region19: #{bert_encoder2_forward.17} parent=11 // pred_region
        _
      $region20: #{bert_encoder2_forward.17} parent=11 // pred_fallthru
        _
    $region12: #{bert_encoder2_forward.17} parent=5 // pred_fallthru
      _
    %p151 = scmp.lt.s32.totalorder %s10, 2
    // Predicated region
    $region21: #{bert_encoder2_forward.17} parent=5 // pred_check
      %p152 = pneg %p151
    $region22: #{bert_encoder2_forward.17} parent=5 // pred_check_branch
      %154 = sbr.rel (%p152) target = $region24
    $region23: #{bert_encoder2_forward.17} parent=5 // pred_region
      // Predicated region
      $region25: #{bert_encoder2_forward.17} parent=23 // pred_check
        %p155 = pneg %p30
      $region26: #{bert_encoder2_forward.17} parent=23 // pred_check_branch
        %157 = sbr.rel (%p155) target = $region28
      $region27: #{bert_encoder2_forward.17} parent=23 // pred_region
        %p158 = scmp.lt.s32.totalorder %s10, 1
        %s159 = scalar_select %p158, %s10, 1
        %s160 = smul.addr %s159, 4
        %s161 = scalar_lea.vmem %s0, %s160
      $region28: #{bert_encoder2_forward.17} parent=23 // pred_fallthru
        _
      // Predicated region
      $region29: #{bert_encoder2_forward.17} parent=23 // pred_check
        %p162 = pneg %p98
      $region30: #{bert_encoder2_forward.17} parent=23 // pred_check_branch
        %164 = sbr.rel (%p162) target = $region32
      $region31: #{bert_encoder2_forward.17} parent=23 // pred_region
        %p165 = scmp.lt.s32.totalorder %s10, 1
        %s166 = scalar_select %p165, %s10, 1
        %s167 = scalar_lea.vmem %s3, %s166
      $region32: #{bert_encoder2_forward.17} parent=23 // pred_fallthru
        _
    $region24: #{bert_encoder2_forward.17} parent=5 // pred_fallthru
      _
    %p168 = scmp.le.s32.totalorder 1, %s10
    %p169 = scmp.lt.s32.totalorder %s10, 3
    %p170 = pnand %p168, %p169
    %p171 = pneg %p170
    // Predicated region
    $region33: #{bert_encoder2_forward.17} parent=5 // pred_check
      _
    $region34: #{bert_encoder2_forward.17} parent=5 // pred_check_branch
      %173 = sbr.rel (%p170) target = $region36
    $region35: #{bert_encoder2_forward.17} parent=5 // pred_region
      %s174 = ssub.s32 %s10, 1
      %p175 = scmp.lt.s32.totalorder %s15, 1
      %s176 = scalar_select %p175, %s15, 1
      %s177 = smul.addr %s176, 4
      %s178 = scalar_lea.vmem %s0, %s177
      %p179 = pneg %p36
      %p180 = pneg %p33
      %p181 = pneg %p57
      %p182 = pneg %p54
      %p183 = pneg %p78
      %p184 = pneg %p75
      %p185 = scmp.lt.s32.totalorder %s15, 1
      %s186 = scalar_select %p185, %s15, 1
      %s187 = scalar_lea.vmem %s3, %s186
      %p188 = pneg %p104
      %p189 = pneg %p101
      %p190 = pneg %p130
      %p191 = pneg %p127
      %p192 = scmp.lt.s32.totalorder %s15, 1
      %s193 = scalar_select %p192, %s15, 1
      %s194 = smul.addr %s193, 4
      %s195 = scalar_lea.vmem %s4, %s194
      %p196 = scmp.lt.s32.totalorder %s15, 1
      %s197 = scalar_select %p196, %s15, 1
      %s198 = smul.addr %s197, 4
      %s199 = scalar_lea.vmem %s0, %s198
      %p200 = scmp.lt.s32.totalorder %s15, 1
      %s201 = scalar_select %p200, %s15, 1
      %s202 = scalar_lea.vmem %s3, %s201
      %p203 = scmp.lt.s32.totalorder %s15, 1
      %s204 = scalar_select %p203, %s15, 1
      %s205 = smul.addr %s204, 4
      %s206 = scalar_lea.vmem %s4, %s205
      %v208 = vld [vmem:[%s199] sm:$0xf]
      %v209 = vld [vmem:[%s1] sm:$0xff]
      %v210 = vld [vmem:[%s1 + $0x8] sm:$0xf]
      %v211 = vld [vmem:[%s1 + $0xc] sm:$0xff]
      %v212 = vld [vmem:[%s1 + $0x14] sm:$0xf]
      %v213 = vld [vmem:[%s1 + $0x18] sm:$0xff]
      %v214 = vld [vmem:[%s1 + $0x20] sm:$0xf]
      %v215 = vld [vmem:[%s1 + $0x24] sm:$0xff]
      %v216 = vld [vmem:[%s1 + $0x2c] sm:$0xf]
      %v217 = vld [vmem:[%s1 + $0x30] sm:$0xff]
      %v218 = vld [vmem:[%s1 + $0x38] sm:$0xf]
      %v219 = vld [vmem:[%s1 + $0x3c] sm:$0xff]
      %v220 = vld [vmem:[%s1 + $0x44] sm:$0xf]
      %v221 = vld [vmem:[%s1 + $0x48] sm:$0xff]
      %v222 = vld [vmem:[%s1 + $0x50] sm:$0xf]
      %v223 = vld [vmem:[%s1 + $0x54] sm:$0xff]
      %v224 = vld [vmem:[%s1 + $0x5c] sm:$0xf]
      %v225 = vld [vmem:[%s1 + $0x60] sm:$0xff]
      %v226 = vld [vmem:[%s1 + $0x68] sm:$0xf]
      %v227 = vld [vmem:[%s1 + $0x6c] sm:$0xff]
      %v228 = vld [vmem:[%s1 + $0x74] sm:$0xf]
      %v229 = vld [vmem:[%s1 + $0x78] sm:$0xff]
      %v230 = vld [vmem:[%s1 + $0x80] sm:$0xf]
      %v231 = vld [vmem:[%s1 + $0x84] sm:$0xff]
      %v232 = vld [vmem:[%s1 + $0x8c] sm:$0xf]
      %v233 = vld [vmem:[%s1 + $0x90] sm:$0xff]
      %v234 = vld [vmem:[%s1 + $0x98] sm:$0xf]
      %v235 = vld [vmem:[%s1 + $0x9c] sm:$0xff]
      %v236 = vld [vmem:[%s1 + $0xa4] sm:$0xf]
      %v237 = vld [vmem:[%s1 + $0xa8] sm:$0xff]
      %v238 = vld [vmem:[%s1 + $0xb0] sm:$0xf]
      %v239 = vld [vmem:[%s1 + $0xb4] sm:$0xff]
      %v240 = vld [vmem:[%s1 + $0xbc] sm:$0xf]
      %v241 = vld [vmem:[%s2] sm:$0x7]
      %v243 = vlaneseq
      %v244 = vshrl.u32 %v243, 7
      %v245 = vsub.s32 0, %v244
      %v246 = vrot.slane %v241, %v245
      %v247 = vlaneseq
      %v248 = vshrl.u32 %v247, 7
      %v249 = vsub.s32 1, %v248
      %v250 = vrot.slane %v241, %v249
      %v251 = vlaneseq
      %v252 = vshrl.u32 %v251, 7
      %v253 = vsub.s32 2, %v252
      %v254 = vrot.slane %v241, %v253
      %v290 = vunpack.c.l.b16 %v209
      %v291 = vunpack.c.h.b16 %v209
      %v292 = vunpack.c.l.b16 %v210
      %v293 = vunpack.c.l.b16 %v211
      %v294 = vunpack.c.h.b16 %v211
      %v295 = vunpack.c.l.b16 %v212
      %v296 = vunpack.c.l.b16 %v213
      %v297 = vunpack.c.h.b16 %v213
      %v298 = vunpack.c.l.b16 %v214
      %v299 = vunpack.c.l.b16 %v215
      %v300 = vunpack.c.h.b16 %v215
      %v301 = vunpack.c.l.b16 %v216
      %v302 = vunpack.c.l.b16 %v217
      %v303 = vunpack.c.h.b16 %v217
      %v304 = vunpack.c.l.b16 %v218
      %v305 = vunpack.c.l.b16 %v219
      %v306 = vunpack.c.h.b16 %v219
      %v307 = vunpack.c.l.b16 %v220
      %v308 = vunpack.c.l.b16 %v221
      %v309 = vunpack.c.h.b16 %v221
      %v310 = vunpack.c.l.b16 %v222
      %v311 = vunpack.c.l.b16 %v223
      %v312 = vunpack.c.h.b16 %v223
      %v313 = vunpack.c.l.b16 %v224
      %v314 = vunpack.c.l.b16 %v225
      %v315 = vunpack.c.h.b16 %v225
      %v316 = vunpack.c.l.b16 %v226
      %v317 = vunpack.c.l.b16 %v227
      %v318 = vunpack.c.h.b16 %v227
      %v319 = vunpack.c.l.b16 %v228
      %v320 = vunpack.c.l.b16 %v229
      %v321 = vunpack.c.h.b16 %v229
      %v322 = vunpack.c.l.b16 %v230
      %v323 = vunpack.c.l.b16 %v231
      %v324 = vunpack.c.h.b16 %v231
      %v325 = vunpack.c.l.b16 %v232
      %v326 = vunpack.c.l.b16 %v233
      %v327 = vunpack.c.h.b16 %v233
      %v328 = vunpack.c.l.b16 %v234
      %v329 = vunpack.c.l.b16 %v235
      %v330 = vunpack.c.h.b16 %v235
      %v331 = vunpack.c.l.b16 %v236
      %v332 = vunpack.c.l.b16 %v237
      %v333 = vunpack.c.h.b16 %v237
      %v334 = vunpack.c.l.b16 %v238
      %v335 = vunpack.c.l.b16 %v239
      %v336 = vunpack.c.h.b16 %v239
      %v337 = vunpack.c.l.b16 %v240
      %v338 = vpack.c.b16 %v293, %v290
      %v339 = vpack.c.b16 %v294, %v291
      %v340 = vpack.c.b16 %v295, %v292
      %v341 = vpack.c.b16 %v299, %v296
      %v342 = vpack.c.b16 %v300, %v297
      %v343 = vpack.c.b16 %v301, %v298
      %v344 = vpack.c.b16 %v305, %v302
      %v345 = vpack.c.b16 %v306, %v303
      %v346 = vpack.c.b16 %v307, %v304
      %v347 = vpack.c.b16 %v311, %v308
      %v348 = vpack.c.b16 %v312, %v309
      %v349 = vpack.c.b16 %v313, %v310
      %v350 = vpack.c.b16 %v317, %v314
      %v351 = vpack.c.b16 %v318, %v315
      %v352 = vpack.c.b16 %v319, %v316
      %v353 = vpack.c.b16 %v323, %v320
      %v354 = vpack.c.b16 %v324, %v321
      %v355 = vpack.c.b16 %v325, %v322
      %v356 = vpack.c.b16 %v329, %v326
      %v357 = vpack.c.b16 %v330, %v327
      %v358 = vpack.c.b16 %v331, %v328
      %v359 = vpack.c.b16 %v335, %v332
      %v360 = vpack.c.b16 %v336, %v333
      %v361 = vpack.c.b16 %v337, %v334
      %386 = vmatprep.subr.bf16.mxu0 %v339
      %387 = vmatpush1.bf16.msra.mxu0 %v338
      %388 = vmatprep.subr.bf16.mxu0 %v342
      %389 = vmatpush1.bf16.msra.mxu0 %v341
      %390 = vmatprep.subr.bf16.mxu0 %v345
      %391 = vmatpush1.bf16.msra.mxu0 %v344
      %392 = vmatprep.subr.bf16.mxu0 %v348
      %393 = vmatpush1.bf16.msra.mxu0 %v347
      %394 = vmatprep.subr.bf16.mxu0 %v351
      %395 = vmatpush1.bf16.msra.mxu0 %v350
      %396 = vmatprep.subr.bf16.mxu0 %v354
      %397 = vmatpush1.bf16.msra.mxu0 %v353
      %398 = vmatprep.subr.bf16.mxu0 %v357
      %399 = vmatpush1.bf16.msra.mxu0 %v356
      %400 = vmatprep.subr.bf16.mxu0 %v360
      %401 = vmatpush1.bf16.msra.mxu0 %v359
      %402 = vmatprep.subr.bf16.mxu0 0
      %403 = vmatpush1.bf16.msra.mxu0 0
      %404 = vmatprep.subr.bf16.mxu0 0
      %405 = vmatpush1.bf16.msra.mxu0 0
      %406 = vmatprep.subr.bf16.mxu0 0
      %407 = vmatpush1.bf16.msra.mxu0 0
      %408 = vmatprep.subr.bf16.mxu0 0
      %409 = vmatpush1.bf16.msra.mxu0 0
      %410 = vmatprep.subr.bf16.mxu0 0
      %411 = vmatpush1.bf16.msra.mxu0 0
      %412 = vmatprep.subr.bf16.mxu0 0
      %413 = vmatpush1.bf16.msra.mxu0 0
      %414 = vmatprep.subr.bf16.mxu0 0
      %415 = vmatpush1.bf16.msra.mxu0 0
      %416 = vmatprep.subr.bf16.mxu0 0
      %417 = vmatpush1.bf16.msra.mxu0 0
      %418 = vmatprep.mubr.bf16.mxu0 0
      %419 = vmatmul.mubr.bf16.gmra.mrb[0].mxu0 %v208
      %v420 = vpop.f32.mrb[0].mxu0
      %v421 = vadd.f32 %v246, %v420
      %v422 = vpop.f32.mrb[0].mxu0
      %v423 = vadd.f32 %v250, %v422
      %v424 = vpop.f32.mrb[0].mxu0
      %v425 = vpop.f32.mrb[0].mxu0
      %426 = vdwg.mxu0
      %427 = vmatprep.subr.bf16.mxu0 0
      %428 = vmatpush1.bf16.msra.mxu0 %v340
      %429 = vmatprep.subr.bf16.mxu0 0
      %430 = vmatpush1.bf16.msra.mxu0 %v343
      %431 = vmatprep.subr.bf16.mxu0 0
      %432 = vmatpush1.bf16.msra.mxu0 %v346
      %433 = vmatprep.subr.bf16.mxu0 0
      %434 = vmatpush1.bf16.msra.mxu0 %v349
      %435 = vmatprep.subr.bf16.mxu0 0
      %436 = vmatpush1.bf16.msra.mxu0 %v352
      %437 = vmatprep.subr.bf16.mxu0 0
      %438 = vmatpush1.bf16.msra.mxu0 %v355
      %439 = vmatprep.subr.bf16.mxu0 0
      %440 = vmatpush1.bf16.msra.mxu0 %v358
      %441 = vmatprep.subr.bf16.mxu0 0
      %442 = vmatpush1.bf16.msra.mxu0 %v361
      %443 = vmatprep.subr.bf16.mxu0 0
      %444 = vmatpush1.bf16.msra.mxu0 0
      %445 = vmatprep.subr.bf16.mxu0 0
      %446 = vmatpush1.bf16.msra.mxu0 0
      %447 = vmatprep.subr.bf16.mxu0 0
      %448 = vmatpush1.bf16.msra.mxu0 0
      %449 = vmatprep.subr.bf16.mxu0 0
      %450 = vmatpush1.bf16.msra.mxu0 0
      %451 = vmatprep.subr.bf16.mxu0 0
      %452 = vmatpush1.bf16.msra.mxu0 0
      %453 = vmatprep.subr.bf16.mxu0 0
      %454 = vmatpush1.bf16.msra.mxu0 0
      %455 = vmatprep.subr.bf16.mxu0 0
      %456 = vmatpush1.bf16.msra.mxu0 0
      %457 = vmatprep.subr.bf16.mxu0 0
      %458 = vmatpush1.bf16.msra.mxu0 0
      %459 = vmatprep.mubr.bf16.mxu0 0
      %460 = vmatmul.mubr.bf16.gmra.mrb[0].mxu0 %v208
      %v461 = vpop.f32.mrb[0].mxu0
      %v462 = vadd.f32 %v254, %v461
      %v463 = vpop.f32.mrb[0].mxu0
      %v464 = vpop.f32.mrb[0].mxu0
      %v465 = vpop.f32.mrb[0].mxu0
      %466 = vdwg.mxu0
      %v467 = vpack.c.bf16 %v421, %v421
      %v468 = vpack.c.bf16 %v423, %v423
      %v469 = vpack.c.bf16 %v462, %v462
      %v470 = vld [vmem:[%s202] sm:$0x1]
      %vm471 = vcmask 261120
      %v473 = vsel %vm471, %v467, 0
      %v476 = vsel %vm471, %v468, 0
      %478 = vmatprep.subr.bf16.mxu0 0
      %479 = vmatpush1.bf16.xpose.msra.mxu0 %v476
      %480 = vmatprep.subr.bf16.mxu0 0
      %481 = vmatpush1.bf16.xpose.msra.mxu0 0
      %482 = vmatprep.subr.bf16.mxu0 0
      %483 = vmatpush1.bf16.xpose.msra.mxu0 0
      %484 = vmatprep.subr.bf16.mxu0 0
      %485 = vmatpush1.bf16.xpose.msra.mxu0 0
      %486 = vmatprep.subr.bf16.mxu0 0
      %487 = vmatpush1.bf16.xpose.msra.mxu0 0
      %488 = vmatprep.subr.bf16.mxu0 0
      %489 = vmatpush1.bf16.xpose.msra.mxu0 0
      %490 = vmatprep.subr.bf16.mxu0 0
      %491 = vmatpush1.bf16.xpose.msra.mxu0 0
      %492 = vmatprep.subr.bf16.mxu0 0
      %493 = vmatpush1.bf16.xpose.msra.mxu0 0
      %494 = vmatprep.subr.bf16.mxu0 0
      %495 = vmatpush1.bf16.xpose.msra.mxu0 0
      %496 = vmatprep.subr.bf16.mxu0 0
      %497 = vmatpush1.bf16.xpose.msra.mxu0 0
      %498 = vmatprep.subr.bf16.mxu0 0
      %499 = vmatpush1.bf16.xpose.msra.mxu0 0
      %500 = vmatprep.subr.bf16.mxu0 0
      %501 = vmatpush1.bf16.xpose.msra.mxu0 0
      %502 = vmatprep.subr.bf16.mxu0 0
      %503 = vmatpush1.bf16.xpose.msra.mxu0 0
      %504 = vmatprep.subr.bf16.mxu0 0
      %505 = vmatpush1.bf16.xpose.msra.mxu0 0
      %506 = vmatprep.subr.bf16.mxu0 0
      %507 = vmatpush1.bf16.xpose.msra.mxu0 0
      %508 = vmatprep.subr.bf16.mxu0 0
      %509 = vmatpush1.bf16.xpose.msra.mxu0 0
      %510 = vmatprep.mubr.bf16.mxu0 0
      %511 = vmatmul.mubr.bf16.gmra.mrb[0].mxu0 %v473
      %v512 = vpop.f32.mrb[0].mxu0
      %v513 = vadd.f32 0.0, %v512
      %v514 = vpop.f32.mrb[0].mxu0
      %v515 = vpop.f32.mrb[0].mxu0
      %v516 = vpop.f32.mrb[0].mxu0
      %517 = vdwg.mxu0
      %v518 = vmul.f32 %v513, 0.17677669
      %v520 = vlaneseq
      %v521 = vshrl.u32 %v520, 7
      %v522 = vsub.s32 0, %v521
      %v523 = vrot.slane %v470, %v522
      %v525 = vadd.f32 %v518, %v523
      %vm526 = vcmask 64512
      %v527 = vsel %vm526, %v525, -inf
      %528 = vmax.xlane.f32.xlu0 %v527
      %v529 = vpop.xlane.xlu0 %528
      %v530 = vsub.f32 %v525, %v529
      %v531 = vmul.f32 %v530, 1.442695
      %v532 = vpow.pop %v531
      %v533 = vsel %vm526, %v532, 0.0
      %534 = vadd.xlane.f32.xlu0 %v533
      %v535 = vpop.xlane.xlu0 %534
      %v536 = vrcp.pop %v535
      %v537 = vmul.f32 %v532, %v536
      %v538 = vpack.c.bf16 %v537, %v537
      %v540 = vsel %vm526, %v538, 0
      %vm542 = vcmask 1043456
      %v544 = vsel %vm542, %v469, 0
      %546 = vmatprep.subr.bf16.mxu0 0
      %547 = vmatpush1.bf16.msra.mxu0 %v544
      %548 = vmatprep.subr.bf16.mxu0 0
      %549 = vmatpush1.bf16.msra.mxu0 0
      %550 = vmatprep.subr.bf16.mxu0 0
      %551 = vmatpush1.bf16.msra.mxu0 0
      %552 = vmatprep.subr.bf16.mxu0 0
      %553 = vmatpush1.bf16.msra.mxu0 0
      %554 = vmatprep.subr.bf16.mxu0 0
      %555 = vmatpush1.bf16.msra.mxu0 0
      %556 = vmatprep.subr.bf16.mxu0 0
      %557 = vmatpush1.bf16.msra.mxu0 0
      %558 = vmatprep.subr.bf16.mxu0 0
      %559 = vmatpush1.bf16.msra.mxu0 0
      %560 = vmatprep.subr.bf16.mxu0 0
      %561 = vmatpush1.bf16.msra.mxu0 0
      %562 = vmatprep.subr.bf16.mxu0 0
      %563 = vmatpush1.bf16.msra.mxu0 0
      %564 = vmatprep.subr.bf16.mxu0 0
      %565 = vmatpush1.bf16.msra.mxu0 0
      %566 = vmatprep.subr.bf16.mxu0 0
      %567 = vmatpush1.bf16.msra.mxu0 0
      %568 = vmatprep.subr.bf16.mxu0 0
      %569 = vmatpush1.bf16.msra.mxu0 0
      %570 = vmatprep.subr.bf16.mxu0 0
      %571 = vmatpush1.bf16.msra.mxu0 0
      %572 = vmatprep.subr.bf16.mxu0 0
      %573 = vmatpush1.bf16.msra.mxu0 0
      %574 = vmatprep.subr.bf16.mxu0 0
      %575 = vmatpush1.bf16.msra.mxu0 0
      %576 = vmatprep.subr.bf16.mxu0 0
      %577 = vmatpush1.bf16.msra.mxu0 0
      %578 = vmatprep.mubr.bf16.mxu0 0
      %579 = vmatmul.mubr.bf16.gmra.mrb[0].mxu0 %v540
      %v580 = vpop.f32.mrb[0].mxu0
      %v581 = vadd.f32 0.0, %v580
      %v582 = vpop.f32.mrb[0].mxu0
      %v583 = vpop.f32.mrb[0].mxu0
      %v584 = vpop.f32.mrb[0].mxu0
      %585 = vdwg.mxu0
      %587 = vrot.lane.b32.xlu0 %v467, 96
      %v588 = vpop.permute.xlu0 %587
      %590 = vrot.lane.b32.xlu0 %v468, 96
      %v591 = vpop.permute.xlu0 %590
      %v593 = vsel %vm471, %v588, 0
      %v596 = vsel %vm471, %v591, 0
      %598 = vmatprep.subr.bf16.mxu0 0
      %599 = vmatpush1.bf16.xpose.msra.mxu0 %v596
      %600 = vmatprep.subr.bf16.mxu0 0
      %601 = vmatpush1.bf16.xpose.msra.mxu0 0
      %602 = vmatprep.subr.bf16.mxu0 0
      %603 = vmatpush1.bf16.xpose.msra.mxu0 0
      %604 = vmatprep.subr.bf16.mxu0 0
      %605 = vmatpush1.bf16.xpose.msra.mxu0 0
      %606 = vmatprep.subr.bf16.mxu0 0
      %607 = vmatpush1.bf16.xpose.msra.mxu0 0
      %608 = vmatprep.subr.bf16.mxu0 0
      %609 = vmatpush1.bf16.xpose.msra.mxu0 0
      %610 = vmatprep.subr.bf16.mxu0 0
      %611 = vmatpush1.bf16.xpose.msra.mxu0 0
      %612 = vmatprep.subr.bf16.mxu0 0
      %613 = vmatpush1.bf16.xpose.msra.mxu0 0
      %614 = vmatprep.subr.bf16.mxu0 0
      %615 = vmatpush1.bf16.xpose.msra.mxu0 0
      %616 = vmatprep.subr.bf16.mxu0 0
      %617 = vmatpush1.bf16.xpose.msra.mxu0 0
      %618 = vmatprep.subr.bf16.mxu0 0
      %619 = vmatpush1.bf16.xpose.msra.mxu0 0
      %620 = vmatprep.subr.bf16.mxu0 0
      %621 = vmatpush1.bf16.xpose.msra.mxu0 0
      %622 = vmatprep.subr.bf16.mxu0 0
      %623 = vmatpush1.bf16.xpose.msra.mxu0 0
      %624 = vmatprep.subr.bf16.mxu0 0
      %625 = vmatpush1.bf16.xpose.msra.mxu0 0
      %626 = vmatprep.subr.bf16.mxu0 0
      %627 = vmatpush1.bf16.xpose.msra.mxu0 0
      %628 = vmatprep.subr.bf16.mxu0 0
      %629 = vmatpush1.bf16.xpose.msra.mxu0 0
      %630 = vmatprep.mubr.bf16.mxu0 0
      %631 = vmatmul.mubr.bf16.gmra.mrb[0].mxu0 %v593
      %v632 = vpop.f32.mrb[0].mxu0
      %v633 = vadd.f32 0.0, %v632
      %v634 = vpop.f32.mrb[0].mxu0
      %v635 = vpop.f32.mrb[0].mxu0
      %v636 = vpop.f32.mrb[0].mxu0
      %637 = vdwg.mxu0
      %v638 = vmul.f32 %v633, 0.17677669
      %v639 = vadd.f32 %v638, %v523
      %v640 = vsel %vm526, %v639, -inf
      %641 = vmax.xlane.f32.xlu0 %v640
      %v642 = vpop.xlane.xlu0 %641
      %v643 = vsub.f32 %v639, %v642
      %v644 = vmul.f32 %v643, 1.442695
      %v645 = vpow.pop %v644
      %v646 = vsel %vm526, %v645, 0.0
      %647 = vadd.xlane.f32.xlu0 %v646
      %v648 = vpop.xlane.xlu0 %647
      %v649 = vrcp.pop %v648
      %v650 = vmul.f32 %v645, %v649
      %v651 = vpack.c.bf16 %v650, %v650
      %653 = vrot.lane.b32.xlu0 %v469, 96
      %v654 = vpop.permute.xlu0 %653
      %v656 = vsel %vm526, %v651, 0
      %v659 = vsel %vm542, %v654, 0
      %661 = vmatprep.subr.bf16.mxu0 0
      %662 = vmatpush1.bf16.msra.mxu0 %v659
      %663 = vmatprep.subr.bf16.mxu0 0
      %664 = vmatpush1.bf16.msra.mxu0 0
      %665 = vmatprep.subr.bf16.mxu0 0
      %666 = vmatpush1.bf16.msra.mxu0 0
      %667 = vmatprep.subr.bf16.mxu0 0
      %668 = vmatpush1.bf16.msra.mxu0 0
      %669 = vmatprep.subr.bf16.mxu0 0
      %670 = vmatpush1.bf16.msra.mxu0 0
      %671 = vmatprep.subr.bf16.mxu0 0
      %672 = vmatpush1.bf16.msra.mxu0 0
      %673 = vmatprep.subr.bf16.mxu0 0
      %674 = vmatpush1.bf16.msra.mxu0 0
      %675 = vmatprep.subr.bf16.mxu0 0
      %676 = vmatpush1.bf16.msra.mxu0 0
      %677 = vmatprep.subr.bf16.mxu0 0
      %678 = vmatpush1.bf16.msra.mxu0 0
      %679 = vmatprep.subr.bf16.mxu0 0
      %680 = vmatpush1.bf16.msra.mxu0 0
      %681 = vmatprep.subr.bf16.mxu0 0
      %682 = vmatpush1.bf16.msra.mxu0 0
      %683 = vmatprep.subr.bf16.mxu0 0
      %684 = vmatpush1.bf16.msra.mxu0 0
      %685 = vmatprep.subr.bf16.mxu0 0
      %686 = vmatpush1.bf16.msra.mxu0 0
      %687 = vmatprep.subr.bf16.mxu0 0
      %688 = vmatpush1.bf16.msra.mxu0 0
      %689 = vmatprep.subr.bf16.mxu0 0
      %690 = vmatpush1.bf16.msra.mxu0 0
      %691 = vmatprep.subr.bf16.mxu0 0
      %692 = vmatpush1.bf16.msra.mxu0 0
      %693 = vmatprep.mubr.bf16.mxu0 0
      %694 = vmatmul.mubr.bf16.gmra.mrb[0].mxu0 %v656
      %v695 = vpop.f32.mrb[0].mxu0
      %v696 = vadd.f32 0.0, %v695
      %v697 = vpop.f32.mrb[0].mxu0
      %v698 = vpop.f32.mrb[0].mxu0
      %v699 = vpop.f32.mrb[0].mxu0
      %700 = vdwg.mxu0
      %701 = vrot.lane.b32.xlu0 %v467, 64
      %v702 = vpop.permute.xlu0 %701
      %703 = vrot.lane.b32.xlu0 %v468, 64
      %v704 = vpop.permute.xlu0 %703
      %v706 = vsel %vm471, %v702, 0
      %v709 = vsel %vm471, %v704, 0
      %711 = vmatprep.subr.bf16.mxu0 0
      %712 = vmatpush1.bf16.xpose.msra.mxu0 %v709
      %713 = vmatprep.subr.bf16.mxu0 0
      %714 = vmatpush1.bf16.xpose.msra.mxu0 0
      %715 = vmatprep.subr.bf16.mxu0 0
      %716 = vmatpush1.bf16.xpose.msra.mxu0 0
      %717 = vmatprep.subr.bf16.mxu0 0
      %718 = vmatpush1.bf16.xpose.msra.mxu0 0
      %719 = vmatprep.subr.bf16.mxu0 0
      %720 = vmatpush1.bf16.xpose.msra.mxu0 0
      %721 = vmatprep.subr.bf16.mxu0 0
      %722 = vmatpush1.bf16.xpose.msra.mxu0 0
      %723 = vmatprep.subr.bf16.mxu0 0
      %724 = vmatpush1.bf16.xpose.msra.mxu0 0
      %725 = vmatprep.subr.bf16.mxu0 0
      %726 = vmatpush1.bf16.xpose.msra.mxu0 0
      %727 = vmatprep.subr.bf16.mxu0 0
      %728 = vmatpush1.bf16.xpose.msra.mxu0 0
      %729 = vmatprep.subr.bf16.mxu0 0
      %730 = vmatpush1.bf16.xpose.msra.mxu0 0
      %731 = vmatprep.subr.bf16.mxu0 0
      %732 = vmatpush1.bf16.xpose.msra.mxu0 0
      %733 = vmatprep.subr.bf16.mxu0 0
      %734 = vmatpush1.bf16.xpose.msra.mxu0 0
      %735 = vmatprep.subr.bf16.mxu0 0
      %736 = vmatpush1.bf16.xpose.msra.mxu0 0
      %737 = vmatprep.subr.bf16.mxu0 0
      %738 = vmatpush1.bf16.xpose.msra.mxu0 0
      %739 = vmatprep.subr.bf16.mxu0 0
      %740 = vmatpush1.bf16.xpose.msra.mxu0 0
      %741 = vmatprep.subr.bf16.mxu0 0
      %742 = vmatpush1.bf16.xpose.msra.mxu0 0
      %743 = vmatprep.mubr.bf16.mxu0 0
      %744 = vmatmul.mubr.bf16.gmra.mrb[0].mxu0 %v706
      %v745 = vpop.f32.mrb[0].mxu0
      %v746 = vadd.f32 0.0, %v745
      %v747 = vpop.f32.mrb[0].mxu0
      %v748 = vpop.f32.mrb[0].mxu0
      %v749 = vpop.f32.mrb[0].mxu0
      %750 = vdwg.mxu0
      %v751 = vmul.f32 %v746, 0.17677669
      %v752 = vadd.f32 %v751, %v523
      %v753 = vsel %vm526, %v752, -inf
      %754 = vmax.xlane.f32.xlu0 %v753
      %v755 = vpop.xlane.xlu0 %754
      %v756 = vsub.f32 %v752, %v755
      %v757 = vmul.f32 %v756, 1.442695
      %v758 = vpow.pop %v757
      %v759 = vsel %vm526, %v758, 0.0
      %760 = vadd.xlane.f32.xlu0 %v759
      %v761 = vpop.xlane.xlu0 %760
      %v762 = vrcp.pop %v761
      %v763 = vmul.f32 %v758, %v762
      %v764 = vpack.c.bf16 %v763, %v763
      %765 = vrot.lane.b32.xlu0 %v469, 64
      %v766 = vpop.permute.xlu0 %765
      %v768 = vsel %vm526, %v764, 0
      %v771 = vsel %vm542, %v766, 0
      %773 = vmatprep.subr.bf16.mxu0 0
      %774 = vmatpush1.bf16.msra.mxu0 %v771
      %775 = vmatprep.subr.bf16.mxu0 0
      %776 = vmatpush1.bf16.msra.mxu0 0
      %777 = vmatprep.subr.bf16.mxu0 0
      %778 = vmatpush1.bf16.msra.mxu0 0
      %779 = vmatprep.subr.bf16.mxu0 0
      %780 = vmatpush1.bf16.msra.mxu0 0
      %781 = vmatprep.subr.bf16.mxu0 0
      %782 = vmatpush1.bf16.msra.mxu0 0
      %783 = vmatprep.subr.bf16.mxu0 0
      %784 = vmatpush1.bf16.msra.mxu0 0
      %785 = vmatprep.subr.bf16.mxu0 0
      %786 = vmatpush1.bf16.msra.mxu0 0
      %787 = vmatprep.subr.bf16.mxu0 0
      %788 = vmatpush1.bf16.msra.mxu0 0
      %789 = vmatprep.subr.bf16.mxu0 0
      %790 = vmatpush1.bf16.msra.mxu0 0
      %791 = vmatprep.subr.bf16.mxu0 0
      %792 = vmatpush1.bf16.msra.mxu0 0
      %793 = vmatprep.subr.bf16.mxu0 0
      %794 = vmatpush1.bf16.msra.mxu0 0
      %795 = vmatprep.subr.bf16.mxu0 0
      %796 = vmatpush1.bf16.msra.mxu0 0
      %797 = vmatprep.subr.bf16.mxu0 0
      %798 = vmatpush1.bf16.msra.mxu0 0
      %799 = vmatprep.subr.bf16.mxu0 0
      %800 = vmatpush1.bf16.msra.mxu0 0
      %801 = vmatprep.subr.bf16.mxu0 0
      %802 = vmatpush1.bf16.msra.mxu0 0
      %803 = vmatprep.subr.bf16.mxu0 0
      %804 = vmatpush1.bf16.msra.mxu0 0
      %805 = vmatprep.mubr.bf16.mxu0 0
      %806 = vmatmul.mubr.bf16.gmra.mrb[0].mxu0 %v768
      %v807 = vpop.f32.mrb[0].mxu0
      %v808 = vadd.f32 0.0, %v807
      %v809 = vpop.f32.mrb[0].mxu0
      %v810 = vpop.f32.mrb[0].mxu0
      %v811 = vpop.f32.mrb[0].mxu0
      %812 = vdwg.mxu0
      %813 = vrot.lane.b32.xlu0 %v467, 32
      %v814 = vpop.permute.xlu0 %813
      %815 = vrot.lane.b32.xlu0 %v468, 32
      %v816 = vpop.permute.xlu0 %815
      %v818 = vsel %vm471, %v814, 0
      %v821 = vsel %vm471, %v816, 0
      %823 = vmatprep.subr.bf16.mxu0 0
      %824 = vmatpush1.bf16.xpose.msra.mxu0 %v821
      %825 = vmatprep.subr.bf16.mxu0 0
      %826 = vmatpush1.bf16.xpose.msra.mxu0 0
      %827 = vmatprep.subr.bf16.mxu0 0
      %828 = vmatpush1.bf16.xpose.msra.mxu0 0
      %829 = vmatprep.subr.bf16.mxu0 0
      %830 = vmatpush1.bf16.xpose.msra.mxu0 0
      %831 = vmatprep.subr.bf16.mxu0 0
      %832 = vmatpush1.bf16.xpose.msra.mxu0 0
      %833 = vmatprep.subr.bf16.mxu0 0
      %834 = vmatpush1.bf16.xpose.msra.mxu0 0
      %835 = vmatprep.subr.bf16.mxu0 0
      %836 = vmatpush1.bf16.xpose.msra.mxu0 0
      %837 = vmatprep.subr.bf16.mxu0 0
      %838 = vmatpush1.bf16.xpose.msra.mxu0 0
      %839 = vmatprep.subr.bf16.mxu0 0
      %840 = vmatpush1.bf16.xpose.msra.mxu0 0
      %841 = vmatprep.subr.bf16.mxu0 0
      %842 = vmatpush1.bf16.xpose.msra.mxu0 0
      %843 = vmatprep.subr.bf16.mxu0 0
      %844 = vmatpush1.bf16.xpose.msra.mxu0 0
      %845 = vmatprep.subr.bf16.mxu0 0
      %846 = vmatpush1.bf16.xpose.msra.mxu0 0
      %847 = vmatprep.subr.bf16.mxu0 0
      %848 = vmatpush1.bf16.xpose.msra.mxu0 0
      %849 = vmatprep.subr.bf16.mxu0 0
      %850 = vmatpush1.bf16.xpose.msra.mxu0 0
      %851 = vmatprep.subr.bf16.mxu0 0
      %852 = vmatpush1.bf16.xpose.msra.mxu0 0
      %853 = vmatprep.subr.bf16.mxu0 0
      %854 = vmatpush1.bf16.xpose.msra.mxu0 0
      %855 = vmatprep.mubr.bf16.mxu0 0
      %856 = vmatmul.mubr.bf16.gmra.mrb[0].mxu0 %v818
      %v857 = vpop.f32.mrb[0].mxu0
      %v858 = vadd.f32 0.0, %v857
      %v859 = vpop.f32.mrb[0].mxu0
      %v860 = vpop.f32.mrb[0].mxu0
      %v861 = vpop.f32.mrb[0].mxu0
      %862 = vdwg.mxu0
      %v863 = vmul.f32 %v858, 0.17677669
      %v864 = vadd.f32 %v863, %v523
      %v865 = vsel %vm526, %v864, -inf
      %866 = vmax.xlane.f32.xlu0 %v865
      %v867 = vpop.xlane.xlu0 %866
      %v868 = vsub.f32 %v864, %v867
      %v869 = vmul.f32 %v868, 1.442695
      %v870 = vpow.pop %v869
      %v871 = vsel %vm526, %v870, 0.0
      %872 = vadd.xlane.f32.xlu0 %v871
      %v873 = vpop.xlane.xlu0 %872
      %v874 = vrcp.pop %v873
      %v875 = vmul.f32 %v870, %v874
      %v876 = vpack.c.bf16 %v875, %v875
      %877 = vrot.lane.b32.xlu0 %v469, 32
      %v878 = vpop.permute.xlu0 %877
      %v880 = vsel %vm526, %v876, 0
      %v883 = vsel %vm542, %v878, 0
      %885 = vmatprep.subr.bf16.mxu0 0
      %886 = vmatpush1.bf16.msra.mxu0 %v883
      %887 = vmatprep.subr.bf16.mxu0 0
      %888 = vmatpush1.bf16.msra.mxu0 0
      %889 = vmatprep.subr.bf16.mxu0 0
      %890 = vmatpush1.bf16.msra.mxu0 0
      %891 = vmatprep.subr.bf16.mxu0 0
      %892 = vmatpush1.bf16.msra.mxu0 0
      %893 = vmatprep.subr.bf16.mxu0 0
      %894 = vmatpush1.bf16.msra.mxu0 0
      %895 = vmatprep.subr.bf16.mxu0 0
      %896 = vmatpush1.bf16.msra.mxu0 0
      %897 = vmatprep.subr.bf16.mxu0 0
      %898 = vmatpush1.bf16.msra.mxu0 0
      %899 = vmatprep.subr.bf16.mxu0 0
      %900 = vmatpush1.bf16.msra.mxu0 0
      %901 = vmatprep.subr.bf16.mxu0 0
      %902 = vmatpush1.bf16.msra.mxu0 0
      %903 = vmatprep.subr.bf16.mxu0 0
      %904 = vmatpush1.bf16.msra.mxu0 0
      %905 = vmatprep.subr.bf16.mxu0 0
      %906 = vmatpush1.bf16.msra.mxu0 0
      %907 = vmatprep.subr.bf16.mxu0 0
      %908 = vmatpush1.bf16.msra.mxu0 0
      %909 = vmatprep.subr.bf16.mxu0 0
      %910 = vmatpush1.bf16.msra.mxu0 0
      %911 = vmatprep.subr.bf16.mxu0 0
      %912 = vmatpush1.bf16.msra.mxu0 0
      %913 = vmatprep.subr.bf16.mxu0 0
      %914 = vmatpush1.bf16.msra.mxu0 0
      %915 = vmatprep.subr.bf16.mxu0 0
      %916 = vmatpush1.bf16.msra.mxu0 0
      %917 = vmatprep.mubr.bf16.mxu0 0
      %918 = vmatmul.mubr.bf16.gmra.mrb[0].mxu0 %v880
      %v919 = vpop.f32.mrb[0].mxu0
      %v920 = vadd.f32 0.0, %v919
      %v921 = vpop.f32.mrb[0].mxu0
      %v922 = vpop.f32.mrb[0].mxu0
      %v923 = vpop.f32.mrb[0].mxu0
      %924 = vdwg.mxu0
      %926 = vrot.lane.b32.xlu0 %v696, 32
      %v927 = vpop.permute.xlu0 %926
      %930 = vrot.lane.b32.xlu0 %v808, 64
      %v931 = vpop.permute.xlu0 %930
      %934 = vrot.lane.b32.xlu0 %v920, 96
      %v935 = vpop.permute.xlu0 %934
      %v937 = vsel %vm471, %v581, %v927
      %vm938 = vcmask 523264
      %v939 = vsel %vm938, %v937, %v931
      %vm940 = vcmask 785408
      %v941 = vsel %vm940, %v939, %v935
      %v942 = vpack.c.bf16 %v941, %v941
      %943 = vst [vmem:[%s206] sm:$0xf] %v942
      %p944 = scmp.lt.s32.totalorder %s15, 1
      %s945 = scalar_select %p944, %s15, 1
      %s946 = smul.addr %s945, 4
      %s947 = scalar_lea.vmem %s4, %s946
      // Predicated region
      $region37: #{bert_encoder2_forward.17} parent=35 // pred_check
        %p948 = pneg %p127
      $region38: #{bert_encoder2_forward.17} parent=35 // pred_check_branch
        %950 = sbr.rel (%p948) target = $region40
      $region39: #{bert_encoder2_forward.17} parent=35 // pred_region
        _
      $region40: #{bert_encoder2_forward.17} parent=35 // pred_fallthru
        _
    $region36: #{bert_encoder2_forward.17} parent=5 // pred_fallthru
      _
    %p951 = scmp.le.s32.totalorder 2, %s10
    // Predicated region
    $region41: #{bert_encoder2_forward.17} parent=5 // pred_check
      %p952 = pneg %p951
    $region42: #{bert_encoder2_forward.17} parent=5 // pred_check_branch
      %954 = sbr.rel (%p952) target = $region44
    $region43: #{bert_encoder2_forward.17} parent=5 // pred_region
      %s955 = ssub.s32 %s10, 2
      // Predicated region
      $region45: #{bert_encoder2_forward.17} parent=43 // pred_check
        %p956 = pneg %p133
      $region46: #{bert_encoder2_forward.17} parent=43 // pred_check_branch
        %958 = sbr.rel (%p956) target = $region48
      $region47: #{bert_encoder2_forward.17} parent=43 // pred_region
        %p959 = scmp.lt.s32.totalorder %s16, 1
        %s960 = scalar_select %p959, %s16, 1
        %s961 = smul.addr %s960, 4
        %s962 = scalar_lea.vmem %s4, %s961
      $region48: #{bert_encoder2_forward.17} parent=43 // pred_fallthru
        _
    $region44: #{bert_encoder2_forward.17} parent=5 // pred_fallthru
      _
  $region6: #{bert_encoder2_forward.17} parent=0 // loop_footer
    %s14 = sadd.s32 1, %s10
  $region7: #{bert_encoder2_forward.17} parent=0 // loop_footer_branch
    %9 = sbr.rel target = $region3
  $region8: #{bert_encoder2_forward.17} parent=0 // loop_exit
    _

// kernel: bert_encoder2_forward.19
$region0: #{bert_encoder2_forward.19}
  #allocation0 [shape = 'u32[]', space=smem, size = 0x4, offset = 0x4, fixed_abs, tag = 'smem constant byte address 0x4 - core index']
  #allocation1 [shape = 'u32[144,128]{1,0:T(1,128)}', space=vmem, size = 0x12000, scoped, tag = 'internal scratch']
  %s0 = inlined_call_operand.vmem [shape: bf16[16,128], index: 0, kind: input, shape index: {}]
  %s1 = inlined_call_operand.vmem [shape: bf16[128,512], index: 1, kind: input, shape index: {}]
  %s2 = inlined_call_operand.vmem [shape: f32[1,512], index: 2, kind: input, shape index: {}]
  %s3 = inlined_call_operand.vmem [shape: bf16[512,128], index: 3, kind: input, shape index: {}]
  %s4 = inlined_call_operand.vmem [shape: f32[1,128], index: 4, kind: input, shape index: {}]
  %s5 = inlined_call_operand.vmem [shape: f32[1,128], index: 5, kind: input, shape index: {}]
  %s6 = inlined_call_operand.vmem [shape: f32[1,128], index: 6, kind: input, shape index: {}]
  %s7 = inlined_call_operand.vmem [shape: bf16[16,128], index: 7, kind: output, shape index: {}]
  %s8 = sld [smem:[#allocation0]]
  $region38: #{bert_encoder2_forward.19} parent=0
    _
  %s10 = ssub.s32 1, %s8
  %s11 = scalar_select 0, %s10, %s8
  // Predicated region
  $region2: #{bert_encoder2_forward.19} parent=0 // pred_check
    _
  $region3: #{bert_encoder2_forward.19} parent=0 // pred_check_branch
    %13 = sbr.rel (0) target = $region5
  $region4: #{bert_encoder2_forward.19} parent=0 // pred_region
    _
  $region5: #{bert_encoder2_forward.19} parent=0 // pred_fallthru
    _
  // Predicated region
  $region6: #{bert_encoder2_forward.19} parent=0 // pred_check
    _
  $region7: #{bert_encoder2_forward.19} parent=0 // pred_check_branch
    %15 = sbr.rel (0) target = $region9
  $region8: #{bert_encoder2_forward.19} parent=0 // pred_region
    _
  $region9: #{bert_encoder2_forward.19} parent=0 // pred_fallthru
    _
  // Predicated region
  $region10: #{bert_encoder2_forward.19} parent=0 // pred_check
    _
  $region11: #{bert_encoder2_forward.19} parent=0 // pred_check_branch
    %17 = sbr.rel (0) target = $region13
  $region12: #{bert_encoder2_forward.19} parent=0 // pred_region
    _
  $region13: #{bert_encoder2_forward.19} parent=0 // pred_fallthru
    _
  // Predicated region
  $region14: #{bert_encoder2_forward.19} parent=0 // pred_check
    _
  $region15: #{bert_encoder2_forward.19} parent=0 // pred_check_branch
    %19 = sbr.rel (0) target = $region17
  $region16: #{bert_encoder2_forward.19} parent=0 // pred_region
    _
  $region17: #{bert_encoder2_forward.19} parent=0 // pred_fallthru
    _
  // Predicated region
  $region18: #{bert_encoder2_forward.19} parent=0 // pred_check
    _
  $region19: #{bert_encoder2_forward.19} parent=0 // pred_check_branch
    %21 = sbr.rel (0) target = $region21
  $region20: #{bert_encoder2_forward.19} parent=0 // pred_region
    _
  $region21: #{bert_encoder2_forward.19} parent=0 // pred_fallthru
    _
  // Predicated region
  $region22: #{bert_encoder2_forward.19} parent=0 // pred_check
    _
  $region23: #{bert_encoder2_forward.19} parent=0 // pred_check_branch
    %23 = sbr.rel (0) target = $region25
  $region24: #{bert_encoder2_forward.19} parent=0 // pred_region
    _
  $region25: #{bert_encoder2_forward.19} parent=0 // pred_fallthru
    _
  // Predicated region
  $region26: #{bert_encoder2_forward.19} parent=0 // pred_check
    _
  $region27: #{bert_encoder2_forward.19} parent=0 // pred_check_branch
    %25 = sbr.rel (0) target = $region29
  $region28: #{bert_encoder2_forward.19} parent=0 // pred_region
    _
  $region29: #{bert_encoder2_forward.19} parent=0 // pred_fallthru
    _
  %v27 = vld [vmem:[%s0] sm:$0xf]
  %v28 = vld [vmem:[%s0 + $0x4] sm:$0xf]
  %v29 = vld [vmem:[%s1] sm:$0xff]
  %v30 = vld [vmem:[%s1 + $0x8] sm:$0xff]
  %v31 = vld [vmem:[%s1 + $0x10] sm:$0xff]
  %v32 = vld [vmem:[%s1 + $0x18] sm:$0xff]
  %v33 = vld [vmem:[%s1 + $0x20] sm:$0xff]
  %v34 = vld [vmem:[%s1 + $0x28] sm:$0xff]
  %v35 = vld [vmem:[%s1 + $0x30] sm:$0xff]
  %v36 = vld [vmem:[%s1 + $0x38] sm:$0xff]
  %v37 = vld [vmem:[%s1 + $0x40] sm:$0xff]
  %v38 = vld [vmem:[%s1 + $0x48] sm:$0xff]
  %v39 = vld [vmem:[%s1 + $0x50] sm:$0xff]
  %v40 = vld [vmem:[%s1 + $0x58] sm:$0xff]
  %v41 = vld [vmem:[%s1 + $0x60] sm:$0xff]
  %v42 = vld [vmem:[%s1 + $0x68] sm:$0xff]
  %v43 = vld [vmem:[%s1 + $0x70] sm:$0xff]
  %v44 = vld [vmem:[%s1 + $0x78] sm:$0xff]
  %v45 = vld [vmem:[%s1 + $0x80] sm:$0xff]
  %v46 = vld [vmem:[%s1 + $0x88] sm:$0xff]
  %v47 = vld [vmem:[%s1 + $0x90] sm:$0xff]
  %v48 = vld [vmem:[%s1 + $0x98] sm:$0xff]
  %v49 = vld [vmem:[%s1 + $0xa0] sm:$0xff]
  %v50 = vld [vmem:[%s1 + $0xa8] sm:$0xff]
  %v51 = vld [vmem:[%s1 + $0xb0] sm:$0xff]
  %v52 = vld [vmem:[%s1 + $0xb8] sm:$0xff]
  %v53 = vld [vmem:[%s1 + $0xc0] sm:$0xff]
  %v54 = vld [vmem:[%s1 + $0xc8] sm:$0xff]
  %v55 = vld [vmem:[%s1 + $0xd0] sm:$0xff]
  %v56 = vld [vmem:[%s1 + $0xd8] sm:$0xff]
  %v57 = vld [vmem:[%s1 + $0xe0] sm:$0xff]
  %v58 = vld [vmem:[%s1 + $0xe8] sm:$0xff]
  %v59 = vld [vmem:[%s1 + $0xf0] sm:$0xff]
  %v60 = vld [vmem:[%s1 + $0xf8] sm:$0xff]
  %v61 = vld [vmem:[%s2] sm:$0xf]
  %v63 = vlaneseq
  %v64 = vshrl.u32 %v63, 7
  %v65 = vsub.s32 0, %v64
  %v66 = vrot.slane %v61, %v65
  %v67 = vlaneseq
  %v68 = vshrl.u32 %v67, 7
  %v69 = vsub.s32 1, %v68
  %v70 = vrot.slane %v61, %v69
  %v71 = vlaneseq
  %v72 = vshrl.u32 %v71, 7
  %v73 = vsub.s32 2, %v72
  %v74 = vrot.slane %v61, %v73
  %v75 = vlaneseq
  %v76 = vshrl.u32 %v75, 7
  %v77 = vsub.s32 3, %v76
  %v78 = vrot.slane %v61, %v77
  %v85 = vunpack.c.l.b16 %v27
  %v86 = vunpack.c.l.b16 %v28
  %v87 = vpack.c.b16 %v86, %v85
  %v121 = vunpack.c.l.b16 %v29
  %v122 = vunpack.c.h.b16 %v29
  %v123 = vunpack.c.l.b16 %v30
  %v124 = vunpack.c.h.b16 %v30
  %v125 = vunpack.c.l.b16 %v31
  %v126 = vunpack.c.h.b16 %v31
  %v127 = vunpack.c.l.b16 %v32
  %v128 = vunpack.c.h.b16 %v32
  %v129 = vunpack.c.l.b16 %v33
  %v130 = vunpack.c.h.b16 %v33
  %v131 = vunpack.c.l.b16 %v34
  %v132 = vunpack.c.h.b16 %v34
  %v133 = vunpack.c.l.b16 %v35
  %v134 = vunpack.c.h.b16 %v35
  %v135 = vunpack.c.l.b16 %v36
  %v136 = vunpack.c.h.b16 %v36
  %v137 = vunpack.c.l.b16 %v37
  %v138 = vunpack.c.h.b16 %v37
  %v139 = vunpack.c.l.b16 %v38
  %v140 = vunpack.c.h.b16 %v38
  %v141 = vunpack.c.l.b16 %v39
  %v142 = vunpack.c.h.b16 %v39
  %v143 = vunpack.c.l.b16 %v40
  %v144 = vunpack.c.h.b16 %v40
  %v145 = vunpack.c.l.b16 %v41
  %v146 = vunpack.c.h.b16 %v41
  %v147 = vunpack.c.l.b16 %v42
  %v148 = vunpack.c.h.b16 %v42
  %v149 = vunpack.c.l.b16 %v43
  %v150 = vunpack.c.h.b16 %v43
  %v151 = vunpack.c.l.b16 %v44
  %v152 = vunpack.c.h.b16 %v44
  %v153 = vunpack.c.l.b16 %v45
  %v154 = vunpack.c.h.b16 %v45
  %v155 = vunpack.c.l.b16 %v46
  %v156 = vunpack.c.h.b16 %v46
  %v157 = vunpack.c.l.b16 %v47
  %v158 = vunpack.c.h.b16 %v47
  %v159 = vunpack.c.l.b16 %v48
  %v160 = vunpack.c.h.b16 %v48
  %v161 = vunpack.c.l.b16 %v49
  %v162 = vunpack.c.h.b16 %v49
  %v163 = vunpack.c.l.b16 %v50
  %v164 = vunpack.c.h.b16 %v50
  %v165 = vunpack.c.l.b16 %v51
  %v166 = vunpack.c.h.b16 %v51
  %v167 = vunpack.c.l.b16 %v52
  %v168 = vunpack.c.h.b16 %v52
  %v169 = vunpack.c.l.b16 %v53
  %v170 = vunpack.c.h.b16 %v53
  %v171 = vunpack.c.l.b16 %v54
  %v172 = vunpack.c.h.b16 %v54
  %v173 = vunpack.c.l.b16 %v55
  %v174 = vunpack.c.h.b16 %v55
  %v175 = vunpack.c.l.b16 %v56
  %v176 = vunpack.c.h.b16 %v56
  %v177 = vunpack.c.l.b16 %v57
  %v178 = vunpack.c.h.b16 %v57
  %v179 = vunpack.c.l.b16 %v58
  %v180 = vunpack.c.h.b16 %v58
  %v181 = vunpack.c.l.b16 %v59
  %v182 = vunpack.c.h.b16 %v59
  %v183 = vunpack.c.l.b16 %v60
  %v184 = vunpack.c.h.b16 %v60
  %v185 = vpack.c.b16 %v125, %v121
  %v186 = vpack.c.b16 %v126, %v122
  %v187 = vpack.c.b16 %v127, %v123
  %v188 = vpack.c.b16 %v128, %v124
  %v189 = vpack.c.b16 %v133, %v129
  %v190 = vpack.c.b16 %v134, %v130
  %v191 = vpack.c.b16 %v135, %v131
  %v192 = vpack.c.b16 %v136, %v132
  %v193 = vpack.c.b16 %v141, %v137
  %v194 = vpack.c.b16 %v142, %v138
  %v195 = vpack.c.b16 %v143, %v139
  %v196 = vpack.c.b16 %v144, %v140
  %v197 = vpack.c.b16 %v149, %v145
  %v198 = vpack.c.b16 %v150, %v146
  %v199 = vpack.c.b16 %v151, %v147
  %v200 = vpack.c.b16 %v152, %v148
  %v201 = vpack.c.b16 %v157, %v153
  %v202 = vpack.c.b16 %v158, %v154
  %v203 = vpack.c.b16 %v159, %v155
  %v204 = vpack.c.b16 %v160, %v156
  %v205 = vpack.c.b16 %v165, %v161
  %v206 = vpack.c.b16 %v166, %v162
  %v207 = vpack.c.b16 %v167, %v163
  %v208 = vpack.c.b16 %v168, %v164
  %v209 = vpack.c.b16 %v173, %v169
  %v210 = vpack.c.b16 %v174, %v170
  %v211 = vpack.c.b16 %v175, %v171
  %v212 = vpack.c.b16 %v176, %v172
  %v213 = vpack.c.b16 %v181, %v177
  %v214 = vpack.c.b16 %v182, %v178
  %v215 = vpack.c.b16 %v183, %v179
  %v216 = vpack.c.b16 %v184, %v180
  %249 = vmatprep.subr.bf16.mxu0 %v186
  %250 = vmatpush1.bf16.msra.mxu0 %v185
  %251 = vmatprep.subr.bf16.mxu0 %v190
  %252 = vmatpush1.bf16.msra.mxu0 %v189
  %253 = vmatprep.subr.bf16.mxu0 %v194
  %254 = vmatpush1.bf16.msra.mxu0 %v193
  %255 = vmatprep.subr.bf16.mxu0 %v198
  %256 = vmatpush1.bf16.msra.mxu0 %v197
  %257 = vmatprep.subr.bf16.mxu0 %v202
  %258 = vmatpush1.bf16.msra.mxu0 %v201
  %259 = vmatprep.subr.bf16.mxu0 %v206
  %260 = vmatpush1.bf16.msra.mxu0 %v205
  %261 = vmatprep.subr.bf16.mxu0 %v210
  %262 = vmatpush1.bf16.msra.mxu0 %v209
  %263 = vmatprep.subr.bf16.mxu0 %v214
  %264 = vmatpush1.bf16.msra.mxu0 %v213
  %265 = vmatprep.subr.bf16.mxu0 0
  %266 = vmatpush1.bf16.msra.mxu0 0
  %267 = vmatprep.subr.bf16.mxu0 0
  %268 = vmatpush1.bf16.msra.mxu0 0
  %269 = vmatprep.subr.bf16.mxu0 0
  %270 = vmatpush1.bf16.msra.mxu0 0
  %271 = vmatprep.subr.bf16.mxu0 0
  %272 = vmatpush1.bf16.msra.mxu0 0
  %273 = vmatprep.subr.bf16.mxu0 0
  %274 = vmatpush1.bf16.msra.mxu0 0
  %275 = vmatprep.subr.bf16.mxu0 0
  %276 = vmatpush1.bf16.msra.mxu0 0
  %277 = vmatprep.subr.bf16.mxu0 0
  %278 = vmatpush1.bf16.msra.mxu0 0
  %279 = vmatprep.subr.bf16.mxu0 0
  %280 = vmatpush1.bf16.msra.mxu0 0
  %281 = vmatprep.mubr.bf16.mxu0 0
  %282 = vmatmul.mubr.bf16.gmra.mrb[0].mxu0 %v87
  %v283 = vpop.f32.mrb[0].mxu0
  %v284 = vadd.f32 %v66, %v283
  %v285 = vpop.f32.mrb[0].mxu0
  %v286 = vadd.f32 %v70, %v285
  %v287 = vpop.f32.mrb[0].mxu0
  %v288 = vadd.f32 %v66, %v287
  %v289 = vpop.f32.mrb[0].mxu0
  %v290 = vadd.f32 %v70, %v289
  %291 = vdwg.mxu0
  %292 = vmatprep.subr.bf16.mxu0 %v188
  %293 = vmatpush1.bf16.msra.mxu0 %v187
  %294 = vmatprep.subr.bf16.mxu0 %v192
  %295 = vmatpush1.bf16.msra.mxu0 %v191
  %296 = vmatprep.subr.bf16.mxu0 %v196
  %297 = vmatpush1.bf16.msra.mxu0 %v195
  %298 = vmatprep.subr.bf16.mxu0 %v200
  %299 = vmatpush1.bf16.msra.mxu0 %v199
  %300 = vmatprep.subr.bf16.mxu0 %v204
  %301 = vmatpush1.bf16.msra.mxu0 %v203
  %302 = vmatprep.subr.bf16.mxu0 %v208
  %303 = vmatpush1.bf16.msra.mxu0 %v207
  %304 = vmatprep.subr.bf16.mxu0 %v212
  %305 = vmatpush1.bf16.msra.mxu0 %v211
  %306 = vmatprep.subr.bf16.mxu0 %v216
  %307 = vmatpush1.bf16.msra.mxu0 %v215
  %308 = vmatprep.subr.bf16.mxu0 0
  %309 = vmatpush1.bf16.msra.mxu0 0
  %310 = vmatprep.subr.bf16.mxu0 0
  %311 = vmatpush1.bf16.msra.mxu0 0
  %312 = vmatprep.subr.bf16.mxu0 0
  %313 = vmatpush1.bf16.msra.mxu0 0
  %314 = vmatprep.subr.bf16.mxu0 0
  %315 = vmatpush1.bf16.msra.mxu0 0
  %316 = vmatprep.subr.bf16.mxu0 0
  %317 = vmatpush1.bf16.msra.mxu0 0
  %318 = vmatprep.subr.bf16.mxu0 0
  %319 = vmatpush1.bf16.msra.mxu0 0
  %320 = vmatprep.subr.bf16.mxu0 0
  %321 = vmatpush1.bf16.msra.mxu0 0
  %322 = vmatprep.subr.bf16.mxu0 0
  %323 = vmatpush1.bf16.msra.mxu0 0
  %324 = vmatprep.mubr.bf16.mxu0 0
  %325 = vmatmul.mubr.bf16.gmra.mrb[0].mxu0 %v87
  %v326 = vpop.f32.mrb[0].mxu0
  %v327 = vadd.f32 %v74, %v326
  %v328 = vpop.f32.mrb[0].mxu0
  %v329 = vadd.f32 %v78, %v328
  %v330 = vpop.f32.mrb[0].mxu0
  %v331 = vadd.f32 %v74, %v330
  %v332 = vpop.f32.mrb[0].mxu0
  %v333 = vadd.f32 %v78, %v332
  %334 = vdwg.mxu0
  %v335 = vmul.f32 %v284, 0.5
  %v336 = vmul.f32 %v286, 0.5
  %v337 = vmul.f32 %v327, 0.5
  %v338 = vmul.f32 %v329, 0.5
  %v339 = vmul.f32 %v288, 0.5
  %v340 = vmul.f32 %v290, 0.5
  %v341 = vmul.f32 %v331, 0.5
  %v342 = vmul.f32 %v333, 0.5
  %v343 = vmul.f32 %v284, 0.044715
  %v344 = vmul.f32 %v286, 0.044715
  %v345 = vmul.f32 %v327, 0.044715
  %v346 = vmul.f32 %v329, 0.044715
  %v347 = vmul.f32 %v288, 0.044715
  %v348 = vmul.f32 %v290, 0.044715
  %v349 = vmul.f32 %v331, 0.044715
  %v350 = vmul.f32 %v333, 0.044715
  %v351 = vmul.f32 %v343, %v284
  %v352 = vmul.f32 %v344, %v286
  %v353 = vmul.f32 %v345, %v327
  %v354 = vmul.f32 %v346, %v329
  %v355 = vmul.f32 %v347, %v288
  %v356 = vmul.f32 %v348, %v290
  %v357 = vmul.f32 %v349, %v331
  %v358 = vmul.f32 %v350, %v333
  %v359 = vmul.f32 %v351, %v284
  %v360 = vmul.f32 %v352, %v286
  %v361 = vmul.f32 %v353, %v327
  %v362 = vmul.f32 %v354, %v329
  %v363 = vmul.f32 %v355, %v288
  %v364 = vmul.f32 %v356, %v290
  %v365 = vmul.f32 %v357, %v331
  %v366 = vmul.f32 %v358, %v333
  %v367 = vadd.f32 %v284, %v359
  %v368 = vadd.f32 %v286, %v360
  %v369 = vadd.f32 %v327, %v361
  %v370 = vadd.f32 %v329, %v362
  %v371 = vadd.f32 %v288, %v363
  %v372 = vadd.f32 %v290, %v364
  %v373 = vadd.f32 %v331, %v365
  %v374 = vadd.f32 %v333, %v366
  %v375 = vmul.f32 %v367, 0.7978846
  %v376 = vmul.f32 %v368, 0.7978846
  %v377 = vmul.f32 %v369, 0.7978846
  %v378 = vmul.f32 %v370, 0.7978846
  %v379 = vmul.f32 %v371, 0.7978846
  %v380 = vmul.f32 %v372, 0.7978846
  %v381 = vmul.f32 %v373, 0.7978846
  %v382 = vmul.f32 %v374, 0.7978846
  %v383 = vtanh.pop %v375
  %v384 = vtanh.pop %v376
  %v385 = vtanh.pop %v377
  %v386 = vtanh.pop %v378
  %v387 = vtanh.pop %v379
  %v388 = vtanh.pop %v380
  %v389 = vtanh.pop %v381
  %v390 = vtanh.pop %v382
  %v391 = vadd.f32 %v383, 1.0
  %v392 = vadd.f32 %v384, 1.0
  %v393 = vadd.f32 %v385, 1.0
  %v394 = vadd.f32 %v386, 1.0
  %v395 = vadd.f32 %v387, 1.0
  %v396 = vadd.f32 %v388, 1.0
  %v397 = vadd.f32 %v389, 1.0
  %v398 = vadd.f32 %v390, 1.0
  %v399 = vmul.f32 %v335, %v391
  %v400 = vmul.f32 %v336, %v392
  %v401 = vmul.f32 %v337, %v393
  %v402 = vmul.f32 %v338, %v394
  %v403 = vmul.f32 %v339, %v395
  %v404 = vmul.f32 %v340, %v396
  %v405 = vmul.f32 %v341, %v397
  %v406 = vmul.f32 %v342, %v398
  %v407 = vpack.c.bf16 %v403, %v399
  %v408 = vpack.c.bf16 %v404, %v400
  %v409 = vpack.c.bf16 %v405, %v401
  %v410 = vpack.c.bf16 %v406, %v402
  %v411 = vld [vmem:[%s3] sm:$0xf]
  %v412 = vld [vmem:[%s3 + $0x4] sm:$0xf]
  %v413 = vld [vmem:[%s3 + $0x8] sm:$0xf]
  %v414 = vld [vmem:[%s3 + $0xc] sm:$0xf]
  %v415 = vld [vmem:[%s3 + $0x10] sm:$0xf]
  %v416 = vld [vmem:[%s3 + $0x14] sm:$0xf]
  %v417 = vld [vmem:[%s3 + $0x18] sm:$0xf]
  %v418 = vld [vmem:[%s3 + $0x1c] sm:$0xf]
  %v419 = vld [vmem:[%s3 + $0x20] sm:$0xf]
  %v420 = vld [vmem:[%s3 + $0x24] sm:$0xf]
  %v421 = vld [vmem:[%s3 + $0x28] sm:$0xf]
  %v422 = vld [vmem:[%s3 + $0x2c] sm:$0xf]
  %v423 = vld [vmem:[%s3 + $0x30] sm:$0xf]
  %v424 = vld [vmem:[%s3 + $0x34] sm:$0xf]
  %v425 = vld [vmem:[%s3 + $0x38] sm:$0xf]
  %v426 = vld [vmem:[%s3 + $0x3c] sm:$0xf]
  %v427 = vld [vmem:[%s3 + $0x40] sm:$0xf]
  %v428 = vld [vmem:[%s3 + $0x44] sm:$0xf]
  %v429 = vld [vmem:[%s3 + $0x48] sm:$0xf]
  %v430 = vld [vmem:[%s3 + $0x4c] sm:$0xf]
  %v431 = vld [vmem:[%s3 + $0x50] sm:$0xf]
  %v432 = vld [vmem:[%s3 + $0x54] sm:$0xf]
  %v433 = vld [vmem:[%s3 + $0x58] sm:$0xf]
  %v434 = vld [vmem:[%s3 + $0x5c] sm:$0xf]
  %v435 = vld [vmem:[%s3 + $0x60] sm:$0xf]
  %v436 = vld [vmem:[%s3 + $0x64] sm:$0xf]
  %v437 = vld [vmem:[%s3 + $0x68] sm:$0xf]
  %v438 = vld [vmem:[%s3 + $0x6c] sm:$0xf]
  %v439 = vld [vmem:[%s3 + $0x70] sm:$0xf]
  %v440 = vld [vmem:[%s3 + $0x74] sm:$0xf]
  %v441 = vld [vmem:[%s3 + $0x78] sm:$0xf]
  %v442 = vld [vmem:[%s3 + $0x7c] sm:$0xf]
  %v443 = vld [vmem:[%s3 + $0x80] sm:$0xf]
  %v444 = vld [vmem:[%s3 + $0x84] sm:$0xf]
  %v445 = vld [vmem:[%s3 + $0x88] sm:$0xf]
  %v446 = vld [vmem:[%s3 + $0x8c] sm:$0xf]
  %v447 = vld [vmem:[%s3 + $0x90] sm:$0xf]
  %v448 = vld [vmem:[%s3 + $0x94] sm:$0xf]
  %v449 = vld [vmem:[%s3 + $0x98] sm:$0xf]
  %v450 = vld [vmem:[%s3 + $0x9c] sm:$0xf]
  %v451 = vld [vmem:[%s3 + $0xa0] sm:$0xf]
  %v452 = vld [vmem:[%s3 + $0xa4] sm:$0xf]
  %v453 = vld [vmem:[%s3 + $0xa8] sm:$0xf]
  %v454 = vld [vmem:[%s3 + $0xac] sm:$0xf]
  %v455 = vld [vmem:[%s3 + $0xb0] sm:$0xf]
  %v456 = vld [vmem:[%s3 + $0xb4] sm:$0xf]
  %v457 = vld [vmem:[%s3 + $0xb8] sm:$0xf]
  %v458 = vld [vmem:[%s3 + $0xbc] sm:$0xf]
  %v459 = vld [vmem:[%s3 + $0xc0] sm:$0xf]
  %v460 = vld [vmem:[%s3 + $0xc4] sm:$0xf]
  %v461 = vld [vmem:[%s3 + $0xc8] sm:$0xf]
  %v462 = vld [vmem:[%s3 + $0xcc] sm:$0xf]
  %v463 = vld [vmem:[%s3 + $0xd0] sm:$0xf]
  %v464 = vld [vmem:[%s3 + $0xd4] sm:$0xf]
  %v465 = vld [vmem:[%s3 + $0xd8] sm:$0xf]
  %v466 = vld [vmem:[%s3 + $0xdc] sm:$0xf]
  %v467 = vld [vmem:[%s3 + $0xe0] sm:$0xf]
  %v468 = vld [vmem:[%s3 + $0xe4] sm:$0xf]
  %v469 = vld [vmem:[%s3 + $0xe8] sm:$0xf]
  %v470 = vld [vmem:[%s3 + $0xec] sm:$0xf]
  %v471 = vld [vmem:[%s3 + $0xf0] sm:$0xf]
  %v472 = vld [vmem:[%s3 + $0xf4] sm:$0xf]
  %v473 = vld [vmem:[%s3 + $0xf8] sm:$0xf]
  %v474 = vld [vmem:[%s3 + $0xfc] sm:$0xf]
  %v475 = vld [vmem:[%s4] sm:$0x1]
  %v477 = vlaneseq
  %v478 = vshrl.u32 %v477, 7
  %v479 = vsub.s32 0, %v478
  %v480 = vrot.slane %v475, %v479
  %v546 = vunpack.c.l.b16 %v411
  %v547 = vunpack.c.l.b16 %v412
  %v548 = vunpack.c.l.b16 %v413
  %v549 = vunpack.c.l.b16 %v414
  %v550 = vunpack.c.l.b16 %v415
  %v551 = vunpack.c.l.b16 %v416
  %v552 = vunpack.c.l.b16 %v417
  %v553 = vunpack.c.l.b16 %v418
  %v554 = vunpack.c.l.b16 %v419
  %v555 = vunpack.c.l.b16 %v420
  %v556 = vunpack.c.l.b16 %v421
  %v557 = vunpack.c.l.b16 %v422
  %v558 = vunpack.c.l.b16 %v423
  %v559 = vunpack.c.l.b16 %v424
  %v560 = vunpack.c.l.b16 %v425
  %v561 = vunpack.c.l.b16 %v426
  %v562 = vunpack.c.l.b16 %v427
  %v563 = vunpack.c.l.b16 %v428
  %v564 = vunpack.c.l.b16 %v429
  %v565 = vunpack.c.l.b16 %v430
  %v566 = vunpack.c.l.b16 %v431
  %v567 = vunpack.c.l.b16 %v432
  %v568 = vunpack.c.l.b16 %v433
  %v569 = vunpack.c.l.b16 %v434
  %v570 = vunpack.c.l.b16 %v435
  %v571 = vunpack.c.l.b16 %v436
  %v572 = vunpack.c.l.b16 %v437
  %v573 = vunpack.c.l.b16 %v438
  %v574 = vunpack.c.l.b16 %v439
  %v575 = vunpack.c.l.b16 %v440
  %v576 = vunpack.c.l.b16 %v441
  %v577 = vunpack.c.l.b16 %v442
  %v578 = vunpack.c.l.b16 %v443
  %v579 = vunpack.c.l.b16 %v444
  %v580 = vunpack.c.l.b16 %v445
  %v581 = vunpack.c.l.b16 %v446
  %v582 = vunpack.c.l.b16 %v447
  %v583 = vunpack.c.l.b16 %v448
  %v584 = vunpack.c.l.b16 %v449
  %v585 = vunpack.c.l.b16 %v450
  %v586 = vunpack.c.l.b16 %v451
  %v587 = vunpack.c.l.b16 %v452
  %v588 = vunpack.c.l.b16 %v453
  %v589 = vunpack.c.l.b16 %v454
  %v590 = vunpack.c.l.b16 %v455
  %v591 = vunpack.c.l.b16 %v456
  %v592 = vunpack.c.l.b16 %v457
  %v593 = vunpack.c.l.b16 %v458
  %v594 = vunpack.c.l.b16 %v459
  %v595 = vunpack.c.l.b16 %v460
  %v596 = vunpack.c.l.b16 %v461
  %v597 = vunpack.c.l.b16 %v462
  %v598 = vunpack.c.l.b16 %v463
  %v599 = vunpack.c.l.b16 %v464
  %v600 = vunpack.c.l.b16 %v465
  %v601 = vunpack.c.l.b16 %v466
  %v602 = vunpack.c.l.b16 %v467
  %v603 = vunpack.c.l.b16 %v468
  %v604 = vunpack.c.l.b16 %v469
  %v605 = vunpack.c.l.b16 %v470
  %v606 = vunpack.c.l.b16 %v471
  %v607 = vunpack.c.l.b16 %v472
  %v608 = vunpack.c.l.b16 %v473
  %v609 = vunpack.c.l.b16 %v474
  %v610 = vpack.c.b16 %v547, %v546
  %v611 = vpack.c.b16 %v549, %v548
  %v612 = vpack.c.b16 %v551, %v550
  %v613 = vpack.c.b16 %v553, %v552
  %v614 = vpack.c.b16 %v555, %v554
  %v615 = vpack.c.b16 %v557, %v556
  %v616 = vpack.c.b16 %v559, %v558
  %v617 = vpack.c.b16 %v561, %v560
  %v618 = vpack.c.b16 %v563, %v562
  %v619 = vpack.c.b16 %v565, %v564
  %v620 = vpack.c.b16 %v567, %v566
  %v621 = vpack.c.b16 %v569, %v568
  %v622 = vpack.c.b16 %v571, %v570
  %v623 = vpack.c.b16 %v573, %v572
  %v624 = vpack.c.b16 %v575, %v574
  %v625 = vpack.c.b16 %v577, %v576
  %v626 = vpack.c.b16 %v579, %v578
  %v627 = vpack.c.b16 %v581, %v580
  %v628 = vpack.c.b16 %v583, %v582
  %v629 = vpack.c.b16 %v585, %v584
  %v630 = vpack.c.b16 %v587, %v586
  %v631 = vpack.c.b16 %v589, %v588
  %v632 = vpack.c.b16 %v591, %v590
  %v633 = vpack.c.b16 %v593, %v592
  %v634 = vpack.c.b16 %v595, %v594
  %v635 = vpack.c.b16 %v597, %v596
  %v636 = vpack.c.b16 %v599, %v598
  %v637 = vpack.c.b16 %v601, %v600
  %v638 = vpack.c.b16 %v603, %v602
  %v639 = vpack.c.b16 %v605, %v604
  %v640 = vpack.c.b16 %v607, %v606
  %v641 = vpack.c.b16 %v609, %v608
  %674 = vmatprep.subr.bf16.mxu0 0
  %675 = vmatpush1.bf16.msra.mxu0 %v610
  %676 = vmatprep.subr.bf16.mxu0 0
  %677 = vmatpush1.bf16.msra.mxu0 %v611
  %678 = vmatprep.subr.bf16.mxu0 0
  %679 = vmatpush1.bf16.msra.mxu0 %v612
  %680 = vmatprep.subr.bf16.mxu0 0
  %681 = vmatpush1.bf16.msra.mxu0 %v613
  %682 = vmatprep.subr.bf16.mxu0 0
  %683 = vmatpush1.bf16.msra.mxu0 %v614
  %684 = vmatprep.subr.bf16.mxu0 0
  %685 = vmatpush1.bf16.msra.mxu0 %v615
  %686 = vmatprep.subr.bf16.mxu0 0
  %687 = vmatpush1.bf16.msra.mxu0 %v616
  %688 = vmatprep.subr.bf16.mxu0 0
  %689 = vmatpush1.bf16.msra.mxu0 %v617
  %690 = vmatprep.subr.bf16.mxu0 0
  %691 = vmatpush1.bf16.msra.mxu0 %v618
  %692 = vmatprep.subr.bf16.mxu0 0
  %693 = vmatpush1.bf16.msra.mxu0 %v619
  %694 = vmatprep.subr.bf16.mxu0 0
  %695 = vmatpush1.bf16.msra.mxu0 %v620
  %696 = vmatprep.subr.bf16.mxu0 0
  %697 = vmatpush1.bf16.msra.mxu0 %v621
  %698 = vmatprep.subr.bf16.mxu0 0
  %699 = vmatpush1.bf16.msra.mxu0 %v622
  %700 = vmatprep.subr.bf16.mxu0 0
  %701 = vmatpush1.bf16.msra.mxu0 %v623
  %702 = vmatprep.subr.bf16.mxu0 0
  %703 = vmatpush1.bf16.msra.mxu0 %v624
  %704 = vmatprep.subr.bf16.mxu0 0
  %705 = vmatpush1.bf16.msra.mxu0 %v625
  %706 = vmatprep.mubr.bf16.mxu0 %v408
  %707 = vmatmul.mubr.bf16.gmra.mrb[0].mxu0 %v407
  %v708 = vpop.f32.mrb[0].mxu0
  %v709 = vadd.f32 %v480, %v708
  %v710 = vpop.f32.mrb[0].mxu0
  %v711 = vpop.f32.mrb[0].mxu0
  %v712 = vadd.f32 %v480, %v711
  %v713 = vpop.f32.mrb[0].mxu0
  %714 = vdwg.mxu0
  %715 = vmatprep.subr.bf16.mxu0 0
  %716 = vmatpush1.bf16.msra.mxu0 %v626
  %717 = vmatprep.subr.bf16.mxu0 0
  %718 = vmatpush1.bf16.msra.mxu0 %v627
  %719 = vmatprep.subr.bf16.mxu0 0
  %720 = vmatpush1.bf16.msra.mxu0 %v628
  %721 = vmatprep.subr.bf16.mxu0 0
  %722 = vmatpush1.bf16.msra.mxu0 %v629
  %723 = vmatprep.subr.bf16.mxu0 0
  %724 = vmatpush1.bf16.msra.mxu0 %v630
  %725 = vmatprep.subr.bf16.mxu0 0
  %726 = vmatpush1.bf16.msra.mxu0 %v631
  %727 = vmatprep.subr.bf16.mxu0 0
  %728 = vmatpush1.bf16.msra.mxu0 %v632
  %729 = vmatprep.subr.bf16.mxu0 0
  %730 = vmatpush1.bf16.msra.mxu0 %v633
  %731 = vmatprep.subr.bf16.mxu0 0
  %732 = vmatpush1.bf16.msra.mxu0 %v634
  %733 = vmatprep.subr.bf16.mxu0 0
  %734 = vmatpush1.bf16.msra.mxu0 %v635
  %735 = vmatprep.subr.bf16.mxu0 0
  %736 = vmatpush1.bf16.msra.mxu0 %v636
  %737 = vmatprep.subr.bf16.mxu0 0
  %738 = vmatpush1.bf16.msra.mxu0 %v637
  %739 = vmatprep.subr.bf16.mxu0 0
  %740 = vmatpush1.bf16.msra.mxu0 %v638
  %741 = vmatprep.subr.bf16.mxu0 0
  %742 = vmatpush1.bf16.msra.mxu0 %v639
  %743 = vmatprep.subr.bf16.mxu0 0
  %744 = vmatpush1.bf16.msra.mxu0 %v640
  %745 = vmatprep.subr.bf16.mxu0 0
  %746 = vmatpush1.bf16.msra.mxu0 %v641
  %747 = vmatprep.mubr.bf16.mxu0 %v410
  %748 = vmatmul.mubr.bf16.gmra.mrb[0].mxu0 %v409
  %v749 = vpop.f32.mrb[0].mxu0
  %v750 = vadd.f32 %v709, %v749
  %v751 = vpop.f32.mrb[0].mxu0
  %v752 = vpop.f32.mrb[0].mxu0
  %v753 = vadd.f32 %v712, %v752
  %v754 = vpop.f32.mrb[0].mxu0
  %755 = vdwg.mxu0
  %v756 = vunpack.c.l.bf16 %v27
  %v757 = vunpack.c.l.bf16 %v28
  %v758 = vadd.f32 %v750, %v756
  %v759 = vadd.f32 %v753, %v757
  %760 = vadd.xlane.f32.xlu0 %v758
  %v761 = vpop.xlane.xlu0 %760
  %762 = vadd.xlane.f32.xlu0 %v759
  %v763 = vpop.xlane.xlu0 %762
  %v764 = vrcp.pop 128.0
  %v765 = vmul.f32 %v761, %v764
  %v766 = vmul.f32 %v763, %v764
  %v767 = vsub.f32 %v758, %v765
  %v768 = vsub.f32 %v759, %v766
  %v769 = vmul.f32 %v767, %v767
  %v770 = vmul.f32 %v768, %v768
  %771 = vadd.xlane.f32.xlu0 %v769
  %v772 = vpop.xlane.xlu0 %771
  %773 = vadd.xlane.f32.xlu0 %v770
  %v774 = vpop.xlane.xlu0 %773
  %v775 = vmul.f32 %v772, %v764
  %v776 = vmul.f32 %v774, %v764
  %v777 = vadd.f32 %v775, 1e-12
  %v778 = vadd.f32 %v776, 1e-12
  %v779 = vrsqrt.pop %v777
  %v780 = vrsqrt.pop %v778
  %v781 = vmul.f32 %v767, %v779
  %v782 = vmul.f32 %v768, %v780
  %v783 = vld [vmem:[%s5] sm:$0x1]
  %v785 = vlaneseq
  %v786 = vshrl.u32 %v785, 7
  %v787 = vsub.s32 0, %v786
  %v788 = vrot.slane %v783, %v787
  %v790 = vmul.f32 %v781, %v788
  %v791 = vmul.f32 %v782, %v788
  %v792 = vld [vmem:[%s6] sm:$0x1]
  %v794 = vlaneseq
  %v795 = vshrl.u32 %v794, 7
  %v796 = vsub.s32 0, %v795
  %v797 = vrot.slane %v792, %v796
  %v799 = vadd.f32 %v790, %v797
  %v800 = vadd.f32 %v791, %v797
  %v801 = vpack.c.bf16 %v800, %v799
  %v803 = vunpack.c.l.b16 %v801
  %v804 = vunpack.c.h.b16 %v801
  %v805 = vpack.c.b16 %v803, %v803
  %v806 = vpack.c.b16 %v804, %v804
  %809 = vst [vmem:[%s7] sm:$0xf] %v805
  %810 = vst [vmem:[%s7 + $0x4] sm:$0xf] %v806
  // Predicated region
  $region30: #{bert_encoder2_forward.19} parent=0 // pred_check
    _
  $region31: #{bert_encoder2_forward.19} parent=0 // pred_check_branch
    %812 = sbr.rel (0) target = $region33
  $region32: #{bert_encoder2_forward.19} parent=0 // pred_region
    _
  $region33: #{bert_encoder2_forward.19} parent=0 // pred_fallthru
    _
  // Predicated region
  $region34: #{bert_encoder2_forward.19} parent=0 // pred_check
    _
  $region35: #{bert_encoder2_forward.19} parent=0 // pred_check_branch
    %814 = sbr.rel (0) target = $region37
  $region36: #{bert_encoder2_forward.19} parent=0 // pred_region
    _
  $region37: #{bert_encoder2_forward.19} parent=0 // pred_fallthru
    _

// kernel: bert_encoder2_forward.29
$region0: #{bert_encoder2_forward.29}
  #allocation0 [shape = 'u32[]', space=smem, size = 0x4, offset = 0x4, fixed_abs, tag = 'smem constant byte address 0x4 - core index']
  #allocation1 [shape = 'u32[144,128]{1,0:T(1,128)}', space=vmem, size = 0x12000, scoped, tag = 'internal scratch']
  %s0 = inlined_call_operand.vmem [shape: bf16[2,128], index: 0, kind: input, shape index: {}]
  %s1 = inlined_call_operand.vmem [shape: bf16[128,128], index: 1, kind: input, shape index: {}]
  %s2 = inlined_call_operand.vmem [shape: f32[1,128], index: 2, kind: input, shape index: {}]
  %s3 = inlined_call_operand.vmem [shape: f32[2,128], index: 3, kind: output, shape index: {}]
  %s4 = sld [smem:[#allocation0]]
  $region22: #{bert_encoder2_forward.29} parent=0
    _
  %s6 = ssub.s32 1, %s4
  %s7 = scalar_select 0, %s6, %s4
  // Predicated region
  $region2: #{bert_encoder2_forward.29} parent=0 // pred_check
    _
  $region3: #{bert_encoder2_forward.29} parent=0 // pred_check_branch
    %9 = sbr.rel (0) target = $region5
  $region4: #{bert_encoder2_forward.29} parent=0 // pred_region
    _
  $region5: #{bert_encoder2_forward.29} parent=0 // pred_fallthru
    _
  // Predicated region
  $region6: #{bert_encoder2_forward.29} parent=0 // pred_check
    _
  $region7: #{bert_encoder2_forward.29} parent=0 // pred_check_branch
    %11 = sbr.rel (0) target = $region9
  $region8: #{bert_encoder2_forward.29} parent=0 // pred_region
    _
  $region9: #{bert_encoder2_forward.29} parent=0 // pred_fallthru
    _
  // Predicated region
  $region10: #{bert_encoder2_forward.29} parent=0 // pred_check
    _
  $region11: #{bert_encoder2_forward.29} parent=0 // pred_check_branch
    %13 = sbr.rel (0) target = $region13
  $region12: #{bert_encoder2_forward.29} parent=0 // pred_region
    _
  $region13: #{bert_encoder2_forward.29} parent=0 // pred_fallthru
    _
  %v15 = vld [vmem:[%s0] sm:$0x1]
  %v16 = vld [vmem:[%s1] sm:$0xf]
  %v17 = vld [vmem:[%s1 + $0x4] sm:$0xf]
  %v18 = vld [vmem:[%s1 + $0x8] sm:$0xf]
  %v19 = vld [vmem:[%s1 + $0xc] sm:$0xf]
  %v20 = vld [vmem:[%s1 + $0x10] sm:$0xf]
  %v21 = vld [vmem:[%s1 + $0x14] sm:$0xf]
  %v22 = vld [vmem:[%s1 + $0x18] sm:$0xf]
  %v23 = vld [vmem:[%s1 + $0x1c] sm:$0xf]
  %v24 = vld [vmem:[%s1 + $0x20] sm:$0xf]
  %v25 = vld [vmem:[%s1 + $0x24] sm:$0xf]
  %v26 = vld [vmem:[%s1 + $0x28] sm:$0xf]
  %v27 = vld [vmem:[%s1 + $0x2c] sm:$0xf]
  %v28 = vld [vmem:[%s1 + $0x30] sm:$0xf]
  %v29 = vld [vmem:[%s1 + $0x34] sm:$0xf]
  %v30 = vld [vmem:[%s1 + $0x38] sm:$0xf]
  %v31 = vld [vmem:[%s1 + $0x3c] sm:$0xf]
  %v32 = vld [vmem:[%s2] sm:$0x1]
  %v34 = vlaneseq
  %v35 = vshrl.u32 %v34, 7
  %v36 = vsub.s32 0, %v35
  %v37 = vrot.slane %v32, %v36
  %v55 = vunpack.c.l.b16 %v16
  %v56 = vunpack.c.l.b16 %v17
  %v57 = vunpack.c.l.b16 %v18
  %v58 = vunpack.c.l.b16 %v19
  %v59 = vunpack.c.l.b16 %v20
  %v60 = vunpack.c.l.b16 %v21
  %v61 = vunpack.c.l.b16 %v22
  %v62 = vunpack.c.l.b16 %v23
  %v63 = vunpack.c.l.b16 %v24
  %v64 = vunpack.c.l.b16 %v25
  %v65 = vunpack.c.l.b16 %v26
  %v66 = vunpack.c.l.b16 %v27
  %v67 = vunpack.c.l.b16 %v28
  %v68 = vunpack.c.l.b16 %v29
  %v69 = vunpack.c.l.b16 %v30
  %v70 = vunpack.c.l.b16 %v31
  %v71 = vpack.c.b16 %v56, %v55
  %v72 = vpack.c.b16 %v58, %v57
  %v73 = vpack.c.b16 %v60, %v59
  %v74 = vpack.c.b16 %v62, %v61
  %v75 = vpack.c.b16 %v64, %v63
  %v76 = vpack.c.b16 %v66, %v65
  %v77 = vpack.c.b16 %v68, %v67
  %v78 = vpack.c.b16 %v70, %v69
  %87 = vmatprep.subr.bf16.mxu0 0
  %88 = vmatpush1.bf16.msra.mxu0 %v71
  %89 = vmatprep.subr.bf16.mxu0 0
  %90 = vmatpush1.bf16.msra.mxu0 %v72
  %91 = vmatprep.subr.bf16.mxu0 0
  %92 = vmatpush1.bf16.msra.mxu0 %v73
  %93 = vmatprep.subr.bf16.mxu0 0
  %94 = vmatpush1.bf16.msra.mxu0 %v74
  %95 = vmatprep.subr.bf16.mxu0 0
  %96 = vmatpush1.bf16.msra.mxu0 %v75
  %97 = vmatprep.subr.bf16.mxu0 0
  %98 = vmatpush1.bf16.msra.mxu0 %v76
  %99 = vmatprep.subr.bf16.mxu0 0
  %100 = vmatpush1.bf16.msra.mxu0 %v77
  %101 = vmatprep.subr.bf16.mxu0 0
  %102 = vmatpush1.bf16.msra.mxu0 %v78
  %103 = vmatprep.subr.bf16.mxu0 0
  %104 = vmatpush1.bf16.msra.mxu0 0
  %105 = vmatprep.subr.bf16.mxu0 0
  %106 = vmatpush1.bf16.msra.mxu0 0
  %107 = vmatprep.subr.bf16.mxu0 0
  %108 = vmatpush1.bf16.msra.mxu0 0
  %109 = vmatprep.subr.bf16.mxu0 0
  %110 = vmatpush1.bf16.msra.mxu0 0
  %111 = vmatprep.subr.bf16.mxu0 0
  %112 = vmatpush1.bf16.msra.mxu0 0
  %113 = vmatprep.subr.bf16.mxu0 0
  %114 = vmatpush1.bf16.msra.mxu0 0
  %115 = vmatprep.subr.bf16.mxu0 0
  %116 = vmatpush1.bf16.msra.mxu0 0
  %117 = vmatprep.subr.bf16.mxu0 0
  %118 = vmatpush1.bf16.msra.mxu0 0
  %119 = vmatprep.mubr.bf16.mxu0 0
  %120 = vmatmul.mubr.bf16.gmra.mrb[0].mxu0 %v15
  %v121 = vpop.f32.mrb[0].mxu0
  %v122 = vadd.f32 %v37, %v121
  %v123 = vpop.f32.mrb[0].mxu0
  %v124 = vpop.f32.mrb[0].mxu0
  %v125 = vpop.f32.mrb[0].mxu0
  %126 = vdwg.mxu0
  %v127 = vtanh.pop %v122
  %128 = vst [vmem:[%s3] sm:$0x3] %v127
  // Predicated region
  $region14: #{bert_encoder2_forward.29} parent=0 // pred_check
    _
  $region15: #{bert_encoder2_forward.29} parent=0 // pred_check_branch
    %130 = sbr.rel (0) target = $region17
  $region16: #{bert_encoder2_forward.29} parent=0 // pred_region
    _
  $region17: #{bert_encoder2_forward.29} parent=0 // pred_fallthru
    _
  // Predicated region
  $region18: #{bert_encoder2_forward.29} parent=0 // pred_check
    _
  $region19: #{bert_encoder2_forward.29} parent=0 // pred_check_branch
    %132 = sbr.rel (0) target = $region21
  $region20: #{bert_encoder2_forward.29} parent=0 // pred_region
    _
  $region21: #{bert_encoder2_forward.29} parent=0 // pred_fallthru
    _

// kernel: bert_encoder2_forward.31
$region0: #{bert_encoder2_forward.31}
  #allocation0 [shape = 'u32[]', space=smem, size = 0x4, offset = 0x4, fixed_abs, tag = 'smem constant byte address 0x4 - core index']
  #allocation1 [shape = 'u32[144,128]{1,0:T(1,128)}', space=vmem, size = 0x12000, scoped, tag = 'internal scratch']
  %s0 = inlined_call_operand.vmem [shape: bf16[2,3,128], index: 0, kind: input, shape index: {}]
  %s1 = inlined_call_operand.vmem [shape: f32[1,3,128], index: 1, kind: input, shape index: {}]
  %s2 = inlined_call_operand.hbm [shape: f32[2,128], index: 2, kind: output, shape index: {}]
  %s3 = sld [smem:[#allocation0]]
  $region18: #{bert_encoder2_forward.31} parent=0
    _
  %s5 = ssub.s32 1, %s3
  %s6 = scalar_select 0, %s5, %s3
  $region1: #{bert_encoder2_forward.31} parent=0
    #allocation2 [shape = 'u8[1024]{0}', space=vmem, size = 0x400, scoped, tag = 'output window, operand 0, single buffered']
    #allocation3 [shape = 's32[1]{0}', space=sflag, size = 0x4, scoped, tag = 'scoped memory for bert_encoder2_forward.31']
    %7 = vsyncpa [#allocation3], 0
    // Predicated region
    $region2: #{bert_encoder2_forward.31} parent=1 // pred_check
      _
    $region3: #{bert_encoder2_forward.31} parent=1 // pred_check_branch
      %9 = sbr.rel (0) target = $region5
    $region4: #{bert_encoder2_forward.31} parent=1 // pred_region
      _
    $region5: #{bert_encoder2_forward.31} parent=1 // pred_fallthru
      _
    // Predicated region
    $region6: #{bert_encoder2_forward.31} parent=1 // pred_check
      _
    $region7: #{bert_encoder2_forward.31} parent=1 // pred_check_branch
      %11 = sbr.rel (0) target = $region9
    $region8: #{bert_encoder2_forward.31} parent=1 // pred_region
      _
    $region9: #{bert_encoder2_forward.31} parent=1 // pred_fallthru
      _
    %v12 = vld [vmem:[%s0] sm:$0x3]
    %v13 = vld [vmem:[%s0 + $0x2] sm:$0x3]
    %v14 = vunpack.c.l.bf16 %v12
    %v15 = vunpack.c.l.bf16 %v13
    %v16 = vld [vmem:[%s1] sm:$0x7]
    %v17 = vmul.f32 %v14, %v16
    %v18 = vmul.f32 %v15, %v16
    %vm19 = vcmask 1042432
    %v20 = vsel %vm19, %v17, 0.0
    %v21 = vrot.slane %v20, 4
    %v22 = vadd.f32 %v20, %v21
    %v23 = vrot.slane %v22, 2
    %v24 = vadd.f32 %v22, %v23
    %v25 = vrot.slane %v24, 1
    %v26 = vadd.f32 %v24, %v25
    %v27 = vsel %vm19, %v18, 0.0
    %v28 = vrot.slane %v27, 4
    %v29 = vadd.f32 %v27, %v28
    %v30 = vrot.slane %v29, 2
    %v31 = vadd.f32 %v29, %v30
    %v32 = vrot.slane %v31, 1
    %v33 = vadd.f32 %v31, %v32
    %vm36 = vcmask 1041409
    %v37 = vsel %vm36, %v33, %v26
    %39 = vst [vmem:[#allocation2] sm:$0x3] %v37
    // Predicated region
    $region10: #{bert_encoder2_forward.31} parent=1 // pred_check
      _
    $region11: #{bert_encoder2_forward.31} parent=1 // pred_check_branch
      %41 = sbr.rel (0) target = $region13
    $region12: #{bert_encoder2_forward.31} parent=1 // pred_region
      %s43 = ssub.s32 32, 32
      %44 = vsyncadd [#allocation3], %s43
      %s46 = sshll.u32 [#allocation2], 4
      %s47 = int_to_ptr.vmem [resolvable:$true] %s46
      %49 = dma.vmem_to_hbm [thread:$0]  %s47, 32, %s2, [#allocation3]
    $region13: #{bert_encoder2_forward.31} parent=1 // pred_fallthru
      _
    // Predicated region
    $region14: #{bert_encoder2_forward.31} parent=1 // pred_check
      _
    $region15: #{bert_encoder2_forward.31} parent=1 // pred_check_branch
      %51 = sbr.rel (0) target = $region17
    $region16: #{bert_encoder2_forward.31} parent=1 // pred_region
      %52 = dma.done [#allocation3], 32
    $region17: #{bert_encoder2_forward.31} parent=1 // pred_fallthru
      _
    %53 = vsyncpa [#allocation3], 1

// kernel: bert_encoder2_forward.30
$region0: #{bert_encoder2_forward.30}
  #allocation0 [shape = 'u32[]', space=smem, size = 0x4, offset = 0x4, fixed_abs, tag = 'smem constant byte address 0x4 - core index']
  #allocation1 [shape = 'u32[144,128]{1,0:T(1,128)}', space=vmem, size = 0x12000, scoped, tag = 'internal scratch']
  %s0 = inlined_call_operand.vmem [shape: f32[2,128], index: 0, kind: input, shape index: {}]
  %s1 = inlined_call_operand.vmem [shape: bf16[128,64], index: 1, kind: input, shape index: {}]
  %s2 = inlined_call_operand.vmem [shape: f32[1,64], index: 2, kind: input, shape index: {}]
  %s3 = inlined_call_operand.hbm [shape: f32[2,64], index: 3, kind: output, shape index: {}]
  %s4 = sld [smem:[#allocation0]]
  $region22: #{bert_encoder2_forward.30} parent=0
    _
  %s6 = ssub.s32 1, %s4
  %s7 = scalar_select 0, %s6, %s4
  $region1: #{bert_encoder2_forward.30} parent=0
    #allocation2 [shape = 'u8[1024]{0}', space=vmem, size = 0x400, scoped, tag = 'output window, operand 0, single buffered']
    #allocation3 [shape = 's32[1]{0}', space=sflag, size = 0x4, scoped, tag = 'scoped memory for bert_encoder2_forward.30']
    %8 = vsyncpa [#allocation3], 0
    // Predicated region
    $region2: #{bert_encoder2_forward.30} parent=1 // pred_check
      _
    $region3: #{bert_encoder2_forward.30} parent=1 // pred_check_branch
      %10 = sbr.rel (0) target = $region5
    $region4: #{bert_encoder2_forward.30} parent=1 // pred_region
      _
    $region5: #{bert_encoder2_forward.30} parent=1 // pred_fallthru
      _
    // Predicated region
    $region6: #{bert_encoder2_forward.30} parent=1 // pred_check
      _
    $region7: #{bert_encoder2_forward.30} parent=1 // pred_check_branch
      %12 = sbr.rel (0) target = $region9
    $region8: #{bert_encoder2_forward.30} parent=1 // pred_region
      _
    $region9: #{bert_encoder2_forward.30} parent=1 // pred_fallthru
      _
    // Predicated region
    $region10: #{bert_encoder2_forward.30} parent=1 // pred_check
      _
    $region11: #{bert_encoder2_forward.30} parent=1 // pred_check_branch
      %14 = sbr.rel (0) target = $region13
    $region12: #{bert_encoder2_forward.30} parent=1 // pred_region
      _
    $region13: #{bert_encoder2_forward.30} parent=1 // pred_fallthru
      _
    %v16 = vld [vmem:[%s0] sm:$0x3]
    %v17 = vpack.c.bf16 %v16, %v16
    %v18 = vld [vmem:[%s1] sm:$0xf]
    %v19 = vld [vmem:[%s1 + $0x4] sm:$0xf]
    %v20 = vld [vmem:[%s1 + $0x8] sm:$0xf]
    %v21 = vld [vmem:[%s1 + $0xc] sm:$0xf]
    %v22 = vld [vmem:[%s1 + $0x10] sm:$0xf]
    %v23 = vld [vmem:[%s1 + $0x14] sm:$0xf]
    %v24 = vld [vmem:[%s1 + $0x18] sm:$0xf]
    %v25 = vld [vmem:[%s1 + $0x1c] sm:$0xf]
    %v26 = vld [vmem:[%s1 + $0x20] sm:$0xf]
    %v27 = vld [vmem:[%s1 + $0x24] sm:$0xf]
    %v28 = vld [vmem:[%s1 + $0x28] sm:$0xf]
    %v29 = vld [vmem:[%s1 + $0x2c] sm:$0xf]
    %v30 = vld [vmem:[%s1 + $0x30] sm:$0xf]
    %v31 = vld [vmem:[%s1 + $0x34] sm:$0xf]
    %v32 = vld [vmem:[%s1 + $0x38] sm:$0xf]
    %v33 = vld [vmem:[%s1 + $0x3c] sm:$0xf]
    %v34 = vld [vmem:[%s2] sm:$0x1]
    %v36 = vlaneseq
    %v37 = vshrl.u32 %v36, 7
    %v38 = vsub.s32 0, %v37
    %v39 = vrot.slane %v34, %v38
    %v57 = vunpack.c.l.b16 %v18
    %v58 = vunpack.c.l.b16 %v19
    %v59 = vunpack.c.l.b16 %v20
    %v60 = vunpack.c.l.b16 %v21
    %v61 = vunpack.c.l.b16 %v22
    %v62 = vunpack.c.l.b16 %v23
    %v63 = vunpack.c.l.b16 %v24
    %v64 = vunpack.c.l.b16 %v25
    %v65 = vunpack.c.l.b16 %v26
    %v66 = vunpack.c.l.b16 %v27
    %v67 = vunpack.c.l.b16 %v28
    %v68 = vunpack.c.l.b16 %v29
    %v69 = vunpack.c.l.b16 %v30
    %v70 = vunpack.c.l.b16 %v31
    %v71 = vunpack.c.l.b16 %v32
    %v72 = vunpack.c.l.b16 %v33
    %v73 = vpack.c.b16 %v58, %v57
    %v74 = vpack.c.b16 %v60, %v59
    %v75 = vpack.c.b16 %v62, %v61
    %v76 = vpack.c.b16 %v64, %v63
    %v77 = vpack.c.b16 %v66, %v65
    %v78 = vpack.c.b16 %v68, %v67
    %v79 = vpack.c.b16 %v70, %v69
    %v80 = vpack.c.b16 %v72, %v71
    %89 = vmatprep.subr.bf16.mxu0 0
    %90 = vmatpush1.bf16.msra.mxu0 %v73
    %91 = vmatprep.subr.bf16.mxu0 0
    %92 = vmatpush1.bf16.msra.mxu0 %v74
    %93 = vmatprep.subr.bf16.mxu0 0
    %94 = vmatpush1.bf16.msra.mxu0 %v75
    %95 = vmatprep.subr.bf16.mxu0 0
    %96 = vmatpush1.bf16.msra.mxu0 %v76
    %97 = vmatprep.subr.bf16.mxu0 0
    %98 = vmatpush1.bf16.msra.mxu0 %v77
    %99 = vmatprep.subr.bf16.mxu0 0
    %100 = vmatpush1.bf16.msra.mxu0 %v78
    %101 = vmatprep.subr.bf16.mxu0 0
    %102 = vmatpush1.bf16.msra.mxu0 %v79
    %103 = vmatprep.subr.bf16.mxu0 0
    %104 = vmatpush1.bf16.msra.mxu0 %v80
    %105 = vmatprep.subr.bf16.mxu0 0
    %106 = vmatpush1.bf16.msra.mxu0 0
    %107 = vmatprep.subr.bf16.mxu0 0
    %108 = vmatpush1.bf16.msra.mxu0 0
    %109 = vmatprep.subr.bf16.mxu0 0
    %110 = vmatpush1.bf16.msra.mxu0 0
    %111 = vmatprep.subr.bf16.mxu0 0
    %112 = vmatpush1.bf16.msra.mxu0 0
    %113 = vmatprep.subr.bf16.mxu0 0
    %114 = vmatpush1.bf16.msra.mxu0 0
    %115 = vmatprep.subr.bf16.mxu0 0
    %116 = vmatpush1.bf16.msra.mxu0 0
    %117 = vmatprep.subr.bf16.mxu0 0
    %118 = vmatpush1.bf16.msra.mxu0 0
    %119 = vmatprep.subr.bf16.mxu0 0
    %120 = vmatpush1.bf16.msra.mxu0 0
    %121 = vmatprep.mubr.bf16.mxu0 0
    %122 = vmatmul.mubr.bf16.gmra.mrb[0].mxu0 %v17
    %v123 = vpop.f32.mrb[0].mxu0
    %v124 = vadd.f32 %v39, %v123
    %v125 = vpop.f32.mrb[0].mxu0
    %v126 = vpop.f32.mrb[0].mxu0
    %v127 = vpop.f32.mrb[0].mxu0
    %128 = vdwg.mxu0
    %vm129 = vcmask 517120
    %130 = vst.msk [vmem:[#allocation2] sm:$0x3] %vm129, %v124
    // Predicated region
    $region14: #{bert_encoder2_forward.30} parent=1 // pred_check
      _
    $region15: #{bert_encoder2_forward.30} parent=1 // pred_check_branch
      %132 = sbr.rel (0) target = $region17
    $region16: #{bert_encoder2_forward.30} parent=1 // pred_region
      %s134 = ssub.s32 32, 32
      %135 = vsyncadd [#allocation3], %s134
      %s137 = sshll.u32 [#allocation2], 4
      %s138 = int_to_ptr.vmem [resolvable:$true] %s137
      %140 = dma.vmem_to_hbm [thread:$0]  %s138, 32, %s3, [#allocation3]
    $region17: #{bert_encoder2_forward.30} parent=1 // pred_fallthru
      _
    // Predicated region
    $region18: #{bert_encoder2_forward.30} parent=1 // pred_check
      _
    $region19: #{bert_encoder2_forward.30} parent=1 // pred_check_branch
      %142 = sbr.rel (0) target = $region21
    $region20: #{bert_encoder2_forward.30} parent=1 // pred_region
      %143 = dma.done [#allocation3], 32
    $region21: #{bert_encoder2_forward.30} parent=1 // pred_fallthru
      _
    %144 = vsyncpa [#allocation3], 1

</llo_original>
